<compile_context>
chip_gen: v7x
topology: tpu7x:2x2x1
jax: 0.10.0
libtpu: 0.0.40
codegen_flags: <defaults>
</compile_context>

<pallas_src>
import math

import jax
import jax.numpy as jnp
from jax.experimental import pallas as pl
from jax.experimental.pallas import tpu as pltpu


LANE = 128
SUB_ROWS = 128   # inner sub-chunk height (bounds vreg live ranges)


def _round_up(n, m):
    return (n + m - 1) // m * m


# ----------------------------------------------------------------------------
# Module topology (mirrors MLPUnet.__init__)
# ----------------------------------------------------------------------------
def build_layer_info(data_dim, hidden_sizes, time_embedding_dim):
    layer_info = [(time_embedding_dim + data_dim, -1)]
    for size in hidden_sizes:
        layer_info.append((size, -1))
    ref_layer = len(layer_info) - 1
    for size in hidden_sizes[::-1][1:]:
        ref_layer -= 1
        layer_info.append((size, ref_layer))
    layer_info.append((data_dim, 0))
    return layer_info


def init_params(key, layer_info, data_dim):
    """PyTorch nn.Linear default init: U(-1/sqrt(fan_in), 1/sqrt(fan_in)).
    Weights stored as (in_features, out_features)."""
    params = []
    for i in range(1, len(layer_info)):
        layer_sz, ref_idx = layer_info[i]
        last_sz, _ = layer_info[i - 1]
        in_sz = last_sz if ref_idx == -1 else last_sz + layer_info[ref_idx][0]
        key, kw, kb = jax.random.split(key, 3)
        bound = 1.0 / math.sqrt(in_sz)
        w = jax.random.uniform(kw, (in_sz, layer_sz), jnp.float32, -bound, bound)
        b = jax.random.uniform(kb, (1, layer_sz), jnp.float32, -bound, bound)
        params.append((w, b))
    return params


# ----------------------------------------------------------------------------
# Host-side packing: split every W along its input axis into per-segment
# pieces, pad each piece K- and lane-dense, stack into one weight buffer.
# Biases + timestep-embedding constants go into one (8k, 128) f32 buffer.
# ----------------------------------------------------------------------------
def build_plan_and_pack(params, layer_info, data_dim, time_embedding_dim,
                        xt_lanes):
    te = time_embedding_dim
    half = te // 2
    n_layers = len(layer_info) - 1

    def segments_of(emb_idx):
        if emb_idx == 0:            # first embedding = cat(x, temb)
            return [("x", data_dim), ("temb", te)]
        return [(("emb", emb_idx), layer_info[emb_idx][0])]

    w_blocks, plan = [], []
    row_off = 0
    for i in range(n_layers):
        w, b = params[i]                         # w: (K_total, out), b: (1, out)
        ref = layer_info[i + 1][1]
        out_sz = layer_info[i + 1][0]
        segs = segments_of(i) if ref == -1 else segments_of(ref) + segments_of(i)

        pieces, k_off = [], 0
        for key, k in segs:
            # "x" segment is fed the raw (sub, xt_lanes) xt block (t lane and
            # pad lanes hit zero weight rows); wide segments are 128-lane
            # activations, so pad their K to 128 as well -> all dots dense.
            k_pad = xt_lanes if key == "x" else LANE
            blk = jnp.zeros((k_pad, LANE), jnp.float32)
            blk = blk.at[:k, :out_sz].set(w[k_off:k_off + k, :])
            w_blocks.append(blk)
            pieces.append((key, row_off, k_pad))
            row_off += k_pad
            k_off += k
        assert k_off == w.shape[0], "segment widths must cover all weight rows"
        plan.append(dict(pieces=pieces, brow=i, silu=(i < n_layers - 1)))
    w_packed = jnp.concatenate(w_blocks, 0)

    # bias rows (lane-padded to 128) + freqs/phase rows for the sin-phase trick
    b_rows = []
    for i in range(n_layers):
        out_sz = layer_info[i + 1][0]
        b_rows.append(jnp.zeros((1, LANE), jnp.float32).at[0, :out_sz]
                      .set(params[i][1][0]))
    freqs = jnp.exp(-math.log(10000.0)
                    * jnp.arange(half, dtype=jnp.float32) / (half - 1.0))
    frow = (jnp.zeros((1, LANE), jnp.float32)
            .at[0, :half].set(freqs).at[0, half:te].set(freqs))
    prow = jnp.zeros((1, LANE), jnp.float32).at[0, half:te].set(jnp.pi / 2)
    b_rows += [frow, prow]
    freq_row, phase_row = n_layers, n_layers + 1
    while len(b_rows) % 8:
        b_rows.append(jnp.zeros((1, LANE), jnp.float32))
    b_packed = jnp.concatenate(b_rows, 0)
    return plan, w_packed, b_packed, freq_row, phase_row


# ----------------------------------------------------------------------------
# Pallas kernel: per 128-row sub-chunk -> time-embedding elementwise + all
# (split) matmuls.  No lane concatenates; skips become extra dot pieces.
# ----------------------------------------------------------------------------
def make_mlp_unet_kernel(plan, data_dim, freq_row, phase_row,
                         n_sub, sub, act_dtype):
    def kernel(xt_ref, w_ref, b_ref, o_ref):
        # grid-invariant constants, hoisted out of the sub-chunk loop
        frow = b_ref[freq_row:freq_row + 1, :]                  # (1, 128)
        prow = b_ref[phase_row:phase_row + 1, :]                # (1, 128)
        b_rows = [b_ref[l["brow"]:l["brow"] + 1, :] for l in plan]

        def compute_chunk(off):
            xt = xt_ref[pl.ds(off, sub), :]                     # (sub, xt_lanes) f32
            t_col = xt[:, data_dim:data_dim + 1]                # (sub, 1)
            # temb = [sin(t*f), cos(t*f), 0...] via sin(t*f + phase), zero tail
            temb = jnp.sin(t_col * frow + prow)                 # (sub, 128) f32
            segs = {"x": xt.astype(act_dtype),                  # cast once
                    "temb": temb.astype(act_dtype)}

            z = None
            for li, layer in enumerate(plan):
                acc = None
                for (key, roff, k) in layer["pieces"]:
                    a = segs[key]
                    w = w_ref[roff:roff + k, :]                 # static, dense
                    p = jnp.dot(a, w, preferred_element_type=jnp.float32)
                    acc = p if acc is None else acc + p
                z = acc + b_rows[li]                            # f32, (sub, 128)
                if layer["silu"]:
                    z = z * jax.nn.sigmoid(z)                   # SiLU, f32
                    segs[("emb", li + 1)] = z.astype(act_dtype)
            # narrow output store: only data_dim real columns go to HBM
            o_ref[pl.ds(off, sub), :] = z[:, :data_dim].astype(o_ref.dtype)

        if n_sub == 1:
            compute_chunk(0)
        else:
            def body(s, carry):
                compute_chunk(pl.multiple_of(s * sub, sub))
                return carry
            jax.lax.fori_loop(0, n_sub, body, 0, unroll=True)

    return kernel


def mlp_unet_forward(x, t, params, layer_info, time_embedding_dim,
                     block_n=1024, target_grid_steps=8, use_bf16=False):
    """x: (N, data_dim) f32; t: (N,) timesteps. Returns (N, data_dim) f32."""
    N, data_dim = x.shape
    out_dim = layer_info[-1][0]
    # TODO(synk): raw-t path (time_embedding_dim <= 1), odd embedding dims and
    # layer widths > 128 are not wired; te_dim in {2,3} divides by zero in the
    # reference formula too.
    assert time_embedding_dim >= 4 and time_embedding_dim % 2 == 0
    assert time_embedding_dim <= LANE and data_dim <= LANE
    assert all(sz <= LANE for sz, _ in layer_info[1:])

    xt_lanes = _round_up(data_dim + 1, 8)
    plan, w_packed, b_packed, freq_row, phase_row = build_plan_and_pack(
        params, layer_info, data_dim, time_embedding_dim, xt_lanes)
    if use_bf16:                 # v6e/v7x: bf16 MXU inputs, f32 accumulation
        w_packed = w_packed.astype(jnp.bfloat16)
    act_dtype = w_packed.dtype

    # pack x and t into one lane-padded array: [x | t | 0...], single DMA stream
    xt = jnp.zeros((N, xt_lanes), jnp.float32)
    xt = xt.at[:, :data_dim].set(x.astype(jnp.float32))
    xt = xt.at[:, data_dim].set(t.astype(jnp.float32))

    # batch tiling: block caps at block_n, but for small N shrink it so the
    # grid has ~target_grid_steps steps (keeps both v7x TCs busy / pipelined);
    # inner SUB_ROWS sub-chunks bound vreg pressure inside each block.
    n8 = _round_up(N, 8)
    if n8 <= SUB_ROWS:
        block, sub = n8, n8
    else:
        target = _round_up(-(-N // target_grid_steps), SUB_ROWS)
        block = max(SUB_ROWS, min(_round_up(block_n, SUB_ROWS), target))
        sub = SUB_ROWS
    n_sub = block // sub
    Np = _round_up(N, block)
    if Np != N:
        xt = jnp.pad(xt, ((0, Np - N), (0, 0)))
    grid = (Np // block,)

    kernel = make_mlp_unet_kernel(plan, data_dim, freq_row, phase_row,
                                  n_sub, sub, act_dtype)

    out = pl.pallas_call(
        kernel,
        out_shape=jax.ShapeDtypeStruct((Np, out_dim), jnp.float32),
        grid=grid,
        in_specs=[
            pl.BlockSpec((block, xt_lanes), lambda i: (i, 0)),   # xt tile
            pl.BlockSpec(w_packed.shape, lambda i: (0, 0)),      # all weights
            pl.BlockSpec(b_packed.shape, lambda i: (0, 0)),      # biases+consts
        ],
        out_specs=pl.BlockSpec((block, out_dim), lambda i: (i, 0)),
        compiler_params=pltpu.CompilerParams(
            dimension_semantics=("parallel",)),                  # megacore/2-TC
    )(xt, w_packed, b_packed)

    return out[:N]


# ----------------------------------------------------------------------------
# Pure-JAX reference (for correctness check)
# ----------------------------------------------------------------------------
def reference_forward(x, t, params, layer_info, time_embedding_dim):
    half = time_embedding_dim // 2
    exponent = (-math.log(10000.0)
                * jnp.arange(half, dtype=jnp.float32) / (half - 1.0))
    freqs = jnp.exp(exponent)
    te = t.astype(jnp.float32)[:, None] * freqs[None, :]
    temb = jnp.concatenate([jnp.sin(te), jnp.cos(te)], axis=-1)

    embeddings = [jnp.concatenate([x, temb], axis=-1)]
    n_layers = len(layer_info) - 1
    for i in range(n_layers):
        w, b = params[i]
        ref_idx = layer_info[i + 1][1]
        inp = (embeddings[-1] if ref_idx == -1 else
               jnp.concatenate([embeddings[ref_idx], embeddings[-1]], axis=-1))
        z = inp @ w + b
        if i < n_layers - 1:
            z = jax.nn.silu(z)
        embeddings.append(z)
    return embeddings[-1]


# ----------------------------------------------------------------------------
if __name__ == "__main__":
    data_dim = 4
    hidden_sizes = [32, 64]
    time_embedding_dim = 16
    batch = 300                      # ragged: padded to the batch tile

    layer_info = build_layer_info(data_dim, hidden_sizes, time_embedding_dim)

    key = jax.random.PRNGKey(0)
    kx, kt, kp = jax.random.split(key, 3)
    x = jax.random.normal(kx, (batch, data_dim), jnp.float32)
    t = jax.random.uniform(kt, (batch,), jnp.float32, 0.0, 1000.0)
    params = init_params(kp, layer_info, data_dim)

    ref = reference_forward(x, t, params, layer_info, time_embedding_dim)

    # f32 path, default block heuristic (several small grid steps, n_sub == 1)
    out = mlp_unet_forward(x, t, params, layer_info, time_embedding_dim)
    out = jax.block_until_ready(out)
    assert out.shape == (batch, data_dim)
    assert jnp.allclose(out, ref, rtol=1e-4, atol=1e-4), (
        f"f32 max abs err {jnp.max(jnp.abs(out - ref))}")

    # f32 path, larger block -> exercises the inner sub-chunk fori_loop
    out2 = mlp_unet_forward(x, t, params, layer_info, time_embedding_dim,
                            block_n=256, target_grid_steps=1)
    out2 = jax.block_until_ready(out2)
    assert jnp.allclose(out2, ref, rtol=1e-4, atol=1e-4), (
        f"f32 (sub-chunked) max abs err {jnp.max(jnp.abs(out2 - ref))}")

    # bf16 weights + bf16 activation storage (v6e/v7x MXU path): loose check
    out_bf16 = mlp_unet_forward(x, t, params, layer_info, time_embedding_dim,
                                use_bf16=True)
    out_bf16 = jax.block_until_ready(out_bf16)
    assert jnp.max(jnp.abs(out_bf16 - ref)) < 0.2, (
        f"bf16 max abs err {jnp.max(jnp.abs(out_bf16 - ref))}")

    print("KERNEL_OK")
</pallas_src>

<mosaic_0001>
module attributes {stable_mosaic.version = 11 : i64} {
  func.func @kernel(%arg0: i32, %arg1: memref<128x8xf32, #tpu.memory_space<vmem>>, %arg2: memref<784x128xf32, #tpu.memory_space<vmem>>, %arg3: memref<8x128xf32, #tpu.memory_space<vmem>>, %arg4: memref<128x4xf32, #tpu.memory_space<vmem>>) attributes {dimension_semantics = [#tpu.dimension_semantics<parallel>], iteration_bounds = array<i64: 3>, scalar_prefetch = 0 : i64, scratch_operands = 0 : i64, tpu.core_type = #tpu.core_type<tc>, window_params = [{transform_indices = @transform_0, window_bounds = array<i64: 128, 8>}, {pipeline_mode = #tpu.pipeline_mode<synchronous>, transform_indices = @transform_1, window_bounds = array<i64: 784, 128>}, {pipeline_mode = #tpu.pipeline_mode<synchronous>, transform_indices = @transform_2, window_bounds = array<i64: 8, 128>}, {transform_indices = @transform_3, window_bounds = array<i64: 128, 4>}]} {
    %c4 = arith.constant 4 : index
    %c0 = arith.constant 0 : index
    %0 = vector.load %arg3[%c4, %c0] : memref<8x128xf32, #tpu.memory_space<vmem>>, vector<1x128xf32>
    %c5 = arith.constant 5 : index
    %c0_0 = arith.constant 0 : index
    %1 = vector.load %arg3[%c5, %c0_0] : memref<8x128xf32, #tpu.memory_space<vmem>>, vector<1x128xf32>
    %c0_1 = arith.constant 0 : index
    %c0_2 = arith.constant 0 : index
    %2 = vector.load %arg3[%c0_1, %c0_2] : memref<8x128xf32, #tpu.memory_space<vmem>>, vector<1x128xf32>
    %c1 = arith.constant 1 : index
    %c0_3 = arith.constant 0 : index
    %3 = vector.load %arg3[%c1, %c0_3] : memref<8x128xf32, #tpu.memory_space<vmem>>, vector<1x128xf32>
    %c2 = arith.constant 2 : index
    %c0_4 = arith.constant 0 : index
    %4 = vector.load %arg3[%c2, %c0_4] : memref<8x128xf32, #tpu.memory_space<vmem>>, vector<1x128xf32>
    %c3 = arith.constant 3 : index
    %c0_5 = arith.constant 0 : index
    %5 = vector.load %arg3[%c3, %c0_5] : memref<8x128xf32, #tpu.memory_space<vmem>>, vector<1x128xf32>
    %c0_6 = arith.constant 0 : index
    %c0_7 = arith.constant 0 : index
    %6 = vector.load %arg1[%c0_6, %c0_7] : memref<128x8xf32, #tpu.memory_space<vmem>>, vector<128x8xf32>
    %7 = vector.extract_strided_slice %6 {offsets = [0, 4], sizes = [128, 1], strides = [1, 1]} : vector<128x8xf32> to vector<128x1xf32>
    %8 = vector.broadcast %7 : vector<128x1xf32> to vector<128x128xf32>
    %9 = vector.broadcast %0 : vector<1x128xf32> to vector<128x128xf32>
    %10 = arith.mulf %8, %9 : vector<128x128xf32>
    %11 = vector.broadcast %1 : vector<1x128xf32> to vector<128x128xf32>
    %12 = arith.addf %10, %11 : vector<128x128xf32>
    %13 = math.sin %12 : vector<128x128xf32>
    %c0_8 = arith.constant 0 : index
    %c0_9 = arith.constant 0 : index
    %14 = vector.load %arg2[%c0_8, %c0_9] : memref<784x128xf32, #tpu.memory_space<vmem>>, vector<8x128xf32>
    %cst = arith.constant dense<0.000000e+00> : vector<128x128xf32>
    %15 = tpu.matmul %6, %14, %cst {dimension_numbers = #tpu.dot_dimension_numbers<[1], [0], [0], [1], [0, 0, 1, 1], [], []>} : vector<128x8xf32>, vector<8x128xf32>, vector<128x128xf32> -> vector<128x128xf32>
    %c8 = arith.constant 8 : index
    %c0_10 = arith.constant 0 : index
    %16 = vector.load %arg2[%c8, %c0_10] : memref<784x128xf32, #tpu.memory_space<vmem>>, vector<128x128xf32>
    %cst_11 = arith.constant dense<0.000000e+00> : vector<128x128xf32>
    %17 = tpu.matmul %13, %16, %cst_11 {dimension_numbers = #tpu.dot_dimension_numbers<[1], [0], [0], [1], [0, 0, 1, 1], [], []>} : vector<128x128xf32>, vector<128x128xf32>, vector<128x128xf32> -> vector<128x128xf32>
    %18 = arith.addf %15, %17 : vector<128x128xf32>
    %19 = vector.broadcast %2 : vector<1x128xf32> to vector<128x128xf32>
    %20 = arith.addf %18, %19 : vector<128x128xf32>
    %21 = arith.negf %20 : vector<128x128xf32>
    %22 = math.exp %21 : vector<128x128xf32>
    %cst_12 = arith.constant 1.000000e+00 : f32
    %23 = vector.broadcast %cst_12 : f32 to vector<128x128xf32>
    %24 = arith.addf %23, %22 : vector<128x128xf32>
    %25 = arith.divf %23, %24 : vector<128x128xf32>
    %26 = arith.mulf %20, %25 : vector<128x128xf32>
    %c136 = arith.constant 136 : index
    %c0_13 = arith.constant 0 : index
    %27 = vector.load %arg2[%c136, %c0_13] : memref<784x128xf32, #tpu.memory_space<vmem>>, vector<128x128xf32>
    %cst_14 = arith.constant dense<0.000000e+00> : vector<128x128xf32>
    %28 = tpu.matmul %26, %27, %cst_14 {dimension_numbers = #tpu.dot_dimension_numbers<[1], [0], [0], [1], [0, 0, 1, 1], [], []>} : vector<128x128xf32>, vector<128x128xf32>, vector<128x128xf32> -> vector<128x128xf32>
    %29 = vector.broadcast %3 : vector<1x128xf32> to vector<128x128xf32>
    %30 = arith.addf %28, %29 : vector<128x128xf32>
    %31 = arith.negf %30 : vector<128x128xf32>
    %32 = math.exp %31 : vector<128x128xf32>
    %cst_15 = arith.constant 1.000000e+00 : f32
    %33 = vector.broadcast %cst_15 : f32 to vector<128x128xf32>
    %34 = arith.addf %33, %32 : vector<128x128xf32>
    %35 = arith.divf %33, %34 : vector<128x128xf32>
    %36 = arith.mulf %30, %35 : vector<128x128xf32>
    %c264 = arith.constant 264 : index
    %c0_16 = arith.constant 0 : index
    %37 = vector.load %arg2[%c264, %c0_16] : memref<784x128xf32, #tpu.memory_space<vmem>>, vector<128x128xf32>
    %cst_17 = arith.constant dense<0.000000e+00> : vector<128x128xf32>
    %38 = tpu.matmul %26, %37, %cst_17 {dimension_numbers = #tpu.dot_dimension_numbers<[1], [0], [0], [1], [0, 0, 1, 1], [], []>} : vector<128x128xf32>, vector<128x128xf32>, vector<128x128xf32> -> vector<128x128xf32>
    %c392 = arith.constant 392 : index
    %c0_18 = arith.constant 0 : index
    %39 = vector.load %arg2[%c392, %c0_18] : memref<784x128xf32, #tpu.memory_space<vmem>>, vector<128x128xf32>
    %cst_19 = arith.constant dense<0.000000e+00> : vector<128x128xf32>
    %40 = tpu.matmul %36, %39, %cst_19 {dimension_numbers = #tpu.dot_dimension_numbers<[1], [0], [0], [1], [0, 0, 1, 1], [], []>} : vector<128x128xf32>, vector<128x128xf32>, vector<128x128xf32> -> vector<128x128xf32>
    %41 = arith.addf %38, %40 : vector<128x128xf32>
    %42 = vector.broadcast %4 : vector<1x128xf32> to vector<128x128xf32>
    %43 = arith.addf %41, %42 : vector<128x128xf32>
    %44 = arith.negf %43 : vector<128x128xf32>
    %45 = math.exp %44 : vector<128x128xf32>
    %cst_20 = arith.constant 1.000000e+00 : f32
    %46 = vector.broadcast %cst_20 : f32 to vector<128x128xf32>
    %47 = arith.addf %46, %45 : vector<128x128xf32>
    %48 = arith.divf %46, %47 : vector<128x128xf32>
    %49 = arith.mulf %43, %48 : vector<128x128xf32>
    %c520 = arith.constant 520 : index
    %c0_21 = arith.constant 0 : index
    %50 = vector.load %arg2[%c520, %c0_21] : memref<784x128xf32, #tpu.memory_space<vmem>>, vector<8x128xf32>
    %cst_22 = arith.constant dense<0.000000e+00> : vector<128x128xf32>
    %51 = tpu.matmul %6, %50, %cst_22 {dimension_numbers = #tpu.dot_dimension_numbers<[1], [0], [0], [1], [0, 0, 1, 1], [], []>} : vector<128x8xf32>, vector<8x128xf32>, vector<128x128xf32> -> vector<128x128xf32>
    %c528 = arith.constant 528 : index
    %c0_23 = arith.constant 0 : index
    %52 = vector.load %arg2[%c528, %c0_23] : memref<784x128xf32, #tpu.memory_space<vmem>>, vector<128x128xf32>
    %cst_24 = arith.constant dense<0.000000e+00> : vector<128x128xf32>
    %53 = tpu.matmul %13, %52, %cst_24 {dimension_numbers = #tpu.dot_dimension_numbers<[1], [0], [0], [1], [0, 0, 1, 1], [], []>} : vector<128x128xf32>, vector<128x128xf32>, vector<128x128xf32> -> vector<128x128xf32>
    %54 = arith.addf %51, %53 : vector<128x128xf32>
    %c656 = arith.constant 656 : index
    %c0_25 = arith.constant 0 : index
    %55 = vector.load %arg2[%c656, %c0_25] : memref<784x128xf32, #tpu.memory_space<vmem>>, vector<128x128xf32>
    %cst_26 = arith.constant dense<0.000000e+00> : vector<128x128xf32>
    %56 = tpu.matmul %49, %55, %cst_26 {dimension_numbers = #tpu.dot_dimension_numbers<[1], [0], [0], [1], [0, 0, 1, 1], [], []>} : vector<128x128xf32>, vector<128x128xf32>, vector<128x128xf32> -> vector<128x128xf32>
    %57 = arith.addf %54, %56 : vector<128x128xf32>
    %58 = vector.broadcast %5 : vector<1x128xf32> to vector<128x128xf32>
    %59 = arith.addf %57, %58 : vector<128x128xf32>
    %60 = vector.extract_strided_slice %59 {offsets = [0, 0], sizes = [128, 4], strides = [1, 1]} : vector<128x128xf32> to vector<128x4xf32>
    %c0_27 = arith.constant 0 : index
    %c0_28 = arith.constant 0 : index
    %61 = vector.load %arg4[%c0_27, %c0_28] : memref<128x4xf32, #tpu.memory_space<vmem>>, vector<128x4xf32>
    tpu.vector_store %arg4[%c0_27, %c0_28], %60 {strides = array<i32>} : memref<128x4xf32, #tpu.memory_space<vmem>>, vector<128x4xf32>,
    return
  }
  func.func @transform_0(%arg0: i32) -> (i32, i32) {
    %c0_i32 = arith.constant 0 : i32
    %c0_i32_0 = arith.constant 0 : i32
    return %arg0, %c0_i32 : i32, i32
  }
  func.func @transform_1(%arg0: i32) -> (i32, i32) {
    %c0_i32 = arith.constant 0 : i32
    %c0_i32_0 = arith.constant 0 : i32
    %c0_i32_1 = arith.constant 0 : i32
    return %c0_i32, %c0_i32_0 : i32, i32
  }
  func.func @transform_2(%arg0: i32) -> (i32, i32) {
    %c0_i32 = arith.constant 0 : i32
    %c0_i32_0 = arith.constant 0 : i32
    %c0_i32_1 = arith.constant 0 : i32
    return %c0_i32, %c0_i32_0 : i32, i32
  }
  func.func @transform_3(%arg0: i32) -> (i32, i32) {
    %c0_i32 = arith.constant 0 : i32
    %c0_i32_0 = arith.constant 0 : i32
    return %arg0, %c0_i32 : i32, i32
  }
}

</mosaic_0001>

<llo_original>
// kernel: tpu_custom_call.1
$region0: #{tpu_custom_call.1}
  #allocation0 [shape = 'u32[]', space=smem, size = 0x4, offset = 0x4, fixed_abs, tag = 'smem constant byte address 0x4 - core index']
  #allocation1 [shape = 'u32[144,128]{1,0:T(1,128)}', space=vmem, size = 0x12000, scoped, tag = 'internal scratch']
  %s0 = inlined_call_operand.vmem [shape: f32[384,8], index: 0, kind: input, shape index: {}]
  %s1 = inlined_call_operand.hbm [shape: f32[784,128], index: 1, kind: input, shape index: {}]
  %s2 = inlined_call_operand.vmem [shape: f32[8,128], index: 2, kind: input, shape index: {}]
  %s3 = inlined_call_operand.vmem [shape: f32[384,4], index: 3, kind: output, shape index: {}]
  %s4 = sld [smem:[#allocation0]]
  $region49: #{tpu_custom_call.1} parent=0
    _
  %s6 = ssub.s32 1, %s4
  %s7 = scalar_select 0, %s6, %s4
  $region1: #{tpu_custom_call.1} parent=0
    #allocation2 [shape = 'u8[401408]{0}', space=vmem, size = 0x62000, scoped, tag = 'input window, operand 1, single buffered']
    #allocation3 [shape = 's32[2]{0}', space=sflag, size = 0x8, scoped, tag = 'scoped memory for tpu_custom_call.1']
    %8 = vsyncpa [#allocation3], 0
    loop: start=0, step=1, limit=5
    $region2: #{tpu_custom_call.1} parent=1 // loop_pre_header
      _
    $region3: #{tpu_custom_call.1} parent=1 // loop_header
      %s10 = sphi 0, %s14
      %p11 = scmp.ge.s32.totalorder %s10, 5
      %s20 = sphi 0, %s22
      %s23 = sphi 0, %s20
      %s24 = sphi 0, %s23
      %s40 = sphi 0, %s24
      %s44 = sphi 0, %s44
      %s46 = sphi 0, %s44
      %s47 = sphi 0, %s46
      %s61 = sphi 0, %s47
      %s65 = sphi 0, %s65
      %s67 = sphi 0, %s65
      %s68 = sphi 0, %s67
      %s82 = sphi 0, %s68
      %s88 = sphi 0, %s90
      %s91 = sphi 0, %s88
      %s92 = sphi 0, %s91
      %s108 = sphi 0, %s92
    $region4: #{tpu_custom_call.1} parent=1 // loop_header_branch
      %13 = sbr.rel (%p11) target = $region8
    $region5: #{tpu_custom_call.1} parent=1 // loop_body
      %s15 = ssub.s32 %s10, 1
      %s16 = ssub.s32 %s10, 2
      %s17 = sadd.s32 %s10, 1
      %s18 = ssub.s32 %s10, %s17
      %p19 = scmp.eq.s32.totalorder %s18, 0
      %s21 = sadd.s32 %s20, 1
      %s22 = scalar_select %p19, %s20, %s21
      %p25 = pneg %p19
      %p26 = scmp.eq.s32.totalorder %s10, 2
      %p27 = por %p25, %p26
      %p28 = scmp.ne.s32.totalorder %s20, %s23
      %p29 = scmp.eq.s32.totalorder %s10, 0
      %p30 = por %p28, %p29
      %p31 = scmp.ne.s32.totalorder %s20, %s23
      %p32 = scmp.eq.s32.totalorder %s15, 2
      %p33 = por %p31, %p32
      %p34 = scmp.ne.s32.totalorder %s23, %s24
      %p35 = scmp.eq.s32.totalorder %s15, 0
      %p36 = por %p34, %p35
      %p37 = scmp.ne.s32.totalorder %s23, %s24
      %p38 = scmp.eq.s32.totalorder %s16, 2
      %p39 = por %p37, %p38
      %p41 = scmp.ne.s32.totalorder %s24, %s40
      %p42 = scmp.eq.s32.totalorder %s16, 0
      %p43 = por %p41, %p42
      %s45 = sadd.s32 %s44, 1
      %p48 = scmp.eq.s32.totalorder %s10, 2
      %p49 = scmp.ne.s32.totalorder %s44, %s46
      %p50 = scmp.eq.s32.totalorder %s10, 0
      %p51 = por %p49, %p50
      %p52 = scmp.ne.s32.totalorder %s44, %s46
      %p53 = scmp.eq.s32.totalorder %s15, 2
      %p54 = por %p52, %p53
      %p55 = scmp.ne.s32.totalorder %s46, %s47
      %p56 = scmp.eq.s32.totalorder %s15, 0
      %p57 = por %p55, %p56
      %p58 = scmp.ne.s32.totalorder %s46, %s47
      %p59 = scmp.eq.s32.totalorder %s16, 2
      %p60 = por %p58, %p59
      %p62 = scmp.ne.s32.totalorder %s47, %s61
      %p63 = scmp.eq.s32.totalorder %s16, 0
      %p64 = por %p62, %p63
      %s66 = sadd.s32 %s65, 1
      %p69 = scmp.eq.s32.totalorder %s10, 2
      %p70 = scmp.ne.s32.totalorder %s65, %s67
      %p71 = scmp.eq.s32.totalorder %s10, 0
      %p72 = por %p70, %p71
      %p73 = scmp.ne.s32.totalorder %s65, %s67
      %p74 = scmp.eq.s32.totalorder %s15, 2
      %p75 = por %p73, %p74
      %p76 = scmp.ne.s32.totalorder %s67, %s68
      %p77 = scmp.eq.s32.totalorder %s15, 0
      %p78 = por %p76, %p77
      %p79 = scmp.ne.s32.totalorder %s67, %s68
      %p80 = scmp.eq.s32.totalorder %s16, 2
      %p81 = por %p79, %p80
      %p83 = scmp.ne.s32.totalorder %s68, %s82
      %p84 = scmp.eq.s32.totalorder %s16, 0
      %p85 = por %p83, %p84
      %s86 = ssub.s32 %s10, %s17
      %p87 = scmp.eq.s32.totalorder %s86, 0
      %s89 = sadd.s32 %s88, 1
      %s90 = scalar_select %p87, %s88, %s89
      %p93 = pneg %p87
      %p94 = scmp.eq.s32.totalorder %s10, 2
      %p95 = por %p93, %p94
      %p96 = scmp.ne.s32.totalorder %s88, %s91
      %p97 = scmp.eq.s32.totalorder %s10, 0
      %p98 = por %p96, %p97
      %p99 = scmp.ne.s32.totalorder %s88, %s91
      %p100 = scmp.eq.s32.totalorder %s15, 2
      %p101 = por %p99, %p100
      %p102 = scmp.ne.s32.totalorder %s91, %s92
      %p103 = scmp.eq.s32.totalorder %s15, 0
      %p104 = por %p102, %p103
      %p105 = scmp.ne.s32.totalorder %s91, %s92
      %p106 = scmp.eq.s32.totalorder %s16, 2
      %p107 = por %p105, %p106
      %p109 = scmp.ne.s32.totalorder %s92, %s108
      %p110 = scmp.eq.s32.totalorder %s16, 0
      %p111 = por %p109, %p110
      %p112 = scmp.le.s32.totalorder 1, %s10
      %p113 = scmp.lt.s32.totalorder %s10, 4
      %p114 = pnand %p112, %p113
      %p115 = pneg %p114
      // Predicated region
      $region9: #{tpu_custom_call.1} parent=5 // pred_check
        _
      $region10: #{tpu_custom_call.1} parent=5 // pred_check_branch
        %117 = sbr.rel (%p114) target = $region12
      $region11: #{tpu_custom_call.1} parent=5 // pred_region
        %s118 = ssub.s32 %s10, 1
        // Predicated region
        $region13: #{tpu_custom_call.1} parent=11 // pred_check
          %p119 = pneg %p57
        $region14: #{tpu_custom_call.1} parent=11 // pred_check_branch
          %121 = sbr.rel (%p119) target = $region16
        $region15: #{tpu_custom_call.1} parent=11 // pred_region
          %s123 = ssub.s32 12544, 12544
          %124 = vsyncadd [#allocation3], %s123
          %s125 = sshll.u32 [#allocation2], 4
          %s126 = int_to_ptr.vmem [resolvable:$true] %s125
          %131 = dma.hbm_to_vmem [thread:$0]  %s1, 12544, %s126, [#allocation3], 128, 128, 8
        $region16: #{tpu_custom_call.1} parent=11 // pred_fallthru
          _
        // Predicated region
        $region17: #{tpu_custom_call.1} parent=11 // pred_check
          %p132 = pneg %p78
        $region18: #{tpu_custom_call.1} parent=11 // pred_check_branch
          %134 = sbr.rel (%p132) target = $region20
        $region19: #{tpu_custom_call.1} parent=11 // pred_region
          _
        $region20: #{tpu_custom_call.1} parent=11 // pred_fallthru
          _
      $region12: #{tpu_custom_call.1} parent=5 // pred_fallthru
        _
      %p135 = scmp.lt.s32.totalorder %s10, 3
      // Predicated region
      $region21: #{tpu_custom_call.1} parent=5 // pred_check
        %p136 = pneg %p135
      $region22: #{tpu_custom_call.1} parent=5 // pred_check_branch
        %138 = sbr.rel (%p136) target = $region24
      $region23: #{tpu_custom_call.1} parent=5 // pred_region
        // Predicated region
        $region25: #{tpu_custom_call.1} parent=23 // pred_check
          %p139 = pneg %p30
        $region26: #{tpu_custom_call.1} parent=23 // pred_check_branch
          %141 = sbr.rel (%p139) target = $region28
        $region27: #{tpu_custom_call.1} parent=23 // pred_region
          %s142 = smul.u32 16, %s10
          %p143 = scmp.lt.s32.totalorder %s142, 47
          %s144 = scalar_select %p143, %s142, 47
          %s145 = smul.addr %s144, 8
          %s146 = scalar_lea.vmem %s0, %s145
          %s147 = smul.u32 16, %s10
        $region28: #{tpu_custom_call.1} parent=23 // pred_fallthru
          _
      $region24: #{tpu_custom_call.1} parent=5 // pred_fallthru
        _
      %p148 = scmp.le.s32.totalorder 1, %s10
      %p149 = scmp.lt.s32.totalorder %s10, 4
      %p150 = pnand %p148, %p149
      %p151 = pneg %p150
      // Predicated region
      $region29: #{tpu_custom_call.1} parent=5 // pred_check
        _
      $region30: #{tpu_custom_call.1} parent=5 // pred_check_branch
        %153 = sbr.rel (%p150) target = $region32
      $region31: #{tpu_custom_call.1} parent=5 // pred_region
        %s154 = ssub.s32 %s10, 1
        // Predicated region
        $region33: #{tpu_custom_call.1} parent=31 // pred_check
          %p155 = pneg %p57
        $region34: #{tpu_custom_call.1} parent=31 // pred_check_branch
          %157 = sbr.rel (%p155) target = $region36
        $region35: #{tpu_custom_call.1} parent=31 // pred_region
          %158 = dma.done [#allocation3], 12544
        $region36: #{tpu_custom_call.1} parent=31 // pred_fallthru
          _
        %s159 = smul.u32 16, %s15
        %p160 = scmp.lt.s32.totalorder %s159, 47
        %s161 = scalar_select %p160, %s159, 47
        %s162 = smul.addr %s161, 8
        %s163 = scalar_lea.vmem %s0, %s162
        %p164 = pneg %p36
        %p165 = pneg %p33
        %p166 = pneg %p57
        %p167 = pneg %p54
        %p168 = pneg %p78
        %p169 = pneg %p75
        %p170 = pneg %p104
        %p171 = pneg %p101
        %s172 = smul.u32 16, %s15
        %p173 = scmp.lt.s32.totalorder %s172, 47
        %s174 = scalar_select %p173, %s172, 47
        %s175 = smul.addr %s174, 8
        %s176 = scalar_lea.vmem %s3, %s175
        %s177 = smul.u32 16, %s15
        %p178 = scmp.lt.s32.totalorder %s177, 47
        %s179 = scalar_select %p178, %s177, 47
        %s180 = smul.addr %s179, 8
        %s181 = scalar_lea.vmem %s0, %s180
        %s182 = smul.u32 16, %s15
        %s183 = smul.u32 16, %s15
        %p184 = scmp.lt.s32.totalorder %s183, 47
        %s185 = scalar_select %p184, %s183, 47
        %s186 = smul.addr %s185, 8
        %s187 = scalar_lea.vmem %s3, %s186
        %s188 = smul.u32 16, %s15
        %v189 = vld [vmem:[%s2 + $0x4] sm:$0x1]
        %v190 = vld [vmem:[%s2 + $0x5] sm:$0x1]
        %v191 = vld [vmem:[%s2] sm:$0x1]
        %v192 = vld [vmem:[%s2 + $0x1] sm:$0x1]
        %v193 = vld [vmem:[%s2 + $0x2] sm:$0x1]
        %v194 = vld [vmem:[%s2 + $0x3] sm:$0x1]
        %v195 = vld [vmem:[%s181] sm:$0xff]
        %v196 = vld [vmem:[%s181 + $0x8] sm:$0xff]
        %v197 = vld [vmem:[%s181 + $0x10] sm:$0xff]
        %v198 = vld [vmem:[%s181 + $0x18] sm:$0xff]
        %v199 = vld [vmem:[%s181 + $0x20] sm:$0xff]
        %v200 = vld [vmem:[%s181 + $0x28] sm:$0xff]
        %v201 = vld [vmem:[%s181 + $0x30] sm:$0xff]
        %v202 = vld [vmem:[%s181 + $0x38] sm:$0xff]
        %v203 = vld [vmem:[%s181 + $0x40] sm:$0xff]
        %v204 = vld [vmem:[%s181 + $0x48] sm:$0xff]
        %v205 = vld [vmem:[%s181 + $0x50] sm:$0xff]
        %v206 = vld [vmem:[%s181 + $0x58] sm:$0xff]
        %v207 = vld [vmem:[%s181 + $0x60] sm:$0xff]
        %v208 = vld [vmem:[%s181 + $0x68] sm:$0xff]
        %v209 = vld [vmem:[%s181 + $0x70] sm:$0xff]
        %v210 = vld [vmem:[%s181 + $0x78] sm:$0xff]
        %212 = vset.pattern.permute.xlu0 4
        %213 = vperm.xlu0 %212, %v195
        %v214 = vpop.permute.xlu0 %213
        %217 = vset.pattern.permute.xlu0 4
        %218 = vperm.xlu0 %217, %v196
        %v219 = vpop.permute.xlu0 %218
        %222 = vset.pattern.permute.xlu0 4
        %223 = vperm.xlu0 %222, %v197
        %v224 = vpop.permute.xlu0 %223
        %227 = vset.pattern.permute.xlu0 4
        %228 = vperm.xlu0 %227, %v198
        %v229 = vpop.permute.xlu0 %228
        %232 = vset.pattern.permute.xlu0 4
        %233 = vperm.xlu0 %232, %v199
        %v234 = vpop.permute.xlu0 %233
        %237 = vset.pattern.permute.xlu0 4
        %238 = vperm.xlu0 %237, %v200
        %v239 = vpop.permute.xlu0 %238
        %242 = vset.pattern.permute.xlu0 4
        %243 = vperm.xlu0 %242, %v201
        %v244 = vpop.permute.xlu0 %243
        %247 = vset.pattern.permute.xlu0 4
        %248 = vperm.xlu0 %247, %v202
        %v249 = vpop.permute.xlu0 %248
        %252 = vset.pattern.permute.xlu0 4
        %253 = vperm.xlu0 %252, %v203
        %v254 = vpop.permute.xlu0 %253
        %257 = vset.pattern.permute.xlu0 4
        %258 = vperm.xlu0 %257, %v204
        %v259 = vpop.permute.xlu0 %258
        %262 = vset.pattern.permute.xlu0 4
        %263 = vperm.xlu0 %262, %v205
        %v264 = vpop.permute.xlu0 %263
        %267 = vset.pattern.permute.xlu0 4
        %268 = vperm.xlu0 %267, %v206
        %v269 = vpop.permute.xlu0 %268
        %272 = vset.pattern.permute.xlu0 4
        %273 = vperm.xlu0 %272, %v207
        %v274 = vpop.permute.xlu0 %273
        %277 = vset.pattern.permute.xlu0 4
        %278 = vperm.xlu0 %277, %v208
        %v279 = vpop.permute.xlu0 %278
        %282 = vset.pattern.permute.xlu0 4
        %283 = vperm.xlu0 %282, %v209
        %v284 = vpop.permute.xlu0 %283
        %287 = vset.pattern.permute.xlu0 4
        %288 = vperm.xlu0 %287, %v210
        %v289 = vpop.permute.xlu0 %288
        %v291 = vlaneseq
        %v292 = vshrl.u32 %v291, 7
        %v293 = vsub.s32 0, %v292
        %v294 = vrot.slane %v189, %v293
        %v295 = vmul.f32 %v214, %v294
        %v296 = vmul.f32 %v219, %v294
        %v297 = vmul.f32 %v224, %v294
        %v298 = vmul.f32 %v229, %v294
        %v299 = vmul.f32 %v234, %v294
        %v300 = vmul.f32 %v239, %v294
        %v301 = vmul.f32 %v244, %v294
        %v302 = vmul.f32 %v249, %v294
        %v303 = vmul.f32 %v254, %v294
        %v304 = vmul.f32 %v259, %v294
        %v305 = vmul.f32 %v264, %v294
        %v306 = vmul.f32 %v269, %v294
        %v307 = vmul.f32 %v274, %v294
        %v308 = vmul.f32 %v279, %v294
        %v309 = vmul.f32 %v284, %v294
        %v310 = vmul.f32 %v289, %v294
        %v311 = vlaneseq
        %v312 = vshrl.u32 %v311, 7
        %v313 = vsub.s32 0, %v312
        %v314 = vrot.slane %v190, %v313
        %v315 = vadd.f32 %v295, %v314
        %v316 = vadd.f32 %v296, %v314
        %v317 = vadd.f32 %v297, %v314
        %v318 = vadd.f32 %v298, %v314
        %v319 = vadd.f32 %v299, %v314
        %v320 = vadd.f32 %v300, %v314
        %v321 = vadd.f32 %v301, %v314
        %v322 = vadd.f32 %v302, %v314
        %v323 = vadd.f32 %v303, %v314
        %v324 = vadd.f32 %v304, %v314
        %v325 = vadd.f32 %v305, %v314
        %v326 = vadd.f32 %v306, %v314
        %v327 = vadd.f32 %v307, %v314
        %v328 = vadd.f32 %v308, %v314
        %v329 = vadd.f32 %v309, %v314
        %v330 = vadd.f32 %v310, %v314
        %v331 = vand.u32 2147483647, %v315
        %vm332 = vcmp.le.f32.partialorder %v331, 0.7853982
        %vm333 = vcmp.lt.s32.totalorder %v315, 0
        %v334 = vand.u32 %v315, 2139095040
        %v335 = vshrl.u32 %v334, 23
        %v336 = vsub.s32 %v335, 127
        %v337 = vand.u32 2147483647, %v315
        %v338 = vand.u32 %v337, 8388607
        %v339 = vor.u32 %v338, 8388608
        %v340 = vsub.s32 0, %v339
        %v341 = vadd.s32 %v336, 1
        %vm342 = vcmp.gt.s32.totalorder %v341, 0
        %v343 = vsel %vm342, %v341, 0
        %v344 = vshrl.u32 %v343, 5
        %v345 = vand.u32 %v343, 31
        %v346 = vsub.s32 32, %v345
        %v347 = vshrl.u32 683565275, %v346
        %v348 = vshll.u32 683565275, %v345
        %v349 = vshrl.u32 2475754826, %v346
        %v350 = vor.u32 %v348, %v349
        %v351 = vshll.u32 2475754826, %v345
        %v352 = vshrl.u32 2131351028, %v346
        %v353 = vor.u32 %v351, %v352
        %v354 = vshll.u32 2131351028, %v345
        %v355 = vshrl.u32 2102212464, %v346
        %v356 = vor.u32 %v354, %v355
        %v357 = vshll.u32 2102212464, %v345
        %v358 = vshrl.u32 920167782, %v346
        %v359 = vor.u32 %v357, %v358
        %v360 = vshll.u32 920167782, %v345
        %v361 = vshrl.u32 1326507024, %v346
        %v362 = vor.u32 %v360, %v361
        %vm363 = vcmp.lt.s32.totalorder %v344, 1
        %vm364 = vcmp.lt.s32.totalorder %v344, 2
        %vm365 = vcmp.lt.s32.totalorder %v344, 3
        %vm366 = vcmp.lt.s32.totalorder %v344, 4
        %v367 = vsel %vm363, %v347, %v350
        %v368 = vsel %vm366, %v356, 2102212464
        %v369 = vsel %vm365, %v353, %v368
        %v370 = vsel %vm364, %v367, %v369
        %v371 = vsel %vm363, %v350, %v353
        %v372 = vsel %vm366, %v359, 920167782
        %v373 = vsel %vm365, %v356, %v372
        %v374 = vsel %vm364, %v371, %v373
        %v375 = vsel %vm363, %v353, %v356
        %v376 = vsel %vm366, %v362, 1326507024
        %v377 = vsel %vm365, %v359, %v376
        %v378 = vsel %vm364, %v375, %v377
        %v379 = vshll.u32 %v339, 8
        %v380 = vmul.u32.u64.compose %v379, %v378
        %v381 = vextract.low.u32 %v380
        %v382 = vextract.high.u32 %v380
        %v383 = vmul.u32.u64.compose %v379, %v374
        %v384 = vextract.low.u32 %v383
        %v385 = vextract.high.u32 %v383
        %v386 = vmul.u32 %v379, %v370
        %v387 = vadd.s32 %v382, %v384
        %vm388 = vc.u32 %v382, %v384
        %v389 = vadd.s32 %v385, 1
        %v390 = vsel %vm388, %v389, %v385
        %v391 = vadd.s32 %v386, %v390
        %v392 = vadd.s32 %v391, 536870912
        %v393 = vshrl.u32 %v392, 30
        %v394 = vshll.u32 %v393, 30
        %v395 = vsub.s32 %v391, %v394
        %vm396 = vcmp.lt.s32.totalorder %v395, 0
        %v397 = vsub.s32 0, %v395
        %v398 = vsel %vm396, %v397, %v395
        %v399 = vclz %v398
        %v400 = vsub.s32 %v399, 2
        %vm401 = vcmp.gt.s32.totalorder 0, %v400
        %v402 = vsel %vm401, 0, %v400
        %v403 = vsub.s32 32, %v402
        %v404 = vshll.u32 %v395, %v402
        %v405 = vshrl.u32 %v387, %v403
        %v406 = vor.u32 %v404, %v405
        %v407 = vsub.s32 4294967266, %v402
        %v408 = vadd.s32 %v407, 127
        %v409 = vshll.u32 %v408, 23
        %v410 = vor.u32 4788187, %v409
        %v411 = vand.u32 2147483647, %v410
        %v413 = vcvt.s32.f32 %v406
        %v414 = vmul.f32 %v413, %v411
        %v415 = vxor.u32 %v414, 2147483648
        %v416 = vsel %vm333, %v415, %v414
        %v417 = vsub.s32 4, %v393
        %v418 = vsel %vm333, %v417, %v393
        %v419 = vsel %vm332, %v315, %v416
        %v420 = vsel %vm332, 0, %v418
        %v421 = vcosq.f32.pop %v419
        %v422 = vsinq.f32.pop %v419
        %vm423 = vweird.f32 %v315
        %v424 = vadd.s32 %v420, 3
        %v425 = vand.u32 %v424, 3
        %vm426 = vcmp.lt.s32.totalorder %v425, 2
        %vm427 = vcmp.eq.s32.totalorder %v425, 0
        %v428 = vxor.u32 %v422, 2147483648
        %v429 = vsel %vm427, %v421, %v428
        %vm430 = vcmp.eq.s32.totalorder %v425, 2
        %v431 = vxor.u32 %v421, 2147483648
        %v432 = vsel %vm430, %v431, %v422
        %v433 = vsel %vm426, %v429, %v432
        %v434 = vsel %vm423, nan, %v433
        %v435 = vand.u32 2147483647, %v316
        %vm436 = vcmp.le.f32.partialorder %v435, 0.7853982
        %vm437 = vcmp.lt.s32.totalorder %v316, 0
        %v438 = vand.u32 %v316, 2139095040
        %v439 = vshrl.u32 %v438, 23
        %v440 = vsub.s32 %v439, 127
        %v441 = vand.u32 2147483647, %v316
        %v442 = vand.u32 %v441, 8388607
        %v443 = vor.u32 %v442, 8388608
        %v444 = vsub.s32 0, %v443
        %v445 = vadd.s32 %v440, 1
        %vm446 = vcmp.gt.s32.totalorder %v445, 0
        %v447 = vsel %vm446, %v445, 0
        %v448 = vshrl.u32 %v447, 5
        %v449 = vand.u32 %v447, 31
        %v450 = vsub.s32 32, %v449
        %v451 = vshrl.u32 683565275, %v450
        %v452 = vshll.u32 683565275, %v449
        %v453 = vshrl.u32 2475754826, %v450
        %v454 = vor.u32 %v452, %v453
        %v455 = vshll.u32 2475754826, %v449
        %v456 = vshrl.u32 2131351028, %v450
        %v457 = vor.u32 %v455, %v456
        %v458 = vshll.u32 2131351028, %v449
        %v459 = vshrl.u32 2102212464, %v450
        %v460 = vor.u32 %v458, %v459
        %v461 = vshll.u32 2102212464, %v449
        %v462 = vshrl.u32 920167782, %v450
        %v463 = vor.u32 %v461, %v462
        %v464 = vshll.u32 920167782, %v449
        %v465 = vshrl.u32 1326507024, %v450
        %v466 = vor.u32 %v464, %v465
        %vm467 = vcmp.lt.s32.totalorder %v448, 1
        %vm468 = vcmp.lt.s32.totalorder %v448, 2
        %vm469 = vcmp.lt.s32.totalorder %v448, 3
        %vm470 = vcmp.lt.s32.totalorder %v448, 4
        %v471 = vsel %vm467, %v451, %v454
        %v472 = vsel %vm470, %v460, 2102212464
        %v473 = vsel %vm469, %v457, %v472
        %v474 = vsel %vm468, %v471, %v473
        %v475 = vsel %vm467, %v454, %v457
        %v476 = vsel %vm470, %v463, 920167782
        %v477 = vsel %vm469, %v460, %v476
        %v478 = vsel %vm468, %v475, %v477
        %v479 = vsel %vm467, %v457, %v460
        %v480 = vsel %vm470, %v466, 1326507024
        %v481 = vsel %vm469, %v463, %v480
        %v482 = vsel %vm468, %v479, %v481
        %v483 = vshll.u32 %v443, 8
        %v484 = vmul.u32.u64.compose %v483, %v482
        %v485 = vextract.low.u32 %v484
        %v486 = vextract.high.u32 %v484
        %v487 = vmul.u32.u64.compose %v483, %v478
        %v488 = vextract.low.u32 %v487
        %v489 = vextract.high.u32 %v487
        %v490 = vmul.u32 %v483, %v474
        %v491 = vadd.s32 %v486, %v488
        %vm492 = vc.u32 %v486, %v488
        %v493 = vadd.s32 %v489, 1
        %v494 = vsel %vm492, %v493, %v489
        %v495 = vadd.s32 %v490, %v494
        %v496 = vadd.s32 %v495, 536870912
        %v497 = vshrl.u32 %v496, 30
        %v498 = vshll.u32 %v497, 30
        %v499 = vsub.s32 %v495, %v498
        %vm500 = vcmp.lt.s32.totalorder %v499, 0
        %v501 = vsub.s32 0, %v499
        %v502 = vsel %vm500, %v501, %v499
        %v503 = vclz %v502
        %v504 = vsub.s32 %v503, 2
        %vm505 = vcmp.gt.s32.totalorder 0, %v504
        %v506 = vsel %vm505, 0, %v504
        %v507 = vsub.s32 32, %v506
        %v508 = vshll.u32 %v499, %v506
        %v509 = vshrl.u32 %v491, %v507
        %v510 = vor.u32 %v508, %v509
        %v511 = vsub.s32 4294967266, %v506
        %v512 = vadd.s32 %v511, 127
        %v513 = vshll.u32 %v512, 23
        %v514 = vor.u32 4788187, %v513
        %v515 = vand.u32 2147483647, %v514
        %v517 = vcvt.s32.f32 %v510
        %v518 = vmul.f32 %v517, %v515
        %v519 = vxor.u32 %v518, 2147483648
        %v520 = vsel %vm437, %v519, %v518
        %v521 = vsub.s32 4, %v497
        %v522 = vsel %vm437, %v521, %v497
        %v523 = vsel %vm436, %v316, %v520
        %v524 = vsel %vm436, 0, %v522
        %v525 = vcosq.f32.pop %v523
        %v526 = vsinq.f32.pop %v523
        %vm527 = vweird.f32 %v316
        %v528 = vadd.s32 %v524, 3
        %v529 = vand.u32 %v528, 3
        %vm530 = vcmp.lt.s32.totalorder %v529, 2
        %vm531 = vcmp.eq.s32.totalorder %v529, 0
        %v532 = vxor.u32 %v526, 2147483648
        %v533 = vsel %vm531, %v525, %v532
        %vm534 = vcmp.eq.s32.totalorder %v529, 2
        %v535 = vxor.u32 %v525, 2147483648
        %v536 = vsel %vm534, %v535, %v526
        %v537 = vsel %vm530, %v533, %v536
        %v538 = vsel %vm527, nan, %v537
        %v539 = vand.u32 2147483647, %v317
        %vm540 = vcmp.le.f32.partialorder %v539, 0.7853982
        %vm541 = vcmp.lt.s32.totalorder %v317, 0
        %v542 = vand.u32 %v317, 2139095040
        %v543 = vshrl.u32 %v542, 23
        %v544 = vsub.s32 %v543, 127
        %v545 = vand.u32 2147483647, %v317
        %v546 = vand.u32 %v545, 8388607
        %v547 = vor.u32 %v546, 8388608
        %v548 = vsub.s32 0, %v547
        %v549 = vadd.s32 %v544, 1
        %vm550 = vcmp.gt.s32.totalorder %v549, 0
        %v551 = vsel %vm550, %v549, 0
        %v552 = vshrl.u32 %v551, 5
        %v553 = vand.u32 %v551, 31
        %v554 = vsub.s32 32, %v553
        %v555 = vshrl.u32 683565275, %v554
        %v556 = vshll.u32 683565275, %v553
        %v557 = vshrl.u32 2475754826, %v554
        %v558 = vor.u32 %v556, %v557
        %v559 = vshll.u32 2475754826, %v553
        %v560 = vshrl.u32 2131351028, %v554
        %v561 = vor.u32 %v559, %v560
        %v562 = vshll.u32 2131351028, %v553
        %v563 = vshrl.u32 2102212464, %v554
        %v564 = vor.u32 %v562, %v563
        %v565 = vshll.u32 2102212464, %v553
        %v566 = vshrl.u32 920167782, %v554
        %v567 = vor.u32 %v565, %v566
        %v568 = vshll.u32 920167782, %v553
        %v569 = vshrl.u32 1326507024, %v554
        %v570 = vor.u32 %v568, %v569
        %vm571 = vcmp.lt.s32.totalorder %v552, 1
        %vm572 = vcmp.lt.s32.totalorder %v552, 2
        %vm573 = vcmp.lt.s32.totalorder %v552, 3
        %vm574 = vcmp.lt.s32.totalorder %v552, 4
        %v575 = vsel %vm571, %v555, %v558
        %v576 = vsel %vm574, %v564, 2102212464
        %v577 = vsel %vm573, %v561, %v576
        %v578 = vsel %vm572, %v575, %v577
        %v579 = vsel %vm571, %v558, %v561
        %v580 = vsel %vm574, %v567, 920167782
        %v581 = vsel %vm573, %v564, %v580
        %v582 = vsel %vm572, %v579, %v581
        %v583 = vsel %vm571, %v561, %v564
        %v584 = vsel %vm574, %v570, 1326507024
        %v585 = vsel %vm573, %v567, %v584
        %v586 = vsel %vm572, %v583, %v585
        %v587 = vshll.u32 %v547, 8
        %v588 = vmul.u32.u64.compose %v587, %v586
        %v589 = vextract.low.u32 %v588
        %v590 = vextract.high.u32 %v588
        %v591 = vmul.u32.u64.compose %v587, %v582
        %v592 = vextract.low.u32 %v591
        %v593 = vextract.high.u32 %v591
        %v594 = vmul.u32 %v587, %v578
        %v595 = vadd.s32 %v590, %v592
        %vm596 = vc.u32 %v590, %v592
        %v597 = vadd.s32 %v593, 1
        %v598 = vsel %vm596, %v597, %v593
        %v599 = vadd.s32 %v594, %v598
        %v600 = vadd.s32 %v599, 536870912
        %v601 = vshrl.u32 %v600, 30
        %v602 = vshll.u32 %v601, 30
        %v603 = vsub.s32 %v599, %v602
        %vm604 = vcmp.lt.s32.totalorder %v603, 0
        %v605 = vsub.s32 0, %v603
        %v606 = vsel %vm604, %v605, %v603
        %v607 = vclz %v606
        %v608 = vsub.s32 %v607, 2
        %vm609 = vcmp.gt.s32.totalorder 0, %v608
        %v610 = vsel %vm609, 0, %v608
        %v611 = vsub.s32 32, %v610
        %v612 = vshll.u32 %v603, %v610
        %v613 = vshrl.u32 %v595, %v611
        %v614 = vor.u32 %v612, %v613
        %v615 = vsub.s32 4294967266, %v610
        %v616 = vadd.s32 %v615, 127
        %v617 = vshll.u32 %v616, 23
        %v618 = vor.u32 4788187, %v617
        %v619 = vand.u32 2147483647, %v618
        %v621 = vcvt.s32.f32 %v614
        %v622 = vmul.f32 %v621, %v619
        %v623 = vxor.u32 %v622, 2147483648
        %v624 = vsel %vm541, %v623, %v622
        %v625 = vsub.s32 4, %v601
        %v626 = vsel %vm541, %v625, %v601
        %v627 = vsel %vm540, %v317, %v624
        %v628 = vsel %vm540, 0, %v626
        %v629 = vcosq.f32.pop %v627
        %v630 = vsinq.f32.pop %v627
        %vm631 = vweird.f32 %v317
        %v632 = vadd.s32 %v628, 3
        %v633 = vand.u32 %v632, 3
        %vm634 = vcmp.lt.s32.totalorder %v633, 2
        %vm635 = vcmp.eq.s32.totalorder %v633, 0
        %v636 = vxor.u32 %v630, 2147483648
        %v637 = vsel %vm635, %v629, %v636
        %vm638 = vcmp.eq.s32.totalorder %v633, 2
        %v639 = vxor.u32 %v629, 2147483648
        %v640 = vsel %vm638, %v639, %v630
        %v641 = vsel %vm634, %v637, %v640
        %v642 = vsel %vm631, nan, %v641
        %v643 = vand.u32 2147483647, %v318
        %vm644 = vcmp.le.f32.partialorder %v643, 0.7853982
        %vm645 = vcmp.lt.s32.totalorder %v318, 0
        %v646 = vand.u32 %v318, 2139095040
        %v647 = vshrl.u32 %v646, 23
        %v648 = vsub.s32 %v647, 127
        %v649 = vand.u32 2147483647, %v318
        %v650 = vand.u32 %v649, 8388607
        %v651 = vor.u32 %v650, 8388608
        %v652 = vsub.s32 0, %v651
        %v653 = vadd.s32 %v648, 1
        %vm654 = vcmp.gt.s32.totalorder %v653, 0
        %v655 = vsel %vm654, %v653, 0
        %v656 = vshrl.u32 %v655, 5
        %v657 = vand.u32 %v655, 31
        %v658 = vsub.s32 32, %v657
        %v659 = vshrl.u32 683565275, %v658
        %v660 = vshll.u32 683565275, %v657
        %v661 = vshrl.u32 2475754826, %v658
        %v662 = vor.u32 %v660, %v661
        %v663 = vshll.u32 2475754826, %v657
        %v664 = vshrl.u32 2131351028, %v658
        %v665 = vor.u32 %v663, %v664
        %v666 = vshll.u32 2131351028, %v657
        %v667 = vshrl.u32 2102212464, %v658
        %v668 = vor.u32 %v666, %v667
        %v669 = vshll.u32 2102212464, %v657
        %v670 = vshrl.u32 920167782, %v658
        %v671 = vor.u32 %v669, %v670
        %v672 = vshll.u32 920167782, %v657
        %v673 = vshrl.u32 1326507024, %v658
        %v674 = vor.u32 %v672, %v673
        %vm675 = vcmp.lt.s32.totalorder %v656, 1
        %vm676 = vcmp.lt.s32.totalorder %v656, 2
        %vm677 = vcmp.lt.s32.totalorder %v656, 3
        %vm678 = vcmp.lt.s32.totalorder %v656, 4
        %v679 = vsel %vm675, %v659, %v662
        %v680 = vsel %vm678, %v668, 2102212464
        %v681 = vsel %vm677, %v665, %v680
        %v682 = vsel %vm676, %v679, %v681
        %v683 = vsel %vm675, %v662, %v665
        %v684 = vsel %vm678, %v671, 920167782
        %v685 = vsel %vm677, %v668, %v684
        %v686 = vsel %vm676, %v683, %v685
        %v687 = vsel %vm675, %v665, %v668
        %v688 = vsel %vm678, %v674, 1326507024
        %v689 = vsel %vm677, %v671, %v688
        %v690 = vsel %vm676, %v687, %v689
        %v691 = vshll.u32 %v651, 8
        %v692 = vmul.u32.u64.compose %v691, %v690
        %v693 = vextract.low.u32 %v692
        %v694 = vextract.high.u32 %v692
        %v695 = vmul.u32.u64.compose %v691, %v686
        %v696 = vextract.low.u32 %v695
        %v697 = vextract.high.u32 %v695
        %v698 = vmul.u32 %v691, %v682
        %v699 = vadd.s32 %v694, %v696
        %vm700 = vc.u32 %v694, %v696
        %v701 = vadd.s32 %v697, 1
        %v702 = vsel %vm700, %v701, %v697
        %v703 = vadd.s32 %v698, %v702
        %v704 = vadd.s32 %v703, 536870912
        %v705 = vshrl.u32 %v704, 30
        %v706 = vshll.u32 %v705, 30
        %v707 = vsub.s32 %v703, %v706
        %vm708 = vcmp.lt.s32.totalorder %v707, 0
        %v709 = vsub.s32 0, %v707
        %v710 = vsel %vm708, %v709, %v707
        %v711 = vclz %v710
        %v712 = vsub.s32 %v711, 2
        %vm713 = vcmp.gt.s32.totalorder 0, %v712
        %v714 = vsel %vm713, 0, %v712
        %v715 = vsub.s32 32, %v714
        %v716 = vshll.u32 %v707, %v714
        %v717 = vshrl.u32 %v699, %v715
        %v718 = vor.u32 %v716, %v717
        %v719 = vsub.s32 4294967266, %v714
        %v720 = vadd.s32 %v719, 127
        %v721 = vshll.u32 %v720, 23
        %v722 = vor.u32 4788187, %v721
        %v723 = vand.u32 2147483647, %v722
        %v725 = vcvt.s32.f32 %v718
        %v726 = vmul.f32 %v725, %v723
        %v727 = vxor.u32 %v726, 2147483648
        %v728 = vsel %vm645, %v727, %v726
        %v729 = vsub.s32 4, %v705
        %v730 = vsel %vm645, %v729, %v705
        %v731 = vsel %vm644, %v318, %v728
        %v732 = vsel %vm644, 0, %v730
        %v733 = vcosq.f32.pop %v731
        %v734 = vsinq.f32.pop %v731
        %vm735 = vweird.f32 %v318
        %v736 = vadd.s32 %v732, 3
        %v737 = vand.u32 %v736, 3
        %vm738 = vcmp.lt.s32.totalorder %v737, 2
        %vm739 = vcmp.eq.s32.totalorder %v737, 0
        %v740 = vxor.u32 %v734, 2147483648
        %v741 = vsel %vm739, %v733, %v740
        %vm742 = vcmp.eq.s32.totalorder %v737, 2
        %v743 = vxor.u32 %v733, 2147483648
        %v744 = vsel %vm742, %v743, %v734
        %v745 = vsel %vm738, %v741, %v744
        %v746 = vsel %vm735, nan, %v745
        %v747 = vand.u32 2147483647, %v319
        %vm748 = vcmp.le.f32.partialorder %v747, 0.7853982
        %vm749 = vcmp.lt.s32.totalorder %v319, 0
        %v750 = vand.u32 %v319, 2139095040
        %v751 = vshrl.u32 %v750, 23
        %v752 = vsub.s32 %v751, 127
        %v753 = vand.u32 2147483647, %v319
        %v754 = vand.u32 %v753, 8388607
        %v755 = vor.u32 %v754, 8388608
        %v756 = vsub.s32 0, %v755
        %v757 = vadd.s32 %v752, 1
        %vm758 = vcmp.gt.s32.totalorder %v757, 0
        %v759 = vsel %vm758, %v757, 0
        %v760 = vshrl.u32 %v759, 5
        %v761 = vand.u32 %v759, 31
        %v762 = vsub.s32 32, %v761
        %v763 = vshrl.u32 683565275, %v762
        %v764 = vshll.u32 683565275, %v761
        %v765 = vshrl.u32 2475754826, %v762
        %v766 = vor.u32 %v764, %v765
        %v767 = vshll.u32 2475754826, %v761
        %v768 = vshrl.u32 2131351028, %v762
        %v769 = vor.u32 %v767, %v768
        %v770 = vshll.u32 2131351028, %v761
        %v771 = vshrl.u32 2102212464, %v762
        %v772 = vor.u32 %v770, %v771
        %v773 = vshll.u32 2102212464, %v761
        %v774 = vshrl.u32 920167782, %v762
        %v775 = vor.u32 %v773, %v774
        %v776 = vshll.u32 920167782, %v761
        %v777 = vshrl.u32 1326507024, %v762
        %v778 = vor.u32 %v776, %v777
        %vm779 = vcmp.lt.s32.totalorder %v760, 1
        %vm780 = vcmp.lt.s32.totalorder %v760, 2
        %vm781 = vcmp.lt.s32.totalorder %v760, 3
        %vm782 = vcmp.lt.s32.totalorder %v760, 4
        %v783 = vsel %vm779, %v763, %v766
        %v784 = vsel %vm782, %v772, 2102212464
        %v785 = vsel %vm781, %v769, %v784
        %v786 = vsel %vm780, %v783, %v785
        %v787 = vsel %vm779, %v766, %v769
        %v788 = vsel %vm782, %v775, 920167782
        %v789 = vsel %vm781, %v772, %v788
        %v790 = vsel %vm780, %v787, %v789
        %v791 = vsel %vm779, %v769, %v772
        %v792 = vsel %vm782, %v778, 1326507024
        %v793 = vsel %vm781, %v775, %v792
        %v794 = vsel %vm780, %v791, %v793
        %v795 = vshll.u32 %v755, 8
        %v796 = vmul.u32.u64.compose %v795, %v794
        %v797 = vextract.low.u32 %v796
        %v798 = vextract.high.u32 %v796
        %v799 = vmul.u32.u64.compose %v795, %v790
        %v800 = vextract.low.u32 %v799
        %v801 = vextract.high.u32 %v799
        %v802 = vmul.u32 %v795, %v786
        %v803 = vadd.s32 %v798, %v800
        %vm804 = vc.u32 %v798, %v800
        %v805 = vadd.s32 %v801, 1
        %v806 = vsel %vm804, %v805, %v801
        %v807 = vadd.s32 %v802, %v806
        %v808 = vadd.s32 %v807, 536870912
        %v809 = vshrl.u32 %v808, 30
        %v810 = vshll.u32 %v809, 30
        %v811 = vsub.s32 %v807, %v810
        %vm812 = vcmp.lt.s32.totalorder %v811, 0
        %v813 = vsub.s32 0, %v811
        %v814 = vsel %vm812, %v813, %v811
        %v815 = vclz %v814
        %v816 = vsub.s32 %v815, 2
        %vm817 = vcmp.gt.s32.totalorder 0, %v816
        %v818 = vsel %vm817, 0, %v816
        %v819 = vsub.s32 32, %v818
        %v820 = vshll.u32 %v811, %v818
        %v821 = vshrl.u32 %v803, %v819
        %v822 = vor.u32 %v820, %v821
        %v823 = vsub.s32 4294967266, %v818
        %v824 = vadd.s32 %v823, 127
        %v825 = vshll.u32 %v824, 23
        %v826 = vor.u32 4788187, %v825
        %v827 = vand.u32 2147483647, %v826
        %v829 = vcvt.s32.f32 %v822
        %v830 = vmul.f32 %v829, %v827
        %v831 = vxor.u32 %v830, 2147483648
        %v832 = vsel %vm749, %v831, %v830
        %v833 = vsub.s32 4, %v809
        %v834 = vsel %vm749, %v833, %v809
        %v835 = vsel %vm748, %v319, %v832
        %v836 = vsel %vm748, 0, %v834
        %v837 = vcosq.f32.pop %v835
        %v838 = vsinq.f32.pop %v835
        %vm839 = vweird.f32 %v319
        %v840 = vadd.s32 %v836, 3
        %v841 = vand.u32 %v840, 3
        %vm842 = vcmp.lt.s32.totalorder %v841, 2
        %vm843 = vcmp.eq.s32.totalorder %v841, 0
        %v844 = vxor.u32 %v838, 2147483648
        %v845 = vsel %vm843, %v837, %v844
        %vm846 = vcmp.eq.s32.totalorder %v841, 2
        %v847 = vxor.u32 %v837, 2147483648
        %v848 = vsel %vm846, %v847, %v838
        %v849 = vsel %vm842, %v845, %v848
        %v850 = vsel %vm839, nan, %v849
        %v851 = vand.u32 2147483647, %v320
        %vm852 = vcmp.le.f32.partialorder %v851, 0.7853982
        %vm853 = vcmp.lt.s32.totalorder %v320, 0
        %v854 = vand.u32 %v320, 2139095040
        %v855 = vshrl.u32 %v854, 23
        %v856 = vsub.s32 %v855, 127
        %v857 = vand.u32 2147483647, %v320
        %v858 = vand.u32 %v857, 8388607
        %v859 = vor.u32 %v858, 8388608
        %v860 = vsub.s32 0, %v859
        %v861 = vadd.s32 %v856, 1
        %vm862 = vcmp.gt.s32.totalorder %v861, 0
        %v863 = vsel %vm862, %v861, 0
        %v864 = vshrl.u32 %v863, 5
        %v865 = vand.u32 %v863, 31
        %v866 = vsub.s32 32, %v865
        %v867 = vshrl.u32 683565275, %v866
        %v868 = vshll.u32 683565275, %v865
        %v869 = vshrl.u32 2475754826, %v866
        %v870 = vor.u32 %v868, %v869
        %v871 = vshll.u32 2475754826, %v865
        %v872 = vshrl.u32 2131351028, %v866
        %v873 = vor.u32 %v871, %v872
        %v874 = vshll.u32 2131351028, %v865
        %v875 = vshrl.u32 2102212464, %v866
        %v876 = vor.u32 %v874, %v875
        %v877 = vshll.u32 2102212464, %v865
        %v878 = vshrl.u32 920167782, %v866
        %v879 = vor.u32 %v877, %v878
        %v880 = vshll.u32 920167782, %v865
        %v881 = vshrl.u32 1326507024, %v866
        %v882 = vor.u32 %v880, %v881
        %vm883 = vcmp.lt.s32.totalorder %v864, 1
        %vm884 = vcmp.lt.s32.totalorder %v864, 2
        %vm885 = vcmp.lt.s32.totalorder %v864, 3
        %vm886 = vcmp.lt.s32.totalorder %v864, 4
        %v887 = vsel %vm883, %v867, %v870
        %v888 = vsel %vm886, %v876, 2102212464
        %v889 = vsel %vm885, %v873, %v888
        %v890 = vsel %vm884, %v887, %v889
        %v891 = vsel %vm883, %v870, %v873
        %v892 = vsel %vm886, %v879, 920167782
        %v893 = vsel %vm885, %v876, %v892
        %v894 = vsel %vm884, %v891, %v893
        %v895 = vsel %vm883, %v873, %v876
        %v896 = vsel %vm886, %v882, 1326507024
        %v897 = vsel %vm885, %v879, %v896
        %v898 = vsel %vm884, %v895, %v897
        %v899 = vshll.u32 %v859, 8
        %v900 = vmul.u32.u64.compose %v899, %v898
        %v901 = vextract.low.u32 %v900
        %v902 = vextract.high.u32 %v900
        %v903 = vmul.u32.u64.compose %v899, %v894
        %v904 = vextract.low.u32 %v903
        %v905 = vextract.high.u32 %v903
        %v906 = vmul.u32 %v899, %v890
        %v907 = vadd.s32 %v902, %v904
        %vm908 = vc.u32 %v902, %v904
        %v909 = vadd.s32 %v905, 1
        %v910 = vsel %vm908, %v909, %v905
        %v911 = vadd.s32 %v906, %v910
        %v912 = vadd.s32 %v911, 536870912
        %v913 = vshrl.u32 %v912, 30
        %v914 = vshll.u32 %v913, 30
        %v915 = vsub.s32 %v911, %v914
        %vm916 = vcmp.lt.s32.totalorder %v915, 0
        %v917 = vsub.s32 0, %v915
        %v918 = vsel %vm916, %v917, %v915
        %v919 = vclz %v918
        %v920 = vsub.s32 %v919, 2
        %vm921 = vcmp.gt.s32.totalorder 0, %v920
        %v922 = vsel %vm921, 0, %v920
        %v923 = vsub.s32 32, %v922
        %v924 = vshll.u32 %v915, %v922
        %v925 = vshrl.u32 %v907, %v923
        %v926 = vor.u32 %v924, %v925
        %v927 = vsub.s32 4294967266, %v922
        %v928 = vadd.s32 %v927, 127
        %v929 = vshll.u32 %v928, 23
        %v930 = vor.u32 4788187, %v929
        %v931 = vand.u32 2147483647, %v930
        %v933 = vcvt.s32.f32 %v926
        %v934 = vmul.f32 %v933, %v931
        %v935 = vxor.u32 %v934, 2147483648
        %v936 = vsel %vm853, %v935, %v934
        %v937 = vsub.s32 4, %v913
        %v938 = vsel %vm853, %v937, %v913
        %v939 = vsel %vm852, %v320, %v936
        %v940 = vsel %vm852, 0, %v938
        %v941 = vcosq.f32.pop %v939
        %v942 = vsinq.f32.pop %v939
        %vm943 = vweird.f32 %v320
        %v944 = vadd.s32 %v940, 3
        %v945 = vand.u32 %v944, 3
        %vm946 = vcmp.lt.s32.totalorder %v945, 2
        %vm947 = vcmp.eq.s32.totalorder %v945, 0
        %v948 = vxor.u32 %v942, 2147483648
        %v949 = vsel %vm947, %v941, %v948
        %vm950 = vcmp.eq.s32.totalorder %v945, 2
        %v951 = vxor.u32 %v941, 2147483648
        %v952 = vsel %vm950, %v951, %v942
        %v953 = vsel %vm946, %v949, %v952
        %v954 = vsel %vm943, nan, %v953
        %v955 = vand.u32 2147483647, %v321
        %vm956 = vcmp.le.f32.partialorder %v955, 0.7853982
        %vm957 = vcmp.lt.s32.totalorder %v321, 0
        %v958 = vand.u32 %v321, 2139095040
        %v959 = vshrl.u32 %v958, 23
        %v960 = vsub.s32 %v959, 127
        %v961 = vand.u32 2147483647, %v321
        %v962 = vand.u32 %v961, 8388607
        %v963 = vor.u32 %v962, 8388608
        %v964 = vsub.s32 0, %v963
        %v965 = vadd.s32 %v960, 1
        %vm966 = vcmp.gt.s32.totalorder %v965, 0
        %v967 = vsel %vm966, %v965, 0
        %v968 = vshrl.u32 %v967, 5
        %v969 = vand.u32 %v967, 31
        %v970 = vsub.s32 32, %v969
        %v971 = vshrl.u32 683565275, %v970
        %v972 = vshll.u32 683565275, %v969
        %v973 = vshrl.u32 2475754826, %v970
        %v974 = vor.u32 %v972, %v973
        %v975 = vshll.u32 2475754826, %v969
        %v976 = vshrl.u32 2131351028, %v970
        %v977 = vor.u32 %v975, %v976
        %v978 = vshll.u32 2131351028, %v969
        %v979 = vshrl.u32 2102212464, %v970
        %v980 = vor.u32 %v978, %v979
        %v981 = vshll.u32 2102212464, %v969
        %v982 = vshrl.u32 920167782, %v970
        %v983 = vor.u32 %v981, %v982
        %v984 = vshll.u32 920167782, %v969
        %v985 = vshrl.u32 1326507024, %v970
        %v986 = vor.u32 %v984, %v985
        %vm987 = vcmp.lt.s32.totalorder %v968, 1
        %vm988 = vcmp.lt.s32.totalorder %v968, 2
        %vm989 = vcmp.lt.s32.totalorder %v968, 3
        %vm990 = vcmp.lt.s32.totalorder %v968, 4
        %v991 = vsel %vm987, %v971, %v974
        %v992 = vsel %vm990, %v980, 2102212464
        %v993 = vsel %vm989, %v977, %v992
        %v994 = vsel %vm988, %v991, %v993
        %v995 = vsel %vm987, %v974, %v977
        %v996 = vsel %vm990, %v983, 920167782
        %v997 = vsel %vm989, %v980, %v996
        %v998 = vsel %vm988, %v995, %v997
        %v999 = vsel %vm987, %v977, %v980
        %v1000 = vsel %vm990, %v986, 1326507024
        %v1001 = vsel %vm989, %v983, %v1000
        %v1002 = vsel %vm988, %v999, %v1001
        %v1003 = vshll.u32 %v963, 8
        %v1004 = vmul.u32.u64.compose %v1003, %v1002
        %v1005 = vextract.low.u32 %v1004
        %v1006 = vextract.high.u32 %v1004
        %v1007 = vmul.u32.u64.compose %v1003, %v998
        %v1008 = vextract.low.u32 %v1007
        %v1009 = vextract.high.u32 %v1007
        %v1010 = vmul.u32 %v1003, %v994
        %v1011 = vadd.s32 %v1006, %v1008
        %vm1012 = vc.u32 %v1006, %v1008
        %v1013 = vadd.s32 %v1009, 1
        %v1014 = vsel %vm1012, %v1013, %v1009
        %v1015 = vadd.s32 %v1010, %v1014
        %v1016 = vadd.s32 %v1015, 536870912
        %v1017 = vshrl.u32 %v1016, 30
        %v1018 = vshll.u32 %v1017, 30
        %v1019 = vsub.s32 %v1015, %v1018
        %vm1020 = vcmp.lt.s32.totalorder %v1019, 0
        %v1021 = vsub.s32 0, %v1019
        %v1022 = vsel %vm1020, %v1021, %v1019
        %v1023 = vclz %v1022
        %v1024 = vsub.s32 %v1023, 2
        %vm1025 = vcmp.gt.s32.totalorder 0, %v1024
        %v1026 = vsel %vm1025, 0, %v1024
        %v1027 = vsub.s32 32, %v1026
        %v1028 = vshll.u32 %v1019, %v1026
        %v1029 = vshrl.u32 %v1011, %v1027
        %v1030 = vor.u32 %v1028, %v1029
        %v1031 = vsub.s32 4294967266, %v1026
        %v1032 = vadd.s32 %v1031, 127
        %v1033 = vshll.u32 %v1032, 23
        %v1034 = vor.u32 4788187, %v1033
        %v1035 = vand.u32 2147483647, %v1034
        %v1037 = vcvt.s32.f32 %v1030
        %v1038 = vmul.f32 %v1037, %v1035
        %v1039 = vxor.u32 %v1038, 2147483648
        %v1040 = vsel %vm957, %v1039, %v1038
        %v1041 = vsub.s32 4, %v1017
        %v1042 = vsel %vm957, %v1041, %v1017
        %v1043 = vsel %vm956, %v321, %v1040
        %v1044 = vsel %vm956, 0, %v1042
        %v1045 = vcosq.f32.pop %v1043
        %v1046 = vsinq.f32.pop %v1043
        %vm1047 = vweird.f32 %v321
        %v1048 = vadd.s32 %v1044, 3
        %v1049 = vand.u32 %v1048, 3
        %vm1050 = vcmp.lt.s32.totalorder %v1049, 2
        %vm1051 = vcmp.eq.s32.totalorder %v1049, 0
        %v1052 = vxor.u32 %v1046, 2147483648
        %v1053 = vsel %vm1051, %v1045, %v1052
        %vm1054 = vcmp.eq.s32.totalorder %v1049, 2
        %v1055 = vxor.u32 %v1045, 2147483648
        %v1056 = vsel %vm1054, %v1055, %v1046
        %v1057 = vsel %vm1050, %v1053, %v1056
        %v1058 = vsel %vm1047, nan, %v1057
        %v1059 = vand.u32 2147483647, %v322
        %vm1060 = vcmp.le.f32.partialorder %v1059, 0.7853982
        %vm1061 = vcmp.lt.s32.totalorder %v322, 0
        %v1062 = vand.u32 %v322, 2139095040
        %v1063 = vshrl.u32 %v1062, 23
        %v1064 = vsub.s32 %v1063, 127
        %v1065 = vand.u32 2147483647, %v322
        %v1066 = vand.u32 %v1065, 8388607
        %v1067 = vor.u32 %v1066, 8388608
        %v1068 = vsub.s32 0, %v1067
        %v1069 = vadd.s32 %v1064, 1
        %vm1070 = vcmp.gt.s32.totalorder %v1069, 0
        %v1071 = vsel %vm1070, %v1069, 0
        %v1072 = vshrl.u32 %v1071, 5
        %v1073 = vand.u32 %v1071, 31
        %v1074 = vsub.s32 32, %v1073
        %v1075 = vshrl.u32 683565275, %v1074
        %v1076 = vshll.u32 683565275, %v1073
        %v1077 = vshrl.u32 2475754826, %v1074
        %v1078 = vor.u32 %v1076, %v1077
        %v1079 = vshll.u32 2475754826, %v1073
        %v1080 = vshrl.u32 2131351028, %v1074
        %v1081 = vor.u32 %v1079, %v1080
        %v1082 = vshll.u32 2131351028, %v1073
        %v1083 = vshrl.u32 2102212464, %v1074
        %v1084 = vor.u32 %v1082, %v1083
        %v1085 = vshll.u32 2102212464, %v1073
        %v1086 = vshrl.u32 920167782, %v1074
        %v1087 = vor.u32 %v1085, %v1086
        %v1088 = vshll.u32 920167782, %v1073
        %v1089 = vshrl.u32 1326507024, %v1074
        %v1090 = vor.u32 %v1088, %v1089
        %vm1091 = vcmp.lt.s32.totalorder %v1072, 1
        %vm1092 = vcmp.lt.s32.totalorder %v1072, 2
        %vm1093 = vcmp.lt.s32.totalorder %v1072, 3
        %vm1094 = vcmp.lt.s32.totalorder %v1072, 4
        %v1095 = vsel %vm1091, %v1075, %v1078
        %v1096 = vsel %vm1094, %v1084, 2102212464
        %v1097 = vsel %vm1093, %v1081, %v1096
        %v1098 = vsel %vm1092, %v1095, %v1097
        %v1099 = vsel %vm1091, %v1078, %v1081
        %v1100 = vsel %vm1094, %v1087, 920167782
        %v1101 = vsel %vm1093, %v1084, %v1100
        %v1102 = vsel %vm1092, %v1099, %v1101
        %v1103 = vsel %vm1091, %v1081, %v1084
        %v1104 = vsel %vm1094, %v1090, 1326507024
        %v1105 = vsel %vm1093, %v1087, %v1104
        %v1106 = vsel %vm1092, %v1103, %v1105
        %v1107 = vshll.u32 %v1067, 8
        %v1108 = vmul.u32.u64.compose %v1107, %v1106
        %v1109 = vextract.low.u32 %v1108
        %v1110 = vextract.high.u32 %v1108
        %v1111 = vmul.u32.u64.compose %v1107, %v1102
        %v1112 = vextract.low.u32 %v1111
        %v1113 = vextract.high.u32 %v1111
        %v1114 = vmul.u32 %v1107, %v1098
        %v1115 = vadd.s32 %v1110, %v1112
        %vm1116 = vc.u32 %v1110, %v1112
        %v1117 = vadd.s32 %v1113, 1
        %v1118 = vsel %vm1116, %v1117, %v1113
        %v1119 = vadd.s32 %v1114, %v1118
        %v1120 = vadd.s32 %v1119, 536870912
        %v1121 = vshrl.u32 %v1120, 30
        %v1122 = vshll.u32 %v1121, 30
        %v1123 = vsub.s32 %v1119, %v1122
        %vm1124 = vcmp.lt.s32.totalorder %v1123, 0
        %v1125 = vsub.s32 0, %v1123
        %v1126 = vsel %vm1124, %v1125, %v1123
        %v1127 = vclz %v1126
        %v1128 = vsub.s32 %v1127, 2
        %vm1129 = vcmp.gt.s32.totalorder 0, %v1128
        %v1130 = vsel %vm1129, 0, %v1128
        %v1131 = vsub.s32 32, %v1130
        %v1132 = vshll.u32 %v1123, %v1130
        %v1133 = vshrl.u32 %v1115, %v1131
        %v1134 = vor.u32 %v1132, %v1133
        %v1135 = vsub.s32 4294967266, %v1130
        %v1136 = vadd.s32 %v1135, 127
        %v1137 = vshll.u32 %v1136, 23
        %v1138 = vor.u32 4788187, %v1137
        %v1139 = vand.u32 2147483647, %v1138
        %v1141 = vcvt.s32.f32 %v1134
        %v1142 = vmul.f32 %v1141, %v1139
        %v1143 = vxor.u32 %v1142, 2147483648
        %v1144 = vsel %vm1061, %v1143, %v1142
        %v1145 = vsub.s32 4, %v1121
        %v1146 = vsel %vm1061, %v1145, %v1121
        %v1147 = vsel %vm1060, %v322, %v1144
        %v1148 = vsel %vm1060, 0, %v1146
        %v1149 = vcosq.f32.pop %v1147
        %v1150 = vsinq.f32.pop %v1147
        %vm1151 = vweird.f32 %v322
        %v1152 = vadd.s32 %v1148, 3
        %v1153 = vand.u32 %v1152, 3
        %vm1154 = vcmp.lt.s32.totalorder %v1153, 2
        %vm1155 = vcmp.eq.s32.totalorder %v1153, 0
        %v1156 = vxor.u32 %v1150, 2147483648
        %v1157 = vsel %vm1155, %v1149, %v1156
        %vm1158 = vcmp.eq.s32.totalorder %v1153, 2
        %v1159 = vxor.u32 %v1149, 2147483648
        %v1160 = vsel %vm1158, %v1159, %v1150
        %v1161 = vsel %vm1154, %v1157, %v1160
        %v1162 = vsel %vm1151, nan, %v1161
        %v1163 = vand.u32 2147483647, %v323
        %vm1164 = vcmp.le.f32.partialorder %v1163, 0.7853982
        %vm1165 = vcmp.lt.s32.totalorder %v323, 0
        %v1166 = vand.u32 %v323, 2139095040
        %v1167 = vshrl.u32 %v1166, 23
        %v1168 = vsub.s32 %v1167, 127
        %v1169 = vand.u32 2147483647, %v323
        %v1170 = vand.u32 %v1169, 8388607
        %v1171 = vor.u32 %v1170, 8388608
        %v1172 = vsub.s32 0, %v1171
        %v1173 = vadd.s32 %v1168, 1
        %vm1174 = vcmp.gt.s32.totalorder %v1173, 0
        %v1175 = vsel %vm1174, %v1173, 0
        %v1176 = vshrl.u32 %v1175, 5
        %v1177 = vand.u32 %v1175, 31
        %v1178 = vsub.s32 32, %v1177
        %v1179 = vshrl.u32 683565275, %v1178
        %v1180 = vshll.u32 683565275, %v1177
        %v1181 = vshrl.u32 2475754826, %v1178
        %v1182 = vor.u32 %v1180, %v1181
        %v1183 = vshll.u32 2475754826, %v1177
        %v1184 = vshrl.u32 2131351028, %v1178
        %v1185 = vor.u32 %v1183, %v1184
        %v1186 = vshll.u32 2131351028, %v1177
        %v1187 = vshrl.u32 2102212464, %v1178
        %v1188 = vor.u32 %v1186, %v1187
        %v1189 = vshll.u32 2102212464, %v1177
        %v1190 = vshrl.u32 920167782, %v1178
        %v1191 = vor.u32 %v1189, %v1190
        %v1192 = vshll.u32 920167782, %v1177
        %v1193 = vshrl.u32 1326507024, %v1178
        %v1194 = vor.u32 %v1192, %v1193
        %vm1195 = vcmp.lt.s32.totalorder %v1176, 1
        %vm1196 = vcmp.lt.s32.totalorder %v1176, 2
        %vm1197 = vcmp.lt.s32.totalorder %v1176, 3
        %vm1198 = vcmp.lt.s32.totalorder %v1176, 4
        %v1199 = vsel %vm1195, %v1179, %v1182
        %v1200 = vsel %vm1198, %v1188, 2102212464
        %v1201 = vsel %vm1197, %v1185, %v1200
        %v1202 = vsel %vm1196, %v1199, %v1201
        %v1203 = vsel %vm1195, %v1182, %v1185
        %v1204 = vsel %vm1198, %v1191, 920167782
        %v1205 = vsel %vm1197, %v1188, %v1204
        %v1206 = vsel %vm1196, %v1203, %v1205
        %v1207 = vsel %vm1195, %v1185, %v1188
        %v1208 = vsel %vm1198, %v1194, 1326507024
        %v1209 = vsel %vm1197, %v1191, %v1208
        %v1210 = vsel %vm1196, %v1207, %v1209
        %v1211 = vshll.u32 %v1171, 8
        %v1212 = vmul.u32.u64.compose %v1211, %v1210
        %v1213 = vextract.low.u32 %v1212
        %v1214 = vextract.high.u32 %v1212
        %v1215 = vmul.u32.u64.compose %v1211, %v1206
        %v1216 = vextract.low.u32 %v1215
        %v1217 = vextract.high.u32 %v1215
        %v1218 = vmul.u32 %v1211, %v1202
        %v1219 = vadd.s32 %v1214, %v1216
        %vm1220 = vc.u32 %v1214, %v1216
        %v1221 = vadd.s32 %v1217, 1
        %v1222 = vsel %vm1220, %v1221, %v1217
        %v1223 = vadd.s32 %v1218, %v1222
        %v1224 = vadd.s32 %v1223, 536870912
        %v1225 = vshrl.u32 %v1224, 30
        %v1226 = vshll.u32 %v1225, 30
        %v1227 = vsub.s32 %v1223, %v1226
        %vm1228 = vcmp.lt.s32.totalorder %v1227, 0
        %v1229 = vsub.s32 0, %v1227
        %v1230 = vsel %vm1228, %v1229, %v1227
        %v1231 = vclz %v1230
        %v1232 = vsub.s32 %v1231, 2
        %vm1233 = vcmp.gt.s32.totalorder 0, %v1232
        %v1234 = vsel %vm1233, 0, %v1232
        %v1235 = vsub.s32 32, %v1234
        %v1236 = vshll.u32 %v1227, %v1234
        %v1237 = vshrl.u32 %v1219, %v1235
        %v1238 = vor.u32 %v1236, %v1237
        %v1239 = vsub.s32 4294967266, %v1234
        %v1240 = vadd.s32 %v1239, 127
        %v1241 = vshll.u32 %v1240, 23
        %v1242 = vor.u32 4788187, %v1241
        %v1243 = vand.u32 2147483647, %v1242
        %v1245 = vcvt.s32.f32 %v1238
        %v1246 = vmul.f32 %v1245, %v1243
        %v1247 = vxor.u32 %v1246, 2147483648
        %v1248 = vsel %vm1165, %v1247, %v1246
        %v1249 = vsub.s32 4, %v1225
        %v1250 = vsel %vm1165, %v1249, %v1225
        %v1251 = vsel %vm1164, %v323, %v1248
        %v1252 = vsel %vm1164, 0, %v1250
        %v1253 = vcosq.f32.pop %v1251
        %v1254 = vsinq.f32.pop %v1251
        %vm1255 = vweird.f32 %v323
        %v1256 = vadd.s32 %v1252, 3
        %v1257 = vand.u32 %v1256, 3
        %vm1258 = vcmp.lt.s32.totalorder %v1257, 2
        %vm1259 = vcmp.eq.s32.totalorder %v1257, 0
        %v1260 = vxor.u32 %v1254, 2147483648
        %v1261 = vsel %vm1259, %v1253, %v1260
        %vm1262 = vcmp.eq.s32.totalorder %v1257, 2
        %v1263 = vxor.u32 %v1253, 2147483648
        %v1264 = vsel %vm1262, %v1263, %v1254
        %v1265 = vsel %vm1258, %v1261, %v1264
        %v1266 = vsel %vm1255, nan, %v1265
        %v1267 = vand.u32 2147483647, %v324
        %vm1268 = vcmp.le.f32.partialorder %v1267, 0.7853982
        %vm1269 = vcmp.lt.s32.totalorder %v324, 0
        %v1270 = vand.u32 %v324, 2139095040
        %v1271 = vshrl.u32 %v1270, 23
        %v1272 = vsub.s32 %v1271, 127
        %v1273 = vand.u32 2147483647, %v324
        %v1274 = vand.u32 %v1273, 8388607
        %v1275 = vor.u32 %v1274, 8388608
        %v1276 = vsub.s32 0, %v1275
        %v1277 = vadd.s32 %v1272, 1
        %vm1278 = vcmp.gt.s32.totalorder %v1277, 0
        %v1279 = vsel %vm1278, %v1277, 0
        %v1280 = vshrl.u32 %v1279, 5
        %v1281 = vand.u32 %v1279, 31
        %v1282 = vsub.s32 32, %v1281
        %v1283 = vshrl.u32 683565275, %v1282
        %v1284 = vshll.u32 683565275, %v1281
        %v1285 = vshrl.u32 2475754826, %v1282
        %v1286 = vor.u32 %v1284, %v1285
        %v1287 = vshll.u32 2475754826, %v1281
        %v1288 = vshrl.u32 2131351028, %v1282
        %v1289 = vor.u32 %v1287, %v1288
        %v1290 = vshll.u32 2131351028, %v1281
        %v1291 = vshrl.u32 2102212464, %v1282
        %v1292 = vor.u32 %v1290, %v1291
        %v1293 = vshll.u32 2102212464, %v1281
        %v1294 = vshrl.u32 920167782, %v1282
        %v1295 = vor.u32 %v1293, %v1294
        %v1296 = vshll.u32 920167782, %v1281
        %v1297 = vshrl.u32 1326507024, %v1282
        %v1298 = vor.u32 %v1296, %v1297
        %vm1299 = vcmp.lt.s32.totalorder %v1280, 1
        %vm1300 = vcmp.lt.s32.totalorder %v1280, 2
        %vm1301 = vcmp.lt.s32.totalorder %v1280, 3
        %vm1302 = vcmp.lt.s32.totalorder %v1280, 4
        %v1303 = vsel %vm1299, %v1283, %v1286
        %v1304 = vsel %vm1302, %v1292, 2102212464
        %v1305 = vsel %vm1301, %v1289, %v1304
        %v1306 = vsel %vm1300, %v1303, %v1305
        %v1307 = vsel %vm1299, %v1286, %v1289
        %v1308 = vsel %vm1302, %v1295, 920167782
        %v1309 = vsel %vm1301, %v1292, %v1308
        %v1310 = vsel %vm1300, %v1307, %v1309
        %v1311 = vsel %vm1299, %v1289, %v1292
        %v1312 = vsel %vm1302, %v1298, 1326507024
        %v1313 = vsel %vm1301, %v1295, %v1312
        %v1314 = vsel %vm1300, %v1311, %v1313
        %v1315 = vshll.u32 %v1275, 8
        %v1316 = vmul.u32.u64.compose %v1315, %v1314
        %v1317 = vextract.low.u32 %v1316
        %v1318 = vextract.high.u32 %v1316
        %v1319 = vmul.u32.u64.compose %v1315, %v1310
        %v1320 = vextract.low.u32 %v1319
        %v1321 = vextract.high.u32 %v1319
        %v1322 = vmul.u32 %v1315, %v1306
        %v1323 = vadd.s32 %v1318, %v1320
        %vm1324 = vc.u32 %v1318, %v1320
        %v1325 = vadd.s32 %v1321, 1
        %v1326 = vsel %vm1324, %v1325, %v1321
        %v1327 = vadd.s32 %v1322, %v1326
        %v1328 = vadd.s32 %v1327, 536870912
        %v1329 = vshrl.u32 %v1328, 30
        %v1330 = vshll.u32 %v1329, 30
        %v1331 = vsub.s32 %v1327, %v1330
        %vm1332 = vcmp.lt.s32.totalorder %v1331, 0
        %v1333 = vsub.s32 0, %v1331
        %v1334 = vsel %vm1332, %v1333, %v1331
        %v1335 = vclz %v1334
        %v1336 = vsub.s32 %v1335, 2
        %vm1337 = vcmp.gt.s32.totalorder 0, %v1336
        %v1338 = vsel %vm1337, 0, %v1336
        %v1339 = vsub.s32 32, %v1338
        %v1340 = vshll.u32 %v1331, %v1338
        %v1341 = vshrl.u32 %v1323, %v1339
        %v1342 = vor.u32 %v1340, %v1341
        %v1343 = vsub.s32 4294967266, %v1338
        %v1344 = vadd.s32 %v1343, 127
        %v1345 = vshll.u32 %v1344, 23
        %v1346 = vor.u32 4788187, %v1345
        %v1347 = vand.u32 2147483647, %v1346
        %v1349 = vcvt.s32.f32 %v1342
        %v1350 = vmul.f32 %v1349, %v1347
        %v1351 = vxor.u32 %v1350, 2147483648
        %v1352 = vsel %vm1269, %v1351, %v1350
        %v1353 = vsub.s32 4, %v1329
        %v1354 = vsel %vm1269, %v1353, %v1329
        %v1355 = vsel %vm1268, %v324, %v1352
        %v1356 = vsel %vm1268, 0, %v1354
        %v1357 = vcosq.f32.pop %v1355
        %v1358 = vsinq.f32.pop %v1355
        %vm1359 = vweird.f32 %v324
        %v1360 = vadd.s32 %v1356, 3
        %v1361 = vand.u32 %v1360, 3
        %vm1362 = vcmp.lt.s32.totalorder %v1361, 2
        %vm1363 = vcmp.eq.s32.totalorder %v1361, 0
        %v1364 = vxor.u32 %v1358, 2147483648
        %v1365 = vsel %vm1363, %v1357, %v1364
        %vm1366 = vcmp.eq.s32.totalorder %v1361, 2
        %v1367 = vxor.u32 %v1357, 2147483648
        %v1368 = vsel %vm1366, %v1367, %v1358
        %v1369 = vsel %vm1362, %v1365, %v1368
        %v1370 = vsel %vm1359, nan, %v1369
        %v1371 = vand.u32 2147483647, %v325
        %vm1372 = vcmp.le.f32.partialorder %v1371, 0.7853982
        %vm1373 = vcmp.lt.s32.totalorder %v325, 0
        %v1374 = vand.u32 %v325, 2139095040
        %v1375 = vshrl.u32 %v1374, 23
        %v1376 = vsub.s32 %v1375, 127
        %v1377 = vand.u32 2147483647, %v325
        %v1378 = vand.u32 %v1377, 8388607
        %v1379 = vor.u32 %v1378, 8388608
        %v1380 = vsub.s32 0, %v1379
        %v1381 = vadd.s32 %v1376, 1
        %vm1382 = vcmp.gt.s32.totalorder %v1381, 0
        %v1383 = vsel %vm1382, %v1381, 0
        %v1384 = vshrl.u32 %v1383, 5
        %v1385 = vand.u32 %v1383, 31
        %v1386 = vsub.s32 32, %v1385
        %v1387 = vshrl.u32 683565275, %v1386
        %v1388 = vshll.u32 683565275, %v1385
        %v1389 = vshrl.u32 2475754826, %v1386
        %v1390 = vor.u32 %v1388, %v1389
        %v1391 = vshll.u32 2475754826, %v1385
        %v1392 = vshrl.u32 2131351028, %v1386
        %v1393 = vor.u32 %v1391, %v1392
        %v1394 = vshll.u32 2131351028, %v1385
        %v1395 = vshrl.u32 2102212464, %v1386
        %v1396 = vor.u32 %v1394, %v1395
        %v1397 = vshll.u32 2102212464, %v1385
        %v1398 = vshrl.u32 920167782, %v1386
        %v1399 = vor.u32 %v1397, %v1398
        %v1400 = vshll.u32 920167782, %v1385
        %v1401 = vshrl.u32 1326507024, %v1386
        %v1402 = vor.u32 %v1400, %v1401
        %vm1403 = vcmp.lt.s32.totalorder %v1384, 1
        %vm1404 = vcmp.lt.s32.totalorder %v1384, 2
        %vm1405 = vcmp.lt.s32.totalorder %v1384, 3
        %vm1406 = vcmp.lt.s32.totalorder %v1384, 4
        %v1407 = vsel %vm1403, %v1387, %v1390
        %v1408 = vsel %vm1406, %v1396, 2102212464
        %v1409 = vsel %vm1405, %v1393, %v1408
        %v1410 = vsel %vm1404, %v1407, %v1409
        %v1411 = vsel %vm1403, %v1390, %v1393
        %v1412 = vsel %vm1406, %v1399, 920167782
        %v1413 = vsel %vm1405, %v1396, %v1412
        %v1414 = vsel %vm1404, %v1411, %v1413
        %v1415 = vsel %vm1403, %v1393, %v1396
        %v1416 = vsel %vm1406, %v1402, 1326507024
        %v1417 = vsel %vm1405, %v1399, %v1416
        %v1418 = vsel %vm1404, %v1415, %v1417
        %v1419 = vshll.u32 %v1379, 8
        %v1420 = vmul.u32.u64.compose %v1419, %v1418
        %v1421 = vextract.low.u32 %v1420
        %v1422 = vextract.high.u32 %v1420
        %v1423 = vmul.u32.u64.compose %v1419, %v1414
        %v1424 = vextract.low.u32 %v1423
        %v1425 = vextract.high.u32 %v1423
        %v1426 = vmul.u32 %v1419, %v1410
        %v1427 = vadd.s32 %v1422, %v1424
        %vm1428 = vc.u32 %v1422, %v1424
        %v1429 = vadd.s32 %v1425, 1
        %v1430 = vsel %vm1428, %v1429, %v1425
        %v1431 = vadd.s32 %v1426, %v1430
        %v1432 = vadd.s32 %v1431, 536870912
        %v1433 = vshrl.u32 %v1432, 30
        %v1434 = vshll.u32 %v1433, 30
        %v1435 = vsub.s32 %v1431, %v1434
        %vm1436 = vcmp.lt.s32.totalorder %v1435, 0
        %v1437 = vsub.s32 0, %v1435
        %v1438 = vsel %vm1436, %v1437, %v1435
        %v1439 = vclz %v1438
        %v1440 = vsub.s32 %v1439, 2
        %vm1441 = vcmp.gt.s32.totalorder 0, %v1440
        %v1442 = vsel %vm1441, 0, %v1440
        %v1443 = vsub.s32 32, %v1442
        %v1444 = vshll.u32 %v1435, %v1442
        %v1445 = vshrl.u32 %v1427, %v1443
        %v1446 = vor.u32 %v1444, %v1445
        %v1447 = vsub.s32 4294967266, %v1442
        %v1448 = vadd.s32 %v1447, 127
        %v1449 = vshll.u32 %v1448, 23
        %v1450 = vor.u32 4788187, %v1449
        %v1451 = vand.u32 2147483647, %v1450
        %v1453 = vcvt.s32.f32 %v1446
        %v1454 = vmul.f32 %v1453, %v1451
        %v1455 = vxor.u32 %v1454, 2147483648
        %v1456 = vsel %vm1373, %v1455, %v1454
        %v1457 = vsub.s32 4, %v1433
        %v1458 = vsel %vm1373, %v1457, %v1433
        %v1459 = vsel %vm1372, %v325, %v1456
        %v1460 = vsel %vm1372, 0, %v1458
        %v1461 = vcosq.f32.pop %v1459
        %v1462 = vsinq.f32.pop %v1459
        %vm1463 = vweird.f32 %v325
        %v1464 = vadd.s32 %v1460, 3
        %v1465 = vand.u32 %v1464, 3
        %vm1466 = vcmp.lt.s32.totalorder %v1465, 2
        %vm1467 = vcmp.eq.s32.totalorder %v1465, 0
        %v1468 = vxor.u32 %v1462, 2147483648
        %v1469 = vsel %vm1467, %v1461, %v1468
        %vm1470 = vcmp.eq.s32.totalorder %v1465, 2
        %v1471 = vxor.u32 %v1461, 2147483648
        %v1472 = vsel %vm1470, %v1471, %v1462
        %v1473 = vsel %vm1466, %v1469, %v1472
        %v1474 = vsel %vm1463, nan, %v1473
        %v1475 = vand.u32 2147483647, %v326
        %vm1476 = vcmp.le.f32.partialorder %v1475, 0.7853982
        %vm1477 = vcmp.lt.s32.totalorder %v326, 0
        %v1478 = vand.u32 %v326, 2139095040
        %v1479 = vshrl.u32 %v1478, 23
        %v1480 = vsub.s32 %v1479, 127
        %v1481 = vand.u32 2147483647, %v326
        %v1482 = vand.u32 %v1481, 8388607
        %v1483 = vor.u32 %v1482, 8388608
        %v1484 = vsub.s32 0, %v1483
        %v1485 = vadd.s32 %v1480, 1
        %vm1486 = vcmp.gt.s32.totalorder %v1485, 0
        %v1487 = vsel %vm1486, %v1485, 0
        %v1488 = vshrl.u32 %v1487, 5
        %v1489 = vand.u32 %v1487, 31
        %v1490 = vsub.s32 32, %v1489
        %v1491 = vshrl.u32 683565275, %v1490
        %v1492 = vshll.u32 683565275, %v1489
        %v1493 = vshrl.u32 2475754826, %v1490
        %v1494 = vor.u32 %v1492, %v1493
        %v1495 = vshll.u32 2475754826, %v1489
        %v1496 = vshrl.u32 2131351028, %v1490
        %v1497 = vor.u32 %v1495, %v1496
        %v1498 = vshll.u32 2131351028, %v1489
        %v1499 = vshrl.u32 2102212464, %v1490
        %v1500 = vor.u32 %v1498, %v1499
        %v1501 = vshll.u32 2102212464, %v1489
        %v1502 = vshrl.u32 920167782, %v1490
        %v1503 = vor.u32 %v1501, %v1502
        %v1504 = vshll.u32 920167782, %v1489
        %v1505 = vshrl.u32 1326507024, %v1490
        %v1506 = vor.u32 %v1504, %v1505
        %vm1507 = vcmp.lt.s32.totalorder %v1488, 1
        %vm1508 = vcmp.lt.s32.totalorder %v1488, 2
        %vm1509 = vcmp.lt.s32.totalorder %v1488, 3
        %vm1510 = vcmp.lt.s32.totalorder %v1488, 4
        %v1511 = vsel %vm1507, %v1491, %v1494
        %v1512 = vsel %vm1510, %v1500, 2102212464
        %v1513 = vsel %vm1509, %v1497, %v1512
        %v1514 = vsel %vm1508, %v1511, %v1513
        %v1515 = vsel %vm1507, %v1494, %v1497
        %v1516 = vsel %vm1510, %v1503, 920167782
        %v1517 = vsel %vm1509, %v1500, %v1516
        %v1518 = vsel %vm1508, %v1515, %v1517
        %v1519 = vsel %vm1507, %v1497, %v1500
        %v1520 = vsel %vm1510, %v1506, 1326507024
        %v1521 = vsel %vm1509, %v1503, %v1520
        %v1522 = vsel %vm1508, %v1519, %v1521
        %v1523 = vshll.u32 %v1483, 8
        %v1524 = vmul.u32.u64.compose %v1523, %v1522
        %v1525 = vextract.low.u32 %v1524
        %v1526 = vextract.high.u32 %v1524
        %v1527 = vmul.u32.u64.compose %v1523, %v1518
        %v1528 = vextract.low.u32 %v1527
        %v1529 = vextract.high.u32 %v1527
        %v1530 = vmul.u32 %v1523, %v1514
        %v1531 = vadd.s32 %v1526, %v1528
        %vm1532 = vc.u32 %v1526, %v1528
        %v1533 = vadd.s32 %v1529, 1
        %v1534 = vsel %vm1532, %v1533, %v1529
        %v1535 = vadd.s32 %v1530, %v1534
        %v1536 = vadd.s32 %v1535, 536870912
        %v1537 = vshrl.u32 %v1536, 30
        %v1538 = vshll.u32 %v1537, 30
        %v1539 = vsub.s32 %v1535, %v1538
        %vm1540 = vcmp.lt.s32.totalorder %v1539, 0
        %v1541 = vsub.s32 0, %v1539
        %v1542 = vsel %vm1540, %v1541, %v1539
        %v1543 = vclz %v1542
        %v1544 = vsub.s32 %v1543, 2
        %vm1545 = vcmp.gt.s32.totalorder 0, %v1544
        %v1546 = vsel %vm1545, 0, %v1544
        %v1547 = vsub.s32 32, %v1546
        %v1548 = vshll.u32 %v1539, %v1546
        %v1549 = vshrl.u32 %v1531, %v1547
        %v1550 = vor.u32 %v1548, %v1549
        %v1551 = vsub.s32 4294967266, %v1546
        %v1552 = vadd.s32 %v1551, 127
        %v1553 = vshll.u32 %v1552, 23
        %v1554 = vor.u32 4788187, %v1553
        %v1555 = vand.u32 2147483647, %v1554
        %v1557 = vcvt.s32.f32 %v1550
        %v1558 = vmul.f32 %v1557, %v1555
        %v1559 = vxor.u32 %v1558, 2147483648
        %v1560 = vsel %vm1477, %v1559, %v1558
        %v1561 = vsub.s32 4, %v1537
        %v1562 = vsel %vm1477, %v1561, %v1537
        %v1563 = vsel %vm1476, %v326, %v1560
        %v1564 = vsel %vm1476, 0, %v1562
        %v1565 = vcosq.f32.pop %v1563
        %v1566 = vsinq.f32.pop %v1563
        %vm1567 = vweird.f32 %v326
        %v1568 = vadd.s32 %v1564, 3
        %v1569 = vand.u32 %v1568, 3
        %vm1570 = vcmp.lt.s32.totalorder %v1569, 2
        %vm1571 = vcmp.eq.s32.totalorder %v1569, 0
        %v1572 = vxor.u32 %v1566, 2147483648
        %v1573 = vsel %vm1571, %v1565, %v1572
        %vm1574 = vcmp.eq.s32.totalorder %v1569, 2
        %v1575 = vxor.u32 %v1565, 2147483648
        %v1576 = vsel %vm1574, %v1575, %v1566
        %v1577 = vsel %vm1570, %v1573, %v1576
        %v1578 = vsel %vm1567, nan, %v1577
        %v1579 = vand.u32 2147483647, %v327
        %vm1580 = vcmp.le.f32.partialorder %v1579, 0.7853982
        %vm1581 = vcmp.lt.s32.totalorder %v327, 0
        %v1582 = vand.u32 %v327, 2139095040
        %v1583 = vshrl.u32 %v1582, 23
        %v1584 = vsub.s32 %v1583, 127
        %v1585 = vand.u32 2147483647, %v327
        %v1586 = vand.u32 %v1585, 8388607
        %v1587 = vor.u32 %v1586, 8388608
        %v1588 = vsub.s32 0, %v1587
        %v1589 = vadd.s32 %v1584, 1
        %vm1590 = vcmp.gt.s32.totalorder %v1589, 0
        %v1591 = vsel %vm1590, %v1589, 0
        %v1592 = vshrl.u32 %v1591, 5
        %v1593 = vand.u32 %v1591, 31
        %v1594 = vsub.s32 32, %v1593
        %v1595 = vshrl.u32 683565275, %v1594
        %v1596 = vshll.u32 683565275, %v1593
        %v1597 = vshrl.u32 2475754826, %v1594
        %v1598 = vor.u32 %v1596, %v1597
        %v1599 = vshll.u32 2475754826, %v1593
        %v1600 = vshrl.u32 2131351028, %v1594
        %v1601 = vor.u32 %v1599, %v1600
        %v1602 = vshll.u32 2131351028, %v1593
        %v1603 = vshrl.u32 2102212464, %v1594
        %v1604 = vor.u32 %v1602, %v1603
        %v1605 = vshll.u32 2102212464, %v1593
        %v1606 = vshrl.u32 920167782, %v1594
        %v1607 = vor.u32 %v1605, %v1606
        %v1608 = vshll.u32 920167782, %v1593
        %v1609 = vshrl.u32 1326507024, %v1594
        %v1610 = vor.u32 %v1608, %v1609
        %vm1611 = vcmp.lt.s32.totalorder %v1592, 1
        %vm1612 = vcmp.lt.s32.totalorder %v1592, 2
        %vm1613 = vcmp.lt.s32.totalorder %v1592, 3
        %vm1614 = vcmp.lt.s32.totalorder %v1592, 4
        %v1615 = vsel %vm1611, %v1595, %v1598
        %v1616 = vsel %vm1614, %v1604, 2102212464
        %v1617 = vsel %vm1613, %v1601, %v1616
        %v1618 = vsel %vm1612, %v1615, %v1617
        %v1619 = vsel %vm1611, %v1598, %v1601
        %v1620 = vsel %vm1614, %v1607, 920167782
        %v1621 = vsel %vm1613, %v1604, %v1620
        %v1622 = vsel %vm1612, %v1619, %v1621
        %v1623 = vsel %vm1611, %v1601, %v1604
        %v1624 = vsel %vm1614, %v1610, 1326507024
        %v1625 = vsel %vm1613, %v1607, %v1624
        %v1626 = vsel %vm1612, %v1623, %v1625
        %v1627 = vshll.u32 %v1587, 8
        %v1628 = vmul.u32.u64.compose %v1627, %v1626
        %v1629 = vextract.low.u32 %v1628
        %v1630 = vextract.high.u32 %v1628
        %v1631 = vmul.u32.u64.compose %v1627, %v1622
        %v1632 = vextract.low.u32 %v1631
        %v1633 = vextract.high.u32 %v1631
        %v1634 = vmul.u32 %v1627, %v1618
        %v1635 = vadd.s32 %v1630, %v1632
        %vm1636 = vc.u32 %v1630, %v1632
        %v1637 = vadd.s32 %v1633, 1
        %v1638 = vsel %vm1636, %v1637, %v1633
        %v1639 = vadd.s32 %v1634, %v1638
        %v1640 = vadd.s32 %v1639, 536870912
        %v1641 = vshrl.u32 %v1640, 30
        %v1642 = vshll.u32 %v1641, 30
        %v1643 = vsub.s32 %v1639, %v1642
        %vm1644 = vcmp.lt.s32.totalorder %v1643, 0
        %v1645 = vsub.s32 0, %v1643
        %v1646 = vsel %vm1644, %v1645, %v1643
        %v1647 = vclz %v1646
        %v1648 = vsub.s32 %v1647, 2
        %vm1649 = vcmp.gt.s32.totalorder 0, %v1648
        %v1650 = vsel %vm1649, 0, %v1648
        %v1651 = vsub.s32 32, %v1650
        %v1652 = vshll.u32 %v1643, %v1650
        %v1653 = vshrl.u32 %v1635, %v1651
        %v1654 = vor.u32 %v1652, %v1653
        %v1655 = vsub.s32 4294967266, %v1650
        %v1656 = vadd.s32 %v1655, 127
        %v1657 = vshll.u32 %v1656, 23
        %v1658 = vor.u32 4788187, %v1657
        %v1659 = vand.u32 2147483647, %v1658
        %v1661 = vcvt.s32.f32 %v1654
        %v1662 = vmul.f32 %v1661, %v1659
        %v1663 = vxor.u32 %v1662, 2147483648
        %v1664 = vsel %vm1581, %v1663, %v1662
        %v1665 = vsub.s32 4, %v1641
        %v1666 = vsel %vm1581, %v1665, %v1641
        %v1667 = vsel %vm1580, %v327, %v1664
        %v1668 = vsel %vm1580, 0, %v1666
        %v1669 = vcosq.f32.pop %v1667
        %v1670 = vsinq.f32.pop %v1667
        %vm1671 = vweird.f32 %v327
        %v1672 = vadd.s32 %v1668, 3
        %v1673 = vand.u32 %v1672, 3
        %vm1674 = vcmp.lt.s32.totalorder %v1673, 2
        %vm1675 = vcmp.eq.s32.totalorder %v1673, 0
        %v1676 = vxor.u32 %v1670, 2147483648
        %v1677 = vsel %vm1675, %v1669, %v1676
        %vm1678 = vcmp.eq.s32.totalorder %v1673, 2
        %v1679 = vxor.u32 %v1669, 2147483648
        %v1680 = vsel %vm1678, %v1679, %v1670
        %v1681 = vsel %vm1674, %v1677, %v1680
        %v1682 = vsel %vm1671, nan, %v1681
        %v1683 = vand.u32 2147483647, %v328
        %vm1684 = vcmp.le.f32.partialorder %v1683, 0.7853982
        %vm1685 = vcmp.lt.s32.totalorder %v328, 0
        %v1686 = vand.u32 %v328, 2139095040
        %v1687 = vshrl.u32 %v1686, 23
        %v1688 = vsub.s32 %v1687, 127
        %v1689 = vand.u32 2147483647, %v328
        %v1690 = vand.u32 %v1689, 8388607
        %v1691 = vor.u32 %v1690, 8388608
        %v1692 = vsub.s32 0, %v1691
        %v1693 = vadd.s32 %v1688, 1
        %vm1694 = vcmp.gt.s32.totalorder %v1693, 0
        %v1695 = vsel %vm1694, %v1693, 0
        %v1696 = vshrl.u32 %v1695, 5
        %v1697 = vand.u32 %v1695, 31
        %v1698 = vsub.s32 32, %v1697
        %v1699 = vshrl.u32 683565275, %v1698
        %v1700 = vshll.u32 683565275, %v1697
        %v1701 = vshrl.u32 2475754826, %v1698
        %v1702 = vor.u32 %v1700, %v1701
        %v1703 = vshll.u32 2475754826, %v1697
        %v1704 = vshrl.u32 2131351028, %v1698
        %v1705 = vor.u32 %v1703, %v1704
        %v1706 = vshll.u32 2131351028, %v1697
        %v1707 = vshrl.u32 2102212464, %v1698
        %v1708 = vor.u32 %v1706, %v1707
        %v1709 = vshll.u32 2102212464, %v1697
        %v1710 = vshrl.u32 920167782, %v1698
        %v1711 = vor.u32 %v1709, %v1710
        %v1712 = vshll.u32 920167782, %v1697
        %v1713 = vshrl.u32 1326507024, %v1698
        %v1714 = vor.u32 %v1712, %v1713
        %vm1715 = vcmp.lt.s32.totalorder %v1696, 1
        %vm1716 = vcmp.lt.s32.totalorder %v1696, 2
        %vm1717 = vcmp.lt.s32.totalorder %v1696, 3
        %vm1718 = vcmp.lt.s32.totalorder %v1696, 4
        %v1719 = vsel %vm1715, %v1699, %v1702
        %v1720 = vsel %vm1718, %v1708, 2102212464
        %v1721 = vsel %vm1717, %v1705, %v1720
        %v1722 = vsel %vm1716, %v1719, %v1721
        %v1723 = vsel %vm1715, %v1702, %v1705
        %v1724 = vsel %vm1718, %v1711, 920167782
        %v1725 = vsel %vm1717, %v1708, %v1724
        %v1726 = vsel %vm1716, %v1723, %v1725
        %v1727 = vsel %vm1715, %v1705, %v1708
        %v1728 = vsel %vm1718, %v1714, 1326507024
        %v1729 = vsel %vm1717, %v1711, %v1728
        %v1730 = vsel %vm1716, %v1727, %v1729
        %v1731 = vshll.u32 %v1691, 8
        %v1732 = vmul.u32.u64.compose %v1731, %v1730
        %v1733 = vextract.low.u32 %v1732
        %v1734 = vextract.high.u32 %v1732
        %v1735 = vmul.u32.u64.compose %v1731, %v1726
        %v1736 = vextract.low.u32 %v1735
        %v1737 = vextract.high.u32 %v1735
        %v1738 = vmul.u32 %v1731, %v1722
        %v1739 = vadd.s32 %v1734, %v1736
        %vm1740 = vc.u32 %v1734, %v1736
        %v1741 = vadd.s32 %v1737, 1
        %v1742 = vsel %vm1740, %v1741, %v1737
        %v1743 = vadd.s32 %v1738, %v1742
        %v1744 = vadd.s32 %v1743, 536870912
        %v1745 = vshrl.u32 %v1744, 30
        %v1746 = vshll.u32 %v1745, 30
        %v1747 = vsub.s32 %v1743, %v1746
        %vm1748 = vcmp.lt.s32.totalorder %v1747, 0
        %v1749 = vsub.s32 0, %v1747
        %v1750 = vsel %vm1748, %v1749, %v1747
        %v1751 = vclz %v1750
        %v1752 = vsub.s32 %v1751, 2
        %vm1753 = vcmp.gt.s32.totalorder 0, %v1752
        %v1754 = vsel %vm1753, 0, %v1752
        %v1755 = vsub.s32 32, %v1754
        %v1756 = vshll.u32 %v1747, %v1754
        %v1757 = vshrl.u32 %v1739, %v1755
        %v1758 = vor.u32 %v1756, %v1757
        %v1759 = vsub.s32 4294967266, %v1754
        %v1760 = vadd.s32 %v1759, 127
        %v1761 = vshll.u32 %v1760, 23
        %v1762 = vor.u32 4788187, %v1761
        %v1763 = vand.u32 2147483647, %v1762
        %v1765 = vcvt.s32.f32 %v1758
        %v1766 = vmul.f32 %v1765, %v1763
        %v1767 = vxor.u32 %v1766, 2147483648
        %v1768 = vsel %vm1685, %v1767, %v1766
        %v1769 = vsub.s32 4, %v1745
        %v1770 = vsel %vm1685, %v1769, %v1745
        %v1771 = vsel %vm1684, %v328, %v1768
        %v1772 = vsel %vm1684, 0, %v1770
        %v1773 = vcosq.f32.pop %v1771
        %v1774 = vsinq.f32.pop %v1771
        %vm1775 = vweird.f32 %v328
        %v1776 = vadd.s32 %v1772, 3
        %v1777 = vand.u32 %v1776, 3
        %vm1778 = vcmp.lt.s32.totalorder %v1777, 2
        %vm1779 = vcmp.eq.s32.totalorder %v1777, 0
        %v1780 = vxor.u32 %v1774, 2147483648
        %v1781 = vsel %vm1779, %v1773, %v1780
        %vm1782 = vcmp.eq.s32.totalorder %v1777, 2
        %v1783 = vxor.u32 %v1773, 2147483648
        %v1784 = vsel %vm1782, %v1783, %v1774
        %v1785 = vsel %vm1778, %v1781, %v1784
        %v1786 = vsel %vm1775, nan, %v1785
        %v1787 = vand.u32 2147483647, %v329
        %vm1788 = vcmp.le.f32.partialorder %v1787, 0.7853982
        %vm1789 = vcmp.lt.s32.totalorder %v329, 0
        %v1790 = vand.u32 %v329, 2139095040
        %v1791 = vshrl.u32 %v1790, 23
        %v1792 = vsub.s32 %v1791, 127
        %v1793 = vand.u32 2147483647, %v329
        %v1794 = vand.u32 %v1793, 8388607
        %v1795 = vor.u32 %v1794, 8388608
        %v1796 = vsub.s32 0, %v1795
        %v1797 = vadd.s32 %v1792, 1
        %vm1798 = vcmp.gt.s32.totalorder %v1797, 0
        %v1799 = vsel %vm1798, %v1797, 0
        %v1800 = vshrl.u32 %v1799, 5
        %v1801 = vand.u32 %v1799, 31
        %v1802 = vsub.s32 32, %v1801
        %v1803 = vshrl.u32 683565275, %v1802
        %v1804 = vshll.u32 683565275, %v1801
        %v1805 = vshrl.u32 2475754826, %v1802
        %v1806 = vor.u32 %v1804, %v1805
        %v1807 = vshll.u32 2475754826, %v1801
        %v1808 = vshrl.u32 2131351028, %v1802
        %v1809 = vor.u32 %v1807, %v1808
        %v1810 = vshll.u32 2131351028, %v1801
        %v1811 = vshrl.u32 2102212464, %v1802
        %v1812 = vor.u32 %v1810, %v1811
        %v1813 = vshll.u32 2102212464, %v1801
        %v1814 = vshrl.u32 920167782, %v1802
        %v1815 = vor.u32 %v1813, %v1814
        %v1816 = vshll.u32 920167782, %v1801
        %v1817 = vshrl.u32 1326507024, %v1802
        %v1818 = vor.u32 %v1816, %v1817
        %vm1819 = vcmp.lt.s32.totalorder %v1800, 1
        %vm1820 = vcmp.lt.s32.totalorder %v1800, 2
        %vm1821 = vcmp.lt.s32.totalorder %v1800, 3
        %vm1822 = vcmp.lt.s32.totalorder %v1800, 4
        %v1823 = vsel %vm1819, %v1803, %v1806
        %v1824 = vsel %vm1822, %v1812, 2102212464
        %v1825 = vsel %vm1821, %v1809, %v1824
        %v1826 = vsel %vm1820, %v1823, %v1825
        %v1827 = vsel %vm1819, %v1806, %v1809
        %v1828 = vsel %vm1822, %v1815, 920167782
        %v1829 = vsel %vm1821, %v1812, %v1828
        %v1830 = vsel %vm1820, %v1827, %v1829
        %v1831 = vsel %vm1819, %v1809, %v1812
        %v1832 = vsel %vm1822, %v1818, 1326507024
        %v1833 = vsel %vm1821, %v1815, %v1832
        %v1834 = vsel %vm1820, %v1831, %v1833
        %v1835 = vshll.u32 %v1795, 8
        %v1836 = vmul.u32.u64.compose %v1835, %v1834
        %v1837 = vextract.low.u32 %v1836
        %v1838 = vextract.high.u32 %v1836
        %v1839 = vmul.u32.u64.compose %v1835, %v1830
        %v1840 = vextract.low.u32 %v1839
        %v1841 = vextract.high.u32 %v1839
        %v1842 = vmul.u32 %v1835, %v1826
        %v1843 = vadd.s32 %v1838, %v1840
        %vm1844 = vc.u32 %v1838, %v1840
        %v1845 = vadd.s32 %v1841, 1
        %v1846 = vsel %vm1844, %v1845, %v1841
        %v1847 = vadd.s32 %v1842, %v1846
        %v1848 = vadd.s32 %v1847, 536870912
        %v1849 = vshrl.u32 %v1848, 30
        %v1850 = vshll.u32 %v1849, 30
        %v1851 = vsub.s32 %v1847, %v1850
        %vm1852 = vcmp.lt.s32.totalorder %v1851, 0
        %v1853 = vsub.s32 0, %v1851
        %v1854 = vsel %vm1852, %v1853, %v1851
        %v1855 = vclz %v1854
        %v1856 = vsub.s32 %v1855, 2
        %vm1857 = vcmp.gt.s32.totalorder 0, %v1856
        %v1858 = vsel %vm1857, 0, %v1856
        %v1859 = vsub.s32 32, %v1858
        %v1860 = vshll.u32 %v1851, %v1858
        %v1861 = vshrl.u32 %v1843, %v1859
        %v1862 = vor.u32 %v1860, %v1861
        %v1863 = vsub.s32 4294967266, %v1858
        %v1864 = vadd.s32 %v1863, 127
        %v1865 = vshll.u32 %v1864, 23
        %v1866 = vor.u32 4788187, %v1865
        %v1867 = vand.u32 2147483647, %v1866
        %v1869 = vcvt.s32.f32 %v1862
        %v1870 = vmul.f32 %v1869, %v1867
        %v1871 = vxor.u32 %v1870, 2147483648
        %v1872 = vsel %vm1789, %v1871, %v1870
        %v1873 = vsub.s32 4, %v1849
        %v1874 = vsel %vm1789, %v1873, %v1849
        %v1875 = vsel %vm1788, %v329, %v1872
        %v1876 = vsel %vm1788, 0, %v1874
        %v1877 = vcosq.f32.pop %v1875
        %v1878 = vsinq.f32.pop %v1875
        %vm1879 = vweird.f32 %v329
        %v1880 = vadd.s32 %v1876, 3
        %v1881 = vand.u32 %v1880, 3
        %vm1882 = vcmp.lt.s32.totalorder %v1881, 2
        %vm1883 = vcmp.eq.s32.totalorder %v1881, 0
        %v1884 = vxor.u32 %v1878, 2147483648
        %v1885 = vsel %vm1883, %v1877, %v1884
        %vm1886 = vcmp.eq.s32.totalorder %v1881, 2
        %v1887 = vxor.u32 %v1877, 2147483648
        %v1888 = vsel %vm1886, %v1887, %v1878
        %v1889 = vsel %vm1882, %v1885, %v1888
        %v1890 = vsel %vm1879, nan, %v1889
        %v1891 = vand.u32 2147483647, %v330
        %vm1892 = vcmp.le.f32.partialorder %v1891, 0.7853982
        %vm1893 = vcmp.lt.s32.totalorder %v330, 0
        %v1894 = vand.u32 %v330, 2139095040
        %v1895 = vshrl.u32 %v1894, 23
        %v1896 = vsub.s32 %v1895, 127
        %v1897 = vand.u32 2147483647, %v330
        %v1898 = vand.u32 %v1897, 8388607
        %v1899 = vor.u32 %v1898, 8388608
        %v1900 = vsub.s32 0, %v1899
        %v1901 = vadd.s32 %v1896, 1
        %vm1902 = vcmp.gt.s32.totalorder %v1901, 0
        %v1903 = vsel %vm1902, %v1901, 0
        %v1904 = vshrl.u32 %v1903, 5
        %v1905 = vand.u32 %v1903, 31
        %v1906 = vsub.s32 32, %v1905
        %v1907 = vshrl.u32 683565275, %v1906
        %v1908 = vshll.u32 683565275, %v1905
        %v1909 = vshrl.u32 2475754826, %v1906
        %v1910 = vor.u32 %v1908, %v1909
        %v1911 = vshll.u32 2475754826, %v1905
        %v1912 = vshrl.u32 2131351028, %v1906
        %v1913 = vor.u32 %v1911, %v1912
        %v1914 = vshll.u32 2131351028, %v1905
        %v1915 = vshrl.u32 2102212464, %v1906
        %v1916 = vor.u32 %v1914, %v1915
        %v1917 = vshll.u32 2102212464, %v1905
        %v1918 = vshrl.u32 920167782, %v1906
        %v1919 = vor.u32 %v1917, %v1918
        %v1920 = vshll.u32 920167782, %v1905
        %v1921 = vshrl.u32 1326507024, %v1906
        %v1922 = vor.u32 %v1920, %v1921
        %vm1923 = vcmp.lt.s32.totalorder %v1904, 1
        %vm1924 = vcmp.lt.s32.totalorder %v1904, 2
        %vm1925 = vcmp.lt.s32.totalorder %v1904, 3
        %vm1926 = vcmp.lt.s32.totalorder %v1904, 4
        %v1927 = vsel %vm1923, %v1907, %v1910
        %v1928 = vsel %vm1926, %v1916, 2102212464
        %v1929 = vsel %vm1925, %v1913, %v1928
        %v1930 = vsel %vm1924, %v1927, %v1929
        %v1931 = vsel %vm1923, %v1910, %v1913
        %v1932 = vsel %vm1926, %v1919, 920167782
        %v1933 = vsel %vm1925, %v1916, %v1932
        %v1934 = vsel %vm1924, %v1931, %v1933
        %v1935 = vsel %vm1923, %v1913, %v1916
        %v1936 = vsel %vm1926, %v1922, 1326507024
        %v1937 = vsel %vm1925, %v1919, %v1936
        %v1938 = vsel %vm1924, %v1935, %v1937
        %v1939 = vshll.u32 %v1899, 8
        %v1940 = vmul.u32.u64.compose %v1939, %v1938
        %v1941 = vextract.low.u32 %v1940
        %v1942 = vextract.high.u32 %v1940
        %v1943 = vmul.u32.u64.compose %v1939, %v1934
        %v1944 = vextract.low.u32 %v1943
        %v1945 = vextract.high.u32 %v1943
        %v1946 = vmul.u32 %v1939, %v1930
        %v1947 = vadd.s32 %v1942, %v1944
        %vm1948 = vc.u32 %v1942, %v1944
        %v1949 = vadd.s32 %v1945, 1
        %v1950 = vsel %vm1948, %v1949, %v1945
        %v1951 = vadd.s32 %v1946, %v1950
        %v1952 = vadd.s32 %v1951, 536870912
        %v1953 = vshrl.u32 %v1952, 30
        %v1954 = vshll.u32 %v1953, 30
        %v1955 = vsub.s32 %v1951, %v1954
        %vm1956 = vcmp.lt.s32.totalorder %v1955, 0
        %v1957 = vsub.s32 0, %v1955
        %v1958 = vsel %vm1956, %v1957, %v1955
        %v1959 = vclz %v1958
        %v1960 = vsub.s32 %v1959, 2
        %vm1961 = vcmp.gt.s32.totalorder 0, %v1960
        %v1962 = vsel %vm1961, 0, %v1960
        %v1963 = vsub.s32 32, %v1962
        %v1964 = vshll.u32 %v1955, %v1962
        %v1965 = vshrl.u32 %v1947, %v1963
        %v1966 = vor.u32 %v1964, %v1965
        %v1967 = vsub.s32 4294967266, %v1962
        %v1968 = vadd.s32 %v1967, 127
        %v1969 = vshll.u32 %v1968, 23
        %v1970 = vor.u32 4788187, %v1969
        %v1971 = vand.u32 2147483647, %v1970
        %v1973 = vcvt.s32.f32 %v1966
        %v1974 = vmul.f32 %v1973, %v1971
        %v1975 = vxor.u32 %v1974, 2147483648
        %v1976 = vsel %vm1893, %v1975, %v1974
        %v1977 = vsub.s32 4, %v1953
        %v1978 = vsel %vm1893, %v1977, %v1953
        %v1979 = vsel %vm1892, %v330, %v1976
        %v1980 = vsel %vm1892, 0, %v1978
        %v1981 = vcosq.f32.pop %v1979
        %v1982 = vsinq.f32.pop %v1979
        %vm1983 = vweird.f32 %v330
        %v1984 = vadd.s32 %v1980, 3
        %v1985 = vand.u32 %v1984, 3
        %vm1986 = vcmp.lt.s32.totalorder %v1985, 2
        %vm1987 = vcmp.eq.s32.totalorder %v1985, 0
        %v1988 = vxor.u32 %v1982, 2147483648
        %v1989 = vsel %vm1987, %v1981, %v1988
        %vm1990 = vcmp.eq.s32.totalorder %v1985, 2
        %v1991 = vxor.u32 %v1981, 2147483648
        %v1992 = vsel %vm1990, %v1991, %v1982
        %v1993 = vsel %vm1986, %v1989, %v1992
        %v1994 = vsel %vm1983, nan, %v1993
        %v1995 = vld [vmem:[#allocation2] sm:$0xff]
        %v1996 = vld [vmem:[#allocation2 + $0x8] sm:$0xff]
        %v1997 = vld [vmem:[#allocation2 + $0x10] sm:$0xff]
        %v1998 = vld [vmem:[#allocation2 + $0x18] sm:$0xff]
        %v1999 = vld [vmem:[#allocation2 + $0x20] sm:$0xff]
        %v2000 = vld [vmem:[#allocation2 + $0x28] sm:$0xff]
        %v2001 = vld [vmem:[#allocation2 + $0x30] sm:$0xff]
        %v2002 = vld [vmem:[#allocation2 + $0x38] sm:$0xff]
        %v2003 = vld [vmem:[#allocation2 + $0x40] sm:$0xff]
        %v2004 = vld [vmem:[#allocation2 + $0x48] sm:$0xff]
        %v2005 = vld [vmem:[#allocation2 + $0x50] sm:$0xff]
        %v2006 = vld [vmem:[#allocation2 + $0x58] sm:$0xff]
        %v2007 = vld [vmem:[#allocation2 + $0x60] sm:$0xff]
        %v2008 = vld [vmem:[#allocation2 + $0x68] sm:$0xff]
        %v2009 = vld [vmem:[#allocation2 + $0x70] sm:$0xff]
        %v2010 = vld [vmem:[#allocation2 + $0x78] sm:$0xff]
        %v2011 = vld [vmem:[#allocation2 + $0x80] sm:$0xff]
        %2012 = vmatprep.subr.mxu0 0.0
        %2013 = vmatpush1.msra.mxu0 %v1996
        %2014 = vmatprep.subr.mxu0 0.0
        %2015 = vmatpush1.msra.mxu0 %v1997
        %2016 = vmatprep.subr.mxu0 0.0
        %2017 = vmatpush1.msra.mxu0 %v1998
        %2018 = vmatprep.subr.mxu0 0.0
        %2019 = vmatpush1.msra.mxu0 %v1999
        %2020 = vmatprep.subr.mxu0 0.0
        %2021 = vmatpush1.msra.mxu0 %v2000
        %2022 = vmatprep.subr.mxu0 0.0
        %2023 = vmatpush1.msra.mxu0 %v2001
        %2024 = vmatprep.subr.mxu0 0.0
        %2025 = vmatpush1.msra.mxu0 %v2002
        %2026 = vmatprep.subr.mxu0 0.0
        %2027 = vmatpush1.msra.mxu0 %v2003
        %2028 = vmatprep.subr.mxu0 0.0
        %2029 = vmatpush1.msra.mxu0 %v2004
        %2030 = vmatprep.subr.mxu0 0.0
        %2031 = vmatpush1.msra.mxu0 %v2005
        %2032 = vmatprep.subr.mxu0 0.0
        %2033 = vmatpush1.msra.mxu0 %v2006
        %2034 = vmatprep.subr.mxu0 0.0
        %2035 = vmatpush1.msra.mxu0 %v2007
        %2036 = vmatprep.subr.mxu0 0.0
        %2037 = vmatpush1.msra.mxu0 %v2008
        %2038 = vmatprep.subr.mxu0 0.0
        %2039 = vmatpush1.msra.mxu0 %v2009
        %2040 = vmatprep.subr.mxu0 0.0
        %2041 = vmatpush1.msra.mxu0 %v2010
        %2042 = vmatprep.subr.mxu0 0.0
        %2043 = vmatpush1.msra.mxu0 %v2011
        %2044 = vmatprep.subr.mxu0 0.0
        %2045 = vmatpush1.msra.mxu0 0.0
        %2046 = vmatprep.subr.mxu0 0.0
        %2047 = vmatpush1.msra.mxu0 0.0
        %2048 = vmatprep.subr.mxu0 0.0
        %2049 = vmatpush1.msra.mxu0 0.0
        %2050 = vmatprep.subr.mxu0 0.0
        %2051 = vmatpush1.msra.mxu0 0.0
        %2052 = vmatprep.subr.mxu0 0.0
        %2053 = vmatpush1.msra.mxu0 0.0
        %2054 = vmatprep.subr.mxu0 0.0
        %2055 = vmatpush1.msra.mxu0 0.0
        %2056 = vmatprep.subr.mxu0 0.0
        %2057 = vmatpush1.msra.mxu0 0.0
        %2058 = vmatprep.subr.mxu0 0.0
        %2059 = vmatpush1.msra.mxu0 0.0
        %2060 = vmatprep.subr.mxu0 0.0
        %2061 = vmatpush1.msra.mxu0 0.0
        %2062 = vmatprep.subr.mxu0 0.0
        %2063 = vmatpush1.msra.mxu0 0.0
        %2064 = vmatprep.subr.mxu0 0.0
        %2065 = vmatpush1.msra.mxu0 0.0
        %2066 = vmatprep.subr.mxu0 0.0
        %2067 = vmatpush1.msra.mxu0 0.0
        %2068 = vmatprep.subr.mxu0 0.0
        %2069 = vmatpush1.msra.mxu0 0.0
        %2070 = vmatprep.subr.mxu0 0.0
        %2071 = vmatpush1.msra.mxu0 0.0
        %2072 = vmatprep.subr.mxu0 0.0
        %2073 = vmatpush1.msra.mxu0 0.0
        %2074 = vmatprep.subr.mxu0 0.0
        %2075 = vmatpush1.msra.mxu0 0.0
        %2076 = vmatprep.mubr.f32.mxu0 0.0
        %2077 = vmatmul.mubr.f32.gmra.mrb[0].mxu0 %v434
        %v2078 = vpop.f32.mrb[0].mxu0
        %v2079 = vadd.f32 0.0, %v2078
        %v2080 = vpop.f32.mrb[0].mxu0
        %2081 = vmatprep.mubr.f32.mxu0 0.0
        %2082 = vmatmul.mubr.f32.gmra.mrb[0].mxu0 %v538
        %v2083 = vpop.f32.mrb[0].mxu0
        %v2084 = vadd.f32 0.0, %v2083
        %v2085 = vpop.f32.mrb[0].mxu0
        %2086 = vmatprep.mubr.f32.mxu0 0.0
        %2087 = vmatmul.mubr.f32.gmra.mrb[0].mxu0 %v642
        %v2088 = vpop.f32.mrb[0].mxu0
        %v2089 = vadd.f32 0.0, %v2088
        %v2090 = vpop.f32.mrb[0].mxu0
        %2091 = vmatprep.mubr.f32.mxu0 0.0
        %2092 = vmatmul.mubr.f32.gmra.mrb[0].mxu0 %v746
        %v2093 = vpop.f32.mrb[0].mxu0
        %v2094 = vadd.f32 0.0, %v2093
        %v2095 = vpop.f32.mrb[0].mxu0
        %2096 = vmatprep.mubr.f32.mxu0 0.0
        %2097 = vmatmul.mubr.f32.gmra.mrb[0].mxu0 %v850
        %v2098 = vpop.f32.mrb[0].mxu0
        %v2099 = vadd.f32 0.0, %v2098
        %v2100 = vpop.f32.mrb[0].mxu0
        %2101 = vmatprep.mubr.f32.mxu0 0.0
        %2102 = vmatmul.mubr.f32.gmra.mrb[0].mxu0 %v954
        %v2103 = vpop.f32.mrb[0].mxu0
        %v2104 = vadd.f32 0.0, %v2103
        %v2105 = vpop.f32.mrb[0].mxu0
        %2106 = vmatprep.mubr.f32.mxu0 0.0
        %2107 = vmatmul.mubr.f32.gmra.mrb[0].mxu0 %v1058
        %v2108 = vpop.f32.mrb[0].mxu0
        %v2109 = vadd.f32 0.0, %v2108
        %v2110 = vpop.f32.mrb[0].mxu0
        %2111 = vmatprep.mubr.f32.mxu0 0.0
        %2112 = vmatmul.mubr.f32.gmra.mrb[0].mxu0 %v1162
        %v2113 = vpop.f32.mrb[0].mxu0
        %v2114 = vadd.f32 0.0, %v2113
        %v2115 = vpop.f32.mrb[0].mxu0
        %2116 = vmatprep.mubr.f32.mxu0 0.0
        %2117 = vmatmul.mubr.f32.gmra.mrb[0].mxu0 %v1266
        %v2118 = vpop.f32.mrb[0].mxu0
        %v2119 = vadd.f32 0.0, %v2118
        %v2120 = vpop.f32.mrb[0].mxu0
        %2121 = vmatprep.mubr.f32.mxu0 0.0
        %2122 = vmatmul.mubr.f32.gmra.mrb[0].mxu0 %v1370
        %v2123 = vpop.f32.mrb[0].mxu0
        %v2124 = vadd.f32 0.0, %v2123
        %v2125 = vpop.f32.mrb[0].mxu0
        %2126 = vmatprep.mubr.f32.mxu0 0.0
        %2127 = vmatmul.mubr.f32.gmra.mrb[0].mxu0 %v1474
        %v2128 = vpop.f32.mrb[0].mxu0
        %v2129 = vadd.f32 0.0, %v2128
        %v2130 = vpop.f32.mrb[0].mxu0
        %2131 = vmatprep.mubr.f32.mxu0 0.0
        %2132 = vmatmul.mubr.f32.gmra.mrb[0].mxu0 %v1578
        %v2133 = vpop.f32.mrb[0].mxu0
        %v2134 = vadd.f32 0.0, %v2133
        %v2135 = vpop.f32.mrb[0].mxu0
        %2136 = vmatprep.mubr.f32.mxu0 0.0
        %2137 = vmatmul.mubr.f32.gmra.mrb[0].mxu0 %v1682
        %v2138 = vpop.f32.mrb[0].mxu0
        %v2139 = vadd.f32 0.0, %v2138
        %v2140 = vpop.f32.mrb[0].mxu0
        %2141 = vmatprep.mubr.f32.mxu0 0.0
        %2142 = vmatmul.mubr.f32.gmra.mrb[0].mxu0 %v1786
        %v2143 = vpop.f32.mrb[0].mxu0
        %v2144 = vadd.f32 0.0, %v2143
        %v2145 = vpop.f32.mrb[0].mxu0
        %2146 = vmatprep.mubr.f32.mxu0 0.0
        %2147 = vmatmul.mubr.f32.gmra.mrb[0].mxu0 %v1890
        %v2148 = vpop.f32.mrb[0].mxu0
        %v2149 = vadd.f32 0.0, %v2148
        %v2150 = vpop.f32.mrb[0].mxu0
        %2151 = vmatprep.mubr.f32.mxu0 0.0
        %2152 = vmatmul.mubr.f32.gmra.mrb[0].mxu0 %v1994
        %v2153 = vpop.f32.mrb[0].mxu0
        %v2154 = vadd.f32 0.0, %v2153
        %v2155 = vpop.f32.mrb[0].mxu0
        %2156 = vdwg.mxu0
        %vm2157 = vcmask 64512
        %v2158 = vsel %vm2157, %v195, 0
        %v2160 = vsel %vm2157, %v196, 0
        %v2162 = vsel %vm2157, %v197, 0
        %v2164 = vsel %vm2157, %v198, 0
        %v2166 = vsel %vm2157, %v199, 0
        %v2168 = vsel %vm2157, %v200, 0
        %v2170 = vsel %vm2157, %v201, 0
        %v2172 = vsel %vm2157, %v202, 0
        %v2174 = vsel %vm2157, %v203, 0
        %v2176 = vsel %vm2157, %v204, 0
        %v2178 = vsel %vm2157, %v205, 0
        %v2180 = vsel %vm2157, %v206, 0
        %v2182 = vsel %vm2157, %v207, 0
        %v2184 = vsel %vm2157, %v208, 0
        %v2186 = vsel %vm2157, %v209, 0
        %v2188 = vsel %vm2157, %v210, 0
        %2190 = vmatprep.subr.mxu0 0.0
        %2191 = vmatpush1.msra.mxu0 %v1995
        %2192 = vmatprep.subr.mxu0 0.0
        %2193 = vmatpush1.msra.mxu0 0.0
        %2194 = vmatprep.subr.mxu0 0.0
        %2195 = vmatpush1.msra.mxu0 0.0
        %2196 = vmatprep.subr.mxu0 0.0
        %2197 = vmatpush1.msra.mxu0 0.0
        %2198 = vmatprep.subr.mxu0 0.0
        %2199 = vmatpush1.msra.mxu0 0.0
        %2200 = vmatprep.subr.mxu0 0.0
        %2201 = vmatpush1.msra.mxu0 0.0
        %2202 = vmatprep.subr.mxu0 0.0
        %2203 = vmatpush1.msra.mxu0 0.0
        %2204 = vmatprep.subr.mxu0 0.0
        %2205 = vmatpush1.msra.mxu0 0.0
        %2206 = vmatprep.subr.mxu0 0.0
        %2207 = vmatpush1.msra.mxu0 0.0
        %2208 = vmatprep.subr.mxu0 0.0
        %2209 = vmatpush1.msra.mxu0 0.0
        %2210 = vmatprep.subr.mxu0 0.0
        %2211 = vmatpush1.msra.mxu0 0.0
        %2212 = vmatprep.subr.mxu0 0.0
        %2213 = vmatpush1.msra.mxu0 0.0
        %2214 = vmatprep.subr.mxu0 0.0
        %2215 = vmatpush1.msra.mxu0 0.0
        %2216 = vmatprep.subr.mxu0 0.0
        %2217 = vmatpush1.msra.mxu0 0.0
        %2218 = vmatprep.subr.mxu0 0.0
        %2219 = vmatpush1.msra.mxu0 0.0
        %2220 = vmatprep.subr.mxu0 0.0
        %2221 = vmatpush1.msra.mxu0 0.0
        %2222 = vmatprep.subr.mxu0 0.0
        %2223 = vmatpush1.msra.mxu0 0.0
        %2224 = vmatprep.subr.mxu0 0.0
        %2225 = vmatpush1.msra.mxu0 0.0
        %2226 = vmatprep.subr.mxu0 0.0
        %2227 = vmatpush1.msra.mxu0 0.0
        %2228 = vmatprep.subr.mxu0 0.0
        %2229 = vmatpush1.msra.mxu0 0.0
        %2230 = vmatprep.subr.mxu0 0.0
        %2231 = vmatpush1.msra.mxu0 0.0
        %2232 = vmatprep.subr.mxu0 0.0
        %2233 = vmatpush1.msra.mxu0 0.0
        %2234 = vmatprep.subr.mxu0 0.0
        %2235 = vmatpush1.msra.mxu0 0.0
        %2236 = vmatprep.subr.mxu0 0.0
        %2237 = vmatpush1.msra.mxu0 0.0
        %2238 = vmatprep.subr.mxu0 0.0
        %2239 = vmatpush1.msra.mxu0 0.0
        %2240 = vmatprep.subr.mxu0 0.0
        %2241 = vmatpush1.msra.mxu0 0.0
        %2242 = vmatprep.subr.mxu0 0.0
        %2243 = vmatpush1.msra.mxu0 0.0
        %2244 = vmatprep.subr.mxu0 0.0
        %2245 = vmatpush1.msra.mxu0 0.0
        %2246 = vmatprep.subr.mxu0 0.0
        %2247 = vmatpush1.msra.mxu0 0.0
        %2248 = vmatprep.subr.mxu0 0.0
        %2249 = vmatpush1.msra.mxu0 0.0
        %2250 = vmatprep.subr.mxu0 0.0
        %2251 = vmatpush1.msra.mxu0 0.0
        %2252 = vmatprep.subr.mxu0 0.0
        %2253 = vmatpush1.msra.mxu0 0.0
        %2254 = vmatprep.mubr.f32.mxu0 0.0
        %2255 = vmatmul.mubr.f32.gmra.mrb[0].mxu0 %v2158
        %v2256 = vpop.f32.mrb[0].mxu0
        %v2257 = vadd.f32 %v2079, %v2256
        %v2258 = vpop.f32.mrb[0].mxu0
        %2259 = vmatprep.mubr.f32.mxu0 0.0
        %2260 = vmatmul.mubr.f32.gmra.mrb[0].mxu0 %v2160
        %v2261 = vpop.f32.mrb[0].mxu0
        %v2262 = vadd.f32 %v2084, %v2261
        %v2263 = vpop.f32.mrb[0].mxu0
        %2264 = vmatprep.mubr.f32.mxu0 0.0
        %2265 = vmatmul.mubr.f32.gmra.mrb[0].mxu0 %v2162
        %v2266 = vpop.f32.mrb[0].mxu0
        %v2267 = vadd.f32 %v2089, %v2266
        %v2268 = vpop.f32.mrb[0].mxu0
        %2269 = vmatprep.mubr.f32.mxu0 0.0
        %2270 = vmatmul.mubr.f32.gmra.mrb[0].mxu0 %v2164
        %v2271 = vpop.f32.mrb[0].mxu0
        %v2272 = vadd.f32 %v2094, %v2271
        %v2273 = vpop.f32.mrb[0].mxu0
        %2274 = vmatprep.mubr.f32.mxu0 0.0
        %2275 = vmatmul.mubr.f32.gmra.mrb[0].mxu0 %v2166
        %v2276 = vpop.f32.mrb[0].mxu0
        %v2277 = vadd.f32 %v2099, %v2276
        %v2278 = vpop.f32.mrb[0].mxu0
        %2279 = vmatprep.mubr.f32.mxu0 0.0
        %2280 = vmatmul.mubr.f32.gmra.mrb[0].mxu0 %v2168
        %v2281 = vpop.f32.mrb[0].mxu0
        %v2282 = vadd.f32 %v2104, %v2281
        %v2283 = vpop.f32.mrb[0].mxu0
        %2284 = vmatprep.mubr.f32.mxu0 0.0
        %2285 = vmatmul.mubr.f32.gmra.mrb[0].mxu0 %v2170
        %v2286 = vpop.f32.mrb[0].mxu0
        %v2287 = vadd.f32 %v2109, %v2286
        %v2288 = vpop.f32.mrb[0].mxu0
        %2289 = vmatprep.mubr.f32.mxu0 0.0
        %2290 = vmatmul.mubr.f32.gmra.mrb[0].mxu0 %v2172
        %v2291 = vpop.f32.mrb[0].mxu0
        %v2292 = vadd.f32 %v2114, %v2291
        %v2293 = vpop.f32.mrb[0].mxu0
        %2294 = vmatprep.mubr.f32.mxu0 0.0
        %2295 = vmatmul.mubr.f32.gmra.mrb[0].mxu0 %v2174
        %v2296 = vpop.f32.mrb[0].mxu0
        %v2297 = vadd.f32 %v2119, %v2296
        %v2298 = vpop.f32.mrb[0].mxu0
        %2299 = vmatprep.mubr.f32.mxu0 0.0
        %2300 = vmatmul.mubr.f32.gmra.mrb[0].mxu0 %v2176
        %v2301 = vpop.f32.mrb[0].mxu0
        %v2302 = vadd.f32 %v2124, %v2301
        %v2303 = vpop.f32.mrb[0].mxu0
        %2304 = vmatprep.mubr.f32.mxu0 0.0
        %2305 = vmatmul.mubr.f32.gmra.mrb[0].mxu0 %v2178
        %v2306 = vpop.f32.mrb[0].mxu0
        %v2307 = vadd.f32 %v2129, %v2306
        %v2308 = vpop.f32.mrb[0].mxu0
        %2309 = vmatprep.mubr.f32.mxu0 0.0
        %2310 = vmatmul.mubr.f32.gmra.mrb[0].mxu0 %v2180
        %v2311 = vpop.f32.mrb[0].mxu0
        %v2312 = vadd.f32 %v2134, %v2311
        %v2313 = vpop.f32.mrb[0].mxu0
        %2314 = vmatprep.mubr.f32.mxu0 0.0
        %2315 = vmatmul.mubr.f32.gmra.mrb[0].mxu0 %v2182
        %v2316 = vpop.f32.mrb[0].mxu0
        %v2317 = vadd.f32 %v2139, %v2316
        %v2318 = vpop.f32.mrb[0].mxu0
        %2319 = vmatprep.mubr.f32.mxu0 0.0
        %2320 = vmatmul.mubr.f32.gmra.mrb[0].mxu0 %v2184
        %v2321 = vpop.f32.mrb[0].mxu0
        %v2322 = vadd.f32 %v2144, %v2321
        %v2323 = vpop.f32.mrb[0].mxu0
        %2324 = vmatprep.mubr.f32.mxu0 0.0
        %2325 = vmatmul.mubr.f32.gmra.mrb[0].mxu0 %v2186
        %v2326 = vpop.f32.mrb[0].mxu0
        %v2327 = vadd.f32 %v2149, %v2326
        %v2328 = vpop.f32.mrb[0].mxu0
        %2329 = vmatprep.mubr.f32.mxu0 0.0
        %2330 = vmatmul.mubr.f32.gmra.mrb[0].mxu0 %v2188
        %v2331 = vpop.f32.mrb[0].mxu0
        %v2332 = vadd.f32 %v2154, %v2331
        %v2333 = vpop.f32.mrb[0].mxu0
        %2334 = vdwg.mxu0
        %v2335 = vlaneseq
        %v2336 = vshrl.u32 %v2335, 7
        %v2337 = vsub.s32 0, %v2336
        %v2338 = vrot.slane %v191, %v2337
        %v2339 = vadd.f32 %v2257, %v2338
        %v2340 = vadd.f32 %v2262, %v2338
        %v2341 = vadd.f32 %v2267, %v2338
        %v2342 = vadd.f32 %v2272, %v2338
        %v2343 = vadd.f32 %v2277, %v2338
        %v2344 = vadd.f32 %v2282, %v2338
        %v2345 = vadd.f32 %v2287, %v2338
        %v2346 = vadd.f32 %v2292, %v2338
        %v2347 = vadd.f32 %v2297, %v2338
        %v2348 = vadd.f32 %v2302, %v2338
        %v2349 = vadd.f32 %v2307, %v2338
        %v2350 = vadd.f32 %v2312, %v2338
        %v2351 = vadd.f32 %v2317, %v2338
        %v2352 = vadd.f32 %v2322, %v2338
        %v2353 = vadd.f32 %v2327, %v2338
        %v2354 = vadd.f32 %v2332, %v2338
        %v2355 = vxor.u32 %v2339, 2147483648
        %v2356 = vxor.u32 %v2340, 2147483648
        %v2357 = vxor.u32 %v2341, 2147483648
        %v2358 = vxor.u32 %v2342, 2147483648
        %v2359 = vxor.u32 %v2343, 2147483648
        %v2360 = vxor.u32 %v2344, 2147483648
        %v2361 = vxor.u32 %v2345, 2147483648
        %v2362 = vxor.u32 %v2346, 2147483648
        %v2363 = vxor.u32 %v2347, 2147483648
        %v2364 = vxor.u32 %v2348, 2147483648
        %v2365 = vxor.u32 %v2349, 2147483648
        %v2366 = vxor.u32 %v2350, 2147483648
        %v2367 = vxor.u32 %v2351, 2147483648
        %v2368 = vxor.u32 %v2352, 2147483648
        %v2369 = vxor.u32 %v2353, 2147483648
        %v2370 = vxor.u32 %v2354, 2147483648
        %v2371 = vmul.f32 %v2355, 1.442695
        %v2372 = vpow.pop %v2371
        %v2373 = vmul.f32 %v2356, 1.442695
        %v2374 = vpow.pop %v2373
        %v2375 = vmul.f32 %v2357, 1.442695
        %v2376 = vpow.pop %v2375
        %v2377 = vmul.f32 %v2358, 1.442695
        %v2378 = vpow.pop %v2377
        %v2379 = vmul.f32 %v2359, 1.442695
        %v2380 = vpow.pop %v2379
        %v2381 = vmul.f32 %v2360, 1.442695
        %v2382 = vpow.pop %v2381
        %v2383 = vmul.f32 %v2361, 1.442695
        %v2384 = vpow.pop %v2383
        %v2385 = vmul.f32 %v2362, 1.442695
        %v2386 = vpow.pop %v2385
        %v2387 = vmul.f32 %v2363, 1.442695
        %v2388 = vpow.pop %v2387
        %v2389 = vmul.f32 %v2364, 1.442695
        %v2390 = vpow.pop %v2389
        %v2391 = vmul.f32 %v2365, 1.442695
        %v2392 = vpow.pop %v2391
        %v2393 = vmul.f32 %v2366, 1.442695
        %v2394 = vpow.pop %v2393
        %v2395 = vmul.f32 %v2367, 1.442695
        %v2396 = vpow.pop %v2395
        %v2397 = vmul.f32 %v2368, 1.442695
        %v2398 = vpow.pop %v2397
        %v2399 = vmul.f32 %v2369, 1.442695
        %v2400 = vpow.pop %v2399
        %v2401 = vmul.f32 %v2370, 1.442695
        %v2402 = vpow.pop %v2401
        %v2403 = vadd.f32 %v2372, 1.0
        %v2404 = vadd.f32 %v2374, 1.0
        %v2405 = vadd.f32 %v2376, 1.0
        %v2406 = vadd.f32 %v2378, 1.0
        %v2407 = vadd.f32 %v2380, 1.0
        %v2408 = vadd.f32 %v2382, 1.0
        %v2409 = vadd.f32 %v2384, 1.0
        %v2410 = vadd.f32 %v2386, 1.0
        %v2411 = vadd.f32 %v2388, 1.0
        %v2412 = vadd.f32 %v2390, 1.0
        %v2413 = vadd.f32 %v2392, 1.0
        %v2414 = vadd.f32 %v2394, 1.0
        %v2415 = vadd.f32 %v2396, 1.0
        %v2416 = vadd.f32 %v2398, 1.0
        %v2417 = vadd.f32 %v2400, 1.0
        %v2418 = vadd.f32 %v2402, 1.0
        %v2419 = vrcp.pop %v2403
        %v2420 = vmul.f32 1.0, %v2419
        %v2421 = vrcp.pop %v2404
        %v2422 = vmul.f32 1.0, %v2421
        %v2423 = vrcp.pop %v2405
        %v2424 = vmul.f32 1.0, %v2423
        %v2425 = vrcp.pop %v2406
        %v2426 = vmul.f32 1.0, %v2425
        %v2427 = vrcp.pop %v2407
        %v2428 = vmul.f32 1.0, %v2427
        %v2429 = vrcp.pop %v2408
        %v2430 = vmul.f32 1.0, %v2429
        %v2431 = vrcp.pop %v2409
        %v2432 = vmul.f32 1.0, %v2431
        %v2433 = vrcp.pop %v2410
        %v2434 = vmul.f32 1.0, %v2433
        %v2435 = vrcp.pop %v2411
        %v2436 = vmul.f32 1.0, %v2435
        %v2437 = vrcp.pop %v2412
        %v2438 = vmul.f32 1.0, %v2437
        %v2439 = vrcp.pop %v2413
        %v2440 = vmul.f32 1.0, %v2439
        %v2441 = vrcp.pop %v2414
        %v2442 = vmul.f32 1.0, %v2441
        %v2443 = vrcp.pop %v2415
        %v2444 = vmul.f32 1.0, %v2443
        %v2445 = vrcp.pop %v2416
        %v2446 = vmul.f32 1.0, %v2445
        %v2447 = vrcp.pop %v2417
        %v2448 = vmul.f32 1.0, %v2447
        %v2449 = vrcp.pop %v2418
        %v2450 = vmul.f32 1.0, %v2449
        %v2451 = vmul.f32 %v2339, %v2420
        %v2452 = vmul.f32 %v2340, %v2422
        %v2453 = vmul.f32 %v2341, %v2424
        %v2454 = vmul.f32 %v2342, %v2426
        %v2455 = vmul.f32 %v2343, %v2428
        %v2456 = vmul.f32 %v2344, %v2430
        %v2457 = vmul.f32 %v2345, %v2432
        %v2458 = vmul.f32 %v2346, %v2434
        %v2459 = vmul.f32 %v2347, %v2436
        %v2460 = vmul.f32 %v2348, %v2438
        %v2461 = vmul.f32 %v2349, %v2440
        %v2462 = vmul.f32 %v2350, %v2442
        %v2463 = vmul.f32 %v2351, %v2444
        %v2464 = vmul.f32 %v2352, %v2446
        %v2465 = vmul.f32 %v2353, %v2448
        %v2466 = vmul.f32 %v2354, %v2450
        %v2467 = vld [vmem:[#allocation2 + $0x88] sm:$0xff]
        %v2468 = vld [vmem:[#allocation2 + $0x90] sm:$0xff]
        %v2469 = vld [vmem:[#allocation2 + $0x98] sm:$0xff]
        %v2470 = vld [vmem:[#allocation2 + $0xa0] sm:$0xff]
        %v2471 = vld [vmem:[#allocation2 + $0xa8] sm:$0xff]
        %v2472 = vld [vmem:[#allocation2 + $0xb0] sm:$0xff]
        %v2473 = vld [vmem:[#allocation2 + $0xb8] sm:$0xff]
        %v2474 = vld [vmem:[#allocation2 + $0xc0] sm:$0xff]
        %v2475 = vld [vmem:[#allocation2 + $0xc8] sm:$0xff]
        %v2476 = vld [vmem:[#allocation2 + $0xd0] sm:$0xff]
        %v2477 = vld [vmem:[#allocation2 + $0xd8] sm:$0xff]
        %v2478 = vld [vmem:[#allocation2 + $0xe0] sm:$0xff]
        %v2479 = vld [vmem:[#allocation2 + $0xe8] sm:$0xff]
        %v2480 = vld [vmem:[#allocation2 + $0xf0] sm:$0xff]
        %v2481 = vld [vmem:[#allocation2 + $0xf8] sm:$0xff]
        %v2482 = vld [vmem:[#allocation2 + $0x100] sm:$0xff]
        %v2483 = vlaneseq
        %v2484 = vshrl.u32 %v2483, 7
        %v2485 = vsub.s32 0, %v2484
        %v2486 = vrot.slane %v192, %v2485
        %2487 = vmatprep.subr.mxu0 0.0
        %2488 = vmatpush1.msra.mxu0 %v2467
        %2489 = vmatprep.subr.mxu0 0.0
        %2490 = vmatpush1.msra.mxu0 %v2468
        %2491 = vmatprep.subr.mxu0 0.0
        %2492 = vmatpush1.msra.mxu0 %v2469
        %2493 = vmatprep.subr.mxu0 0.0
        %2494 = vmatpush1.msra.mxu0 %v2470
        %2495 = vmatprep.subr.mxu0 0.0
        %2496 = vmatpush1.msra.mxu0 %v2471
        %2497 = vmatprep.subr.mxu0 0.0
        %2498 = vmatpush1.msra.mxu0 %v2472
        %2499 = vmatprep.subr.mxu0 0.0
        %2500 = vmatpush1.msra.mxu0 %v2473
        %2501 = vmatprep.subr.mxu0 0.0
        %2502 = vmatpush1.msra.mxu0 %v2474
        %2503 = vmatprep.subr.mxu0 0.0
        %2504 = vmatpush1.msra.mxu0 %v2475
        %2505 = vmatprep.subr.mxu0 0.0
        %2506 = vmatpush1.msra.mxu0 %v2476
        %2507 = vmatprep.subr.mxu0 0.0
        %2508 = vmatpush1.msra.mxu0 %v2477
        %2509 = vmatprep.subr.mxu0 0.0
        %2510 = vmatpush1.msra.mxu0 %v2478
        %2511 = vmatprep.subr.mxu0 0.0
        %2512 = vmatpush1.msra.mxu0 %v2479
        %2513 = vmatprep.subr.mxu0 0.0
        %2514 = vmatpush1.msra.mxu0 %v2480
        %2515 = vmatprep.subr.mxu0 0.0
        %2516 = vmatpush1.msra.mxu0 %v2481
        %2517 = vmatprep.subr.mxu0 0.0
        %2518 = vmatpush1.msra.mxu0 %v2482
        %2519 = vmatprep.subr.mxu0 0.0
        %2520 = vmatpush1.msra.mxu0 0.0
        %2521 = vmatprep.subr.mxu0 0.0
        %2522 = vmatpush1.msra.mxu0 0.0
        %2523 = vmatprep.subr.mxu0 0.0
        %2524 = vmatpush1.msra.mxu0 0.0
        %2525 = vmatprep.subr.mxu0 0.0
        %2526 = vmatpush1.msra.mxu0 0.0
        %2527 = vmatprep.subr.mxu0 0.0
        %2528 = vmatpush1.msra.mxu0 0.0
        %2529 = vmatprep.subr.mxu0 0.0
        %2530 = vmatpush1.msra.mxu0 0.0
        %2531 = vmatprep.subr.mxu0 0.0
        %2532 = vmatpush1.msra.mxu0 0.0
        %2533 = vmatprep.subr.mxu0 0.0
        %2534 = vmatpush1.msra.mxu0 0.0
        %2535 = vmatprep.subr.mxu0 0.0
        %2536 = vmatpush1.msra.mxu0 0.0
        %2537 = vmatprep.subr.mxu0 0.0
        %2538 = vmatpush1.msra.mxu0 0.0
        %2539 = vmatprep.subr.mxu0 0.0
        %2540 = vmatpush1.msra.mxu0 0.0
        %2541 = vmatprep.subr.mxu0 0.0
        %2542 = vmatpush1.msra.mxu0 0.0
        %2543 = vmatprep.subr.mxu0 0.0
        %2544 = vmatpush1.msra.mxu0 0.0
        %2545 = vmatprep.subr.mxu0 0.0
        %2546 = vmatpush1.msra.mxu0 0.0
        %2547 = vmatprep.subr.mxu0 0.0
        %2548 = vmatpush1.msra.mxu0 0.0
        %2549 = vmatprep.subr.mxu0 0.0
        %2550 = vmatpush1.msra.mxu0 0.0
        %2551 = vmatprep.mubr.f32.mxu0 0.0
        %2552 = vmatmul.mubr.f32.gmra.mrb[0].mxu0 %v2451
        %v2553 = vpop.f32.mrb[0].mxu0
        %v2554 = vadd.f32 %v2486, %v2553
        %v2555 = vpop.f32.mrb[0].mxu0
        %2556 = vmatprep.mubr.f32.mxu0 0.0
        %2557 = vmatmul.mubr.f32.gmra.mrb[0].mxu0 %v2452
        %v2558 = vpop.f32.mrb[0].mxu0
        %v2559 = vadd.f32 %v2486, %v2558
        %v2560 = vpop.f32.mrb[0].mxu0
        %2561 = vmatprep.mubr.f32.mxu0 0.0
        %2562 = vmatmul.mubr.f32.gmra.mrb[0].mxu0 %v2453
        %v2563 = vpop.f32.mrb[0].mxu0
        %v2564 = vadd.f32 %v2486, %v2563
        %v2565 = vpop.f32.mrb[0].mxu0
        %2566 = vmatprep.mubr.f32.mxu0 0.0
        %2567 = vmatmul.mubr.f32.gmra.mrb[0].mxu0 %v2454
        %v2568 = vpop.f32.mrb[0].mxu0
        %v2569 = vadd.f32 %v2486, %v2568
        %v2570 = vpop.f32.mrb[0].mxu0
        %2571 = vmatprep.mubr.f32.mxu0 0.0
        %2572 = vmatmul.mubr.f32.gmra.mrb[0].mxu0 %v2455
        %v2573 = vpop.f32.mrb[0].mxu0
        %v2574 = vadd.f32 %v2486, %v2573
        %v2575 = vpop.f32.mrb[0].mxu0
        %2576 = vmatprep.mubr.f32.mxu0 0.0
        %2577 = vmatmul.mubr.f32.gmra.mrb[0].mxu0 %v2456
        %v2578 = vpop.f32.mrb[0].mxu0
        %v2579 = vadd.f32 %v2486, %v2578
        %v2580 = vpop.f32.mrb[0].mxu0
        %2581 = vmatprep.mubr.f32.mxu0 0.0
        %2582 = vmatmul.mubr.f32.gmra.mrb[0].mxu0 %v2457
        %v2583 = vpop.f32.mrb[0].mxu0
        %v2584 = vadd.f32 %v2486, %v2583
        %v2585 = vpop.f32.mrb[0].mxu0
        %2586 = vmatprep.mubr.f32.mxu0 0.0
        %2587 = vmatmul.mubr.f32.gmra.mrb[0].mxu0 %v2458
        %v2588 = vpop.f32.mrb[0].mxu0
        %v2589 = vadd.f32 %v2486, %v2588
        %v2590 = vpop.f32.mrb[0].mxu0
        %2591 = vmatprep.mubr.f32.mxu0 0.0
        %2592 = vmatmul.mubr.f32.gmra.mrb[0].mxu0 %v2459
        %v2593 = vpop.f32.mrb[0].mxu0
        %v2594 = vadd.f32 %v2486, %v2593
        %v2595 = vpop.f32.mrb[0].mxu0
        %2596 = vmatprep.mubr.f32.mxu0 0.0
        %2597 = vmatmul.mubr.f32.gmra.mrb[0].mxu0 %v2460
        %v2598 = vpop.f32.mrb[0].mxu0
        %v2599 = vadd.f32 %v2486, %v2598
        %v2600 = vpop.f32.mrb[0].mxu0
        %2601 = vmatprep.mubr.f32.mxu0 0.0
        %2602 = vmatmul.mubr.f32.gmra.mrb[0].mxu0 %v2461
        %v2603 = vpop.f32.mrb[0].mxu0
        %v2604 = vadd.f32 %v2486, %v2603
        %v2605 = vpop.f32.mrb[0].mxu0
        %2606 = vmatprep.mubr.f32.mxu0 0.0
        %2607 = vmatmul.mubr.f32.gmra.mrb[0].mxu0 %v2462
        %v2608 = vpop.f32.mrb[0].mxu0
        %v2609 = vadd.f32 %v2486, %v2608
        %v2610 = vpop.f32.mrb[0].mxu0
        %2611 = vmatprep.mubr.f32.mxu0 0.0
        %2612 = vmatmul.mubr.f32.gmra.mrb[0].mxu0 %v2463
        %v2613 = vpop.f32.mrb[0].mxu0
        %v2614 = vadd.f32 %v2486, %v2613
        %v2615 = vpop.f32.mrb[0].mxu0
        %2616 = vmatprep.mubr.f32.mxu0 0.0
        %2617 = vmatmul.mubr.f32.gmra.mrb[0].mxu0 %v2464
        %v2618 = vpop.f32.mrb[0].mxu0
        %v2619 = vadd.f32 %v2486, %v2618
        %v2620 = vpop.f32.mrb[0].mxu0
        %2621 = vmatprep.mubr.f32.mxu0 0.0
        %2622 = vmatmul.mubr.f32.gmra.mrb[0].mxu0 %v2465
        %v2623 = vpop.f32.mrb[0].mxu0
        %v2624 = vadd.f32 %v2486, %v2623
        %v2625 = vpop.f32.mrb[0].mxu0
        %2626 = vmatprep.mubr.f32.mxu0 0.0
        %2627 = vmatmul.mubr.f32.gmra.mrb[0].mxu0 %v2466
        %v2628 = vpop.f32.mrb[0].mxu0
        %v2629 = vadd.f32 %v2486, %v2628
        %v2630 = vpop.f32.mrb[0].mxu0
        %2631 = vdwg.mxu0
        %v2632 = vxor.u32 %v2554, 2147483648
        %v2633 = vxor.u32 %v2559, 2147483648
        %v2634 = vxor.u32 %v2564, 2147483648
        %v2635 = vxor.u32 %v2569, 2147483648
        %v2636 = vxor.u32 %v2574, 2147483648
        %v2637 = vxor.u32 %v2579, 2147483648
        %v2638 = vxor.u32 %v2584, 2147483648
        %v2639 = vxor.u32 %v2589, 2147483648
        %v2640 = vxor.u32 %v2594, 2147483648
        %v2641 = vxor.u32 %v2599, 2147483648
        %v2642 = vxor.u32 %v2604, 2147483648
        %v2643 = vxor.u32 %v2609, 2147483648
        %v2644 = vxor.u32 %v2614, 2147483648
        %v2645 = vxor.u32 %v2619, 2147483648
        %v2646 = vxor.u32 %v2624, 2147483648
        %v2647 = vxor.u32 %v2629, 2147483648
        %v2648 = vmul.f32 %v2632, 1.442695
        %v2649 = vpow.pop %v2648
        %v2650 = vmul.f32 %v2633, 1.442695
        %v2651 = vpow.pop %v2650
        %v2652 = vmul.f32 %v2634, 1.442695
        %v2653 = vpow.pop %v2652
        %v2654 = vmul.f32 %v2635, 1.442695
        %v2655 = vpow.pop %v2654
        %v2656 = vmul.f32 %v2636, 1.442695
        %v2657 = vpow.pop %v2656
        %v2658 = vmul.f32 %v2637, 1.442695
        %v2659 = vpow.pop %v2658
        %v2660 = vmul.f32 %v2638, 1.442695
        %v2661 = vpow.pop %v2660
        %v2662 = vmul.f32 %v2639, 1.442695
        %v2663 = vpow.pop %v2662
        %v2664 = vmul.f32 %v2640, 1.442695
        %v2665 = vpow.pop %v2664
        %v2666 = vmul.f32 %v2641, 1.442695
        %v2667 = vpow.pop %v2666
        %v2668 = vmul.f32 %v2642, 1.442695
        %v2669 = vpow.pop %v2668
        %v2670 = vmul.f32 %v2643, 1.442695
        %v2671 = vpow.pop %v2670
        %v2672 = vmul.f32 %v2644, 1.442695
        %v2673 = vpow.pop %v2672
        %v2674 = vmul.f32 %v2645, 1.442695
        %v2675 = vpow.pop %v2674
        %v2676 = vmul.f32 %v2646, 1.442695
        %v2677 = vpow.pop %v2676
        %v2678 = vmul.f32 %v2647, 1.442695
        %v2679 = vpow.pop %v2678
        %v2680 = vadd.f32 %v2649, 1.0
        %v2681 = vadd.f32 %v2651, 1.0
        %v2682 = vadd.f32 %v2653, 1.0
        %v2683 = vadd.f32 %v2655, 1.0
        %v2684 = vadd.f32 %v2657, 1.0
        %v2685 = vadd.f32 %v2659, 1.0
        %v2686 = vadd.f32 %v2661, 1.0
        %v2687 = vadd.f32 %v2663, 1.0
        %v2688 = vadd.f32 %v2665, 1.0
        %v2689 = vadd.f32 %v2667, 1.0
        %v2690 = vadd.f32 %v2669, 1.0
        %v2691 = vadd.f32 %v2671, 1.0
        %v2692 = vadd.f32 %v2673, 1.0
        %v2693 = vadd.f32 %v2675, 1.0
        %v2694 = vadd.f32 %v2677, 1.0
        %v2695 = vadd.f32 %v2679, 1.0
        %v2696 = vrcp.pop %v2680
        %v2697 = vmul.f32 1.0, %v2696
        %v2698 = vrcp.pop %v2681
        %v2699 = vmul.f32 1.0, %v2698
        %v2700 = vrcp.pop %v2682
        %v2701 = vmul.f32 1.0, %v2700
        %v2702 = vrcp.pop %v2683
        %v2703 = vmul.f32 1.0, %v2702
        %v2704 = vrcp.pop %v2684
        %v2705 = vmul.f32 1.0, %v2704
        %v2706 = vrcp.pop %v2685
        %v2707 = vmul.f32 1.0, %v2706
        %v2708 = vrcp.pop %v2686
        %v2709 = vmul.f32 1.0, %v2708
        %v2710 = vrcp.pop %v2687
        %v2711 = vmul.f32 1.0, %v2710
        %v2712 = vrcp.pop %v2688
        %v2713 = vmul.f32 1.0, %v2712
        %v2714 = vrcp.pop %v2689
        %v2715 = vmul.f32 1.0, %v2714
        %v2716 = vrcp.pop %v2690
        %v2717 = vmul.f32 1.0, %v2716
        %v2718 = vrcp.pop %v2691
        %v2719 = vmul.f32 1.0, %v2718
        %v2720 = vrcp.pop %v2692
        %v2721 = vmul.f32 1.0, %v2720
        %v2722 = vrcp.pop %v2693
        %v2723 = vmul.f32 1.0, %v2722
        %v2724 = vrcp.pop %v2694
        %v2725 = vmul.f32 1.0, %v2724
        %v2726 = vrcp.pop %v2695
        %v2727 = vmul.f32 1.0, %v2726
        %v2728 = vmul.f32 %v2554, %v2697
        %v2729 = vmul.f32 %v2559, %v2699
        %v2730 = vmul.f32 %v2564, %v2701
        %v2731 = vmul.f32 %v2569, %v2703
        %v2732 = vmul.f32 %v2574, %v2705
        %v2733 = vmul.f32 %v2579, %v2707
        %v2734 = vmul.f32 %v2584, %v2709
        %v2735 = vmul.f32 %v2589, %v2711
        %v2736 = vmul.f32 %v2594, %v2713
        %v2737 = vmul.f32 %v2599, %v2715
        %v2738 = vmul.f32 %v2604, %v2717
        %v2739 = vmul.f32 %v2609, %v2719
        %v2740 = vmul.f32 %v2614, %v2721
        %v2741 = vmul.f32 %v2619, %v2723
        %v2742 = vmul.f32 %v2624, %v2725
        %v2743 = vmul.f32 %v2629, %v2727
        %v2744 = vld [vmem:[#allocation2 + $0x108] sm:$0xff]
        %v2745 = vld [vmem:[#allocation2 + $0x110] sm:$0xff]
        %v2746 = vld [vmem:[#allocation2 + $0x118] sm:$0xff]
        %v2747 = vld [vmem:[#allocation2 + $0x120] sm:$0xff]
        %v2748 = vld [vmem:[#allocation2 + $0x128] sm:$0xff]
        %v2749 = vld [vmem:[#allocation2 + $0x130] sm:$0xff]
        %v2750 = vld [vmem:[#allocation2 + $0x138] sm:$0xff]
        %v2751 = vld [vmem:[#allocation2 + $0x140] sm:$0xff]
        %v2752 = vld [vmem:[#allocation2 + $0x148] sm:$0xff]
        %v2753 = vld [vmem:[#allocation2 + $0x150] sm:$0xff]
        %v2754 = vld [vmem:[#allocation2 + $0x158] sm:$0xff]
        %v2755 = vld [vmem:[#allocation2 + $0x160] sm:$0xff]
        %v2756 = vld [vmem:[#allocation2 + $0x168] sm:$0xff]
        %v2757 = vld [vmem:[#allocation2 + $0x170] sm:$0xff]
        %v2758 = vld [vmem:[#allocation2 + $0x178] sm:$0xff]
        %v2759 = vld [vmem:[#allocation2 + $0x180] sm:$0xff]
        %v2760 = vld [vmem:[#allocation2 + $0x188] sm:$0xff]
        %v2761 = vld [vmem:[#allocation2 + $0x190] sm:$0xff]
        %v2762 = vld [vmem:[#allocation2 + $0x198] sm:$0xff]
        %v2763 = vld [vmem:[#allocation2 + $0x1a0] sm:$0xff]
        %v2764 = vld [vmem:[#allocation2 + $0x1a8] sm:$0xff]
        %v2765 = vld [vmem:[#allocation2 + $0x1b0] sm:$0xff]
        %v2766 = vld [vmem:[#allocation2 + $0x1b8] sm:$0xff]
        %v2767 = vld [vmem:[#allocation2 + $0x1c0] sm:$0xff]
        %v2768 = vld [vmem:[#allocation2 + $0x1c8] sm:$0xff]
        %v2769 = vld [vmem:[#allocation2 + $0x1d0] sm:$0xff]
        %v2770 = vld [vmem:[#allocation2 + $0x1d8] sm:$0xff]
        %v2771 = vld [vmem:[#allocation2 + $0x1e0] sm:$0xff]
        %v2772 = vld [vmem:[#allocation2 + $0x1e8] sm:$0xff]
        %v2773 = vld [vmem:[#allocation2 + $0x1f0] sm:$0xff]
        %v2774 = vld [vmem:[#allocation2 + $0x1f8] sm:$0xff]
        %v2775 = vld [vmem:[#allocation2 + $0x200] sm:$0xff]
        %2776 = vmatprep.subr.mxu0 0.0
        %2777 = vmatpush1.msra.mxu0 %v2760
        %2778 = vmatprep.subr.mxu0 0.0
        %2779 = vmatpush1.msra.mxu0 %v2761
        %2780 = vmatprep.subr.mxu0 0.0
        %2781 = vmatpush1.msra.mxu0 %v2762
        %2782 = vmatprep.subr.mxu0 0.0
        %2783 = vmatpush1.msra.mxu0 %v2763
        %2784 = vmatprep.subr.mxu0 0.0
        %2785 = vmatpush1.msra.mxu0 %v2764
        %2786 = vmatprep.subr.mxu0 0.0
        %2787 = vmatpush1.msra.mxu0 %v2765
        %2788 = vmatprep.subr.mxu0 0.0
        %2789 = vmatpush1.msra.mxu0 %v2766
        %2790 = vmatprep.subr.mxu0 0.0
        %2791 = vmatpush1.msra.mxu0 %v2767
        %2792 = vmatprep.subr.mxu0 0.0
        %2793 = vmatpush1.msra.mxu0 %v2768
        %2794 = vmatprep.subr.mxu0 0.0
        %2795 = vmatpush1.msra.mxu0 %v2769
        %2796 = vmatprep.subr.mxu0 0.0
        %2797 = vmatpush1.msra.mxu0 %v2770
        %2798 = vmatprep.subr.mxu0 0.0
        %2799 = vmatpush1.msra.mxu0 %v2771
        %2800 = vmatprep.subr.mxu0 0.0
        %2801 = vmatpush1.msra.mxu0 %v2772
        %2802 = vmatprep.subr.mxu0 0.0
        %2803 = vmatpush1.msra.mxu0 %v2773
        %2804 = vmatprep.subr.mxu0 0.0
        %2805 = vmatpush1.msra.mxu0 %v2774
        %2806 = vmatprep.subr.mxu0 0.0
        %2807 = vmatpush1.msra.mxu0 %v2775
        %2808 = vmatprep.subr.mxu0 0.0
        %2809 = vmatpush1.msra.mxu0 0.0
        %2810 = vmatprep.subr.mxu0 0.0
        %2811 = vmatpush1.msra.mxu0 0.0
        %2812 = vmatprep.subr.mxu0 0.0
        %2813 = vmatpush1.msra.mxu0 0.0
        %2814 = vmatprep.subr.mxu0 0.0
        %2815 = vmatpush1.msra.mxu0 0.0
        %2816 = vmatprep.subr.mxu0 0.0
        %2817 = vmatpush1.msra.mxu0 0.0
        %2818 = vmatprep.subr.mxu0 0.0
        %2819 = vmatpush1.msra.mxu0 0.0
        %2820 = vmatprep.subr.mxu0 0.0
        %2821 = vmatpush1.msra.mxu0 0.0
        %2822 = vmatprep.subr.mxu0 0.0
        %2823 = vmatpush1.msra.mxu0 0.0
        %2824 = vmatprep.subr.mxu0 0.0
        %2825 = vmatpush1.msra.mxu0 0.0
        %2826 = vmatprep.subr.mxu0 0.0
        %2827 = vmatpush1.msra.mxu0 0.0
        %2828 = vmatprep.subr.mxu0 0.0
        %2829 = vmatpush1.msra.mxu0 0.0
        %2830 = vmatprep.subr.mxu0 0.0
        %2831 = vmatpush1.msra.mxu0 0.0
        %2832 = vmatprep.subr.mxu0 0.0
        %2833 = vmatpush1.msra.mxu0 0.0
        %2834 = vmatprep.subr.mxu0 0.0
        %2835 = vmatpush1.msra.mxu0 0.0
        %2836 = vmatprep.subr.mxu0 0.0
        %2837 = vmatpush1.msra.mxu0 0.0
        %2838 = vmatprep.subr.mxu0 0.0
        %2839 = vmatpush1.msra.mxu0 0.0
        %2840 = vmatprep.mubr.f32.mxu0 0.0
        %2841 = vmatmul.mubr.f32.gmra.mrb[0].mxu0 %v2728
        %v2842 = vpop.f32.mrb[0].mxu0
        %v2843 = vadd.f32 0.0, %v2842
        %v2844 = vpop.f32.mrb[0].mxu0
        %2845 = vmatprep.mubr.f32.mxu0 0.0
        %2846 = vmatmul.mubr.f32.gmra.mrb[0].mxu0 %v2729
        %v2847 = vpop.f32.mrb[0].mxu0
        %v2848 = vadd.f32 0.0, %v2847
        %v2849 = vpop.f32.mrb[0].mxu0
        %2850 = vmatprep.mubr.f32.mxu0 0.0
        %2851 = vmatmul.mubr.f32.gmra.mrb[0].mxu0 %v2730
        %v2852 = vpop.f32.mrb[0].mxu0
        %v2853 = vadd.f32 0.0, %v2852
        %v2854 = vpop.f32.mrb[0].mxu0
        %2855 = vmatprep.mubr.f32.mxu0 0.0
        %2856 = vmatmul.mubr.f32.gmra.mrb[0].mxu0 %v2731
        %v2857 = vpop.f32.mrb[0].mxu0
        %v2858 = vadd.f32 0.0, %v2857
        %v2859 = vpop.f32.mrb[0].mxu0
        %2860 = vmatprep.mubr.f32.mxu0 0.0
        %2861 = vmatmul.mubr.f32.gmra.mrb[0].mxu0 %v2732
        %v2862 = vpop.f32.mrb[0].mxu0
        %v2863 = vadd.f32 0.0, %v2862
        %v2864 = vpop.f32.mrb[0].mxu0
        %2865 = vmatprep.mubr.f32.mxu0 0.0
        %2866 = vmatmul.mubr.f32.gmra.mrb[0].mxu0 %v2733
        %v2867 = vpop.f32.mrb[0].mxu0
        %v2868 = vadd.f32 0.0, %v2867
        %v2869 = vpop.f32.mrb[0].mxu0
        %2870 = vmatprep.mubr.f32.mxu0 0.0
        %2871 = vmatmul.mubr.f32.gmra.mrb[0].mxu0 %v2734
        %v2872 = vpop.f32.mrb[0].mxu0
        %v2873 = vadd.f32 0.0, %v2872
        %v2874 = vpop.f32.mrb[0].mxu0
        %2875 = vmatprep.mubr.f32.mxu0 0.0
        %2876 = vmatmul.mubr.f32.gmra.mrb[0].mxu0 %v2735
        %v2877 = vpop.f32.mrb[0].mxu0
        %v2878 = vadd.f32 0.0, %v2877
        %v2879 = vpop.f32.mrb[0].mxu0
        %2880 = vmatprep.mubr.f32.mxu0 0.0
        %2881 = vmatmul.mubr.f32.gmra.mrb[0].mxu0 %v2736
        %v2882 = vpop.f32.mrb[0].mxu0
        %v2883 = vadd.f32 0.0, %v2882
        %v2884 = vpop.f32.mrb[0].mxu0
        %2885 = vmatprep.mubr.f32.mxu0 0.0
        %2886 = vmatmul.mubr.f32.gmra.mrb[0].mxu0 %v2737
        %v2887 = vpop.f32.mrb[0].mxu0
        %v2888 = vadd.f32 0.0, %v2887
        %v2889 = vpop.f32.mrb[0].mxu0
        %2890 = vmatprep.mubr.f32.mxu0 0.0
        %2891 = vmatmul.mubr.f32.gmra.mrb[0].mxu0 %v2738
        %v2892 = vpop.f32.mrb[0].mxu0
        %v2893 = vadd.f32 0.0, %v2892
        %v2894 = vpop.f32.mrb[0].mxu0
        %2895 = vmatprep.mubr.f32.mxu0 0.0
        %2896 = vmatmul.mubr.f32.gmra.mrb[0].mxu0 %v2739
        %v2897 = vpop.f32.mrb[0].mxu0
        %v2898 = vadd.f32 0.0, %v2897
        %v2899 = vpop.f32.mrb[0].mxu0
        %2900 = vmatprep.mubr.f32.mxu0 0.0
        %2901 = vmatmul.mubr.f32.gmra.mrb[0].mxu0 %v2740
        %v2902 = vpop.f32.mrb[0].mxu0
        %v2903 = vadd.f32 0.0, %v2902
        %v2904 = vpop.f32.mrb[0].mxu0
        %2905 = vmatprep.mubr.f32.mxu0 0.0
        %2906 = vmatmul.mubr.f32.gmra.mrb[0].mxu0 %v2741
        %v2907 = vpop.f32.mrb[0].mxu0
        %v2908 = vadd.f32 0.0, %v2907
        %v2909 = vpop.f32.mrb[0].mxu0
        %2910 = vmatprep.mubr.f32.mxu0 0.0
        %2911 = vmatmul.mubr.f32.gmra.mrb[0].mxu0 %v2742
        %v2912 = vpop.f32.mrb[0].mxu0
        %v2913 = vadd.f32 0.0, %v2912
        %v2914 = vpop.f32.mrb[0].mxu0
        %2915 = vmatprep.mubr.f32.mxu0 0.0
        %2916 = vmatmul.mubr.f32.gmra.mrb[0].mxu0 %v2743
        %v2917 = vpop.f32.mrb[0].mxu0
        %v2918 = vadd.f32 0.0, %v2917
        %v2919 = vpop.f32.mrb[0].mxu0
        %2920 = vdwg.mxu0
        %2921 = vmatprep.subr.mxu0 0.0
        %2922 = vmatpush1.msra.mxu0 %v2744
        %2923 = vmatprep.subr.mxu0 0.0
        %2924 = vmatpush1.msra.mxu0 %v2745
        %2925 = vmatprep.subr.mxu0 0.0
        %2926 = vmatpush1.msra.mxu0 %v2746
        %2927 = vmatprep.subr.mxu0 0.0
        %2928 = vmatpush1.msra.mxu0 %v2747
        %2929 = vmatprep.subr.mxu0 0.0
        %2930 = vmatpush1.msra.mxu0 %v2748
        %2931 = vmatprep.subr.mxu0 0.0
        %2932 = vmatpush1.msra.mxu0 %v2749
        %2933 = vmatprep.subr.mxu0 0.0
        %2934 = vmatpush1.msra.mxu0 %v2750
        %2935 = vmatprep.subr.mxu0 0.0
        %2936 = vmatpush1.msra.mxu0 %v2751
        %2937 = vmatprep.subr.mxu0 0.0
        %2938 = vmatpush1.msra.mxu0 %v2752
        %2939 = vmatprep.subr.mxu0 0.0
        %2940 = vmatpush1.msra.mxu0 %v2753
        %2941 = vmatprep.subr.mxu0 0.0
        %2942 = vmatpush1.msra.mxu0 %v2754
        %2943 = vmatprep.subr.mxu0 0.0
        %2944 = vmatpush1.msra.mxu0 %v2755
        %2945 = vmatprep.subr.mxu0 0.0
        %2946 = vmatpush1.msra.mxu0 %v2756
        %2947 = vmatprep.subr.mxu0 0.0
        %2948 = vmatpush1.msra.mxu0 %v2757
        %2949 = vmatprep.subr.mxu0 0.0
        %2950 = vmatpush1.msra.mxu0 %v2758
        %2951 = vmatprep.subr.mxu0 0.0
        %2952 = vmatpush1.msra.mxu0 %v2759
        %2953 = vmatprep.subr.mxu0 0.0
        %2954 = vmatpush1.msra.mxu0 0.0
        %2955 = vmatprep.subr.mxu0 0.0
        %2956 = vmatpush1.msra.mxu0 0.0
        %2957 = vmatprep.subr.mxu0 0.0
        %2958 = vmatpush1.msra.mxu0 0.0
        %2959 = vmatprep.subr.mxu0 0.0
        %2960 = vmatpush1.msra.mxu0 0.0
        %2961 = vmatprep.subr.mxu0 0.0
        %2962 = vmatpush1.msra.mxu0 0.0
        %2963 = vmatprep.subr.mxu0 0.0
        %2964 = vmatpush1.msra.mxu0 0.0
        %2965 = vmatprep.subr.mxu0 0.0
        %2966 = vmatpush1.msra.mxu0 0.0
        %2967 = vmatprep.subr.mxu0 0.0
        %2968 = vmatpush1.msra.mxu0 0.0
        %2969 = vmatprep.subr.mxu0 0.0
        %2970 = vmatpush1.msra.mxu0 0.0
        %2971 = vmatprep.subr.mxu0 0.0
        %2972 = vmatpush1.msra.mxu0 0.0
        %2973 = vmatprep.subr.mxu0 0.0
        %2974 = vmatpush1.msra.mxu0 0.0
        %2975 = vmatprep.subr.mxu0 0.0
        %2976 = vmatpush1.msra.mxu0 0.0
        %2977 = vmatprep.subr.mxu0 0.0
        %2978 = vmatpush1.msra.mxu0 0.0
        %2979 = vmatprep.subr.mxu0 0.0
        %2980 = vmatpush1.msra.mxu0 0.0
        %2981 = vmatprep.subr.mxu0 0.0
        %2982 = vmatpush1.msra.mxu0 0.0
        %2983 = vmatprep.subr.mxu0 0.0
        %2984 = vmatpush1.msra.mxu0 0.0
        %2985 = vmatprep.mubr.f32.mxu0 0.0
        %2986 = vmatmul.mubr.f32.gmra.mrb[0].mxu0 %v2451
        %v2987 = vpop.f32.mrb[0].mxu0
        %v2988 = vadd.f32 %v2843, %v2987
        %v2989 = vpop.f32.mrb[0].mxu0
        %2990 = vmatprep.mubr.f32.mxu0 0.0
        %2991 = vmatmul.mubr.f32.gmra.mrb[0].mxu0 %v2452
        %v2992 = vpop.f32.mrb[0].mxu0
        %v2993 = vadd.f32 %v2848, %v2992
        %v2994 = vpop.f32.mrb[0].mxu0
        %2995 = vmatprep.mubr.f32.mxu0 0.0
        %2996 = vmatmul.mubr.f32.gmra.mrb[0].mxu0 %v2453
        %v2997 = vpop.f32.mrb[0].mxu0
        %v2998 = vadd.f32 %v2853, %v2997
        %v2999 = vpop.f32.mrb[0].mxu0
        %3000 = vmatprep.mubr.f32.mxu0 0.0
        %3001 = vmatmul.mubr.f32.gmra.mrb[0].mxu0 %v2454
        %v3002 = vpop.f32.mrb[0].mxu0
        %v3003 = vadd.f32 %v2858, %v3002
        %v3004 = vpop.f32.mrb[0].mxu0
        %3005 = vmatprep.mubr.f32.mxu0 0.0
        %3006 = vmatmul.mubr.f32.gmra.mrb[0].mxu0 %v2455
        %v3007 = vpop.f32.mrb[0].mxu0
        %v3008 = vadd.f32 %v2863, %v3007
        %v3009 = vpop.f32.mrb[0].mxu0
        %3010 = vmatprep.mubr.f32.mxu0 0.0
        %3011 = vmatmul.mubr.f32.gmra.mrb[0].mxu0 %v2456
        %v3012 = vpop.f32.mrb[0].mxu0
        %v3013 = vadd.f32 %v2868, %v3012
        %v3014 = vpop.f32.mrb[0].mxu0
        %3015 = vmatprep.mubr.f32.mxu0 0.0
        %3016 = vmatmul.mubr.f32.gmra.mrb[0].mxu0 %v2457
        %v3017 = vpop.f32.mrb[0].mxu0
        %v3018 = vadd.f32 %v2873, %v3017
        %v3019 = vpop.f32.mrb[0].mxu0
        %3020 = vmatprep.mubr.f32.mxu0 0.0
        %3021 = vmatmul.mubr.f32.gmra.mrb[0].mxu0 %v2458
        %v3022 = vpop.f32.mrb[0].mxu0
        %v3023 = vadd.f32 %v2878, %v3022
        %v3024 = vpop.f32.mrb[0].mxu0
        %3025 = vmatprep.mubr.f32.mxu0 0.0
        %3026 = vmatmul.mubr.f32.gmra.mrb[0].mxu0 %v2459
        %v3027 = vpop.f32.mrb[0].mxu0
        %v3028 = vadd.f32 %v2883, %v3027
        %v3029 = vpop.f32.mrb[0].mxu0
        %3030 = vmatprep.mubr.f32.mxu0 0.0
        %3031 = vmatmul.mubr.f32.gmra.mrb[0].mxu0 %v2460
        %v3032 = vpop.f32.mrb[0].mxu0
        %v3033 = vadd.f32 %v2888, %v3032
        %v3034 = vpop.f32.mrb[0].mxu0
        %3035 = vmatprep.mubr.f32.mxu0 0.0
        %3036 = vmatmul.mubr.f32.gmra.mrb[0].mxu0 %v2461
        %v3037 = vpop.f32.mrb[0].mxu0
        %v3038 = vadd.f32 %v2893, %v3037
        %v3039 = vpop.f32.mrb[0].mxu0
        %3040 = vmatprep.mubr.f32.mxu0 0.0
        %3041 = vmatmul.mubr.f32.gmra.mrb[0].mxu0 %v2462
        %v3042 = vpop.f32.mrb[0].mxu0
        %v3043 = vadd.f32 %v2898, %v3042
        %v3044 = vpop.f32.mrb[0].mxu0
        %3045 = vmatprep.mubr.f32.mxu0 0.0
        %3046 = vmatmul.mubr.f32.gmra.mrb[0].mxu0 %v2463
        %v3047 = vpop.f32.mrb[0].mxu0
        %v3048 = vadd.f32 %v2903, %v3047
        %v3049 = vpop.f32.mrb[0].mxu0
        %3050 = vmatprep.mubr.f32.mxu0 0.0
        %3051 = vmatmul.mubr.f32.gmra.mrb[0].mxu0 %v2464
        %v3052 = vpop.f32.mrb[0].mxu0
        %v3053 = vadd.f32 %v2908, %v3052
        %v3054 = vpop.f32.mrb[0].mxu0
        %3055 = vmatprep.mubr.f32.mxu0 0.0
        %3056 = vmatmul.mubr.f32.gmra.mrb[0].mxu0 %v2465
        %v3057 = vpop.f32.mrb[0].mxu0
        %v3058 = vadd.f32 %v2913, %v3057
        %v3059 = vpop.f32.mrb[0].mxu0
        %3060 = vmatprep.mubr.f32.mxu0 0.0
        %3061 = vmatmul.mubr.f32.gmra.mrb[0].mxu0 %v2466
        %v3062 = vpop.f32.mrb[0].mxu0
        %v3063 = vadd.f32 %v2918, %v3062
        %v3064 = vpop.f32.mrb[0].mxu0
        %3065 = vdwg.mxu0
        %v3066 = vlaneseq
        %v3067 = vshrl.u32 %v3066, 7
        %v3068 = vsub.s32 0, %v3067
        %v3069 = vrot.slane %v193, %v3068
        %v3070 = vadd.f32 %v2988, %v3069
        %v3071 = vadd.f32 %v2993, %v3069
        %v3072 = vadd.f32 %v2998, %v3069
        %v3073 = vadd.f32 %v3003, %v3069
        %v3074 = vadd.f32 %v3008, %v3069
        %v3075 = vadd.f32 %v3013, %v3069
        %v3076 = vadd.f32 %v3018, %v3069
        %v3077 = vadd.f32 %v3023, %v3069
        %v3078 = vadd.f32 %v3028, %v3069
        %v3079 = vadd.f32 %v3033, %v3069
        %v3080 = vadd.f32 %v3038, %v3069
        %v3081 = vadd.f32 %v3043, %v3069
        %v3082 = vadd.f32 %v3048, %v3069
        %v3083 = vadd.f32 %v3053, %v3069
        %v3084 = vadd.f32 %v3058, %v3069
        %v3085 = vadd.f32 %v3063, %v3069
        %v3086 = vxor.u32 %v3070, 2147483648
        %v3087 = vxor.u32 %v3071, 2147483648
        %v3088 = vxor.u32 %v3072, 2147483648
        %v3089 = vxor.u32 %v3073, 2147483648
        %v3090 = vxor.u32 %v3074, 2147483648
        %v3091 = vxor.u32 %v3075, 2147483648
        %v3092 = vxor.u32 %v3076, 2147483648
        %v3093 = vxor.u32 %v3077, 2147483648
        %v3094 = vxor.u32 %v3078, 2147483648
        %v3095 = vxor.u32 %v3079, 2147483648
        %v3096 = vxor.u32 %v3080, 2147483648
        %v3097 = vxor.u32 %v3081, 2147483648
        %v3098 = vxor.u32 %v3082, 2147483648
        %v3099 = vxor.u32 %v3083, 2147483648
        %v3100 = vxor.u32 %v3084, 2147483648
        %v3101 = vxor.u32 %v3085, 2147483648
        %v3102 = vmul.f32 %v3086, 1.442695
        %v3103 = vpow.pop %v3102
        %v3104 = vmul.f32 %v3087, 1.442695
        %v3105 = vpow.pop %v3104
        %v3106 = vmul.f32 %v3088, 1.442695
        %v3107 = vpow.pop %v3106
        %v3108 = vmul.f32 %v3089, 1.442695
        %v3109 = vpow.pop %v3108
        %v3110 = vmul.f32 %v3090, 1.442695
        %v3111 = vpow.pop %v3110
        %v3112 = vmul.f32 %v3091, 1.442695
        %v3113 = vpow.pop %v3112
        %v3114 = vmul.f32 %v3092, 1.442695
        %v3115 = vpow.pop %v3114
        %v3116 = vmul.f32 %v3093, 1.442695
        %v3117 = vpow.pop %v3116
        %v3118 = vmul.f32 %v3094, 1.442695
        %v3119 = vpow.pop %v3118
        %v3120 = vmul.f32 %v3095, 1.442695
        %v3121 = vpow.pop %v3120
        %v3122 = vmul.f32 %v3096, 1.442695
        %v3123 = vpow.pop %v3122
        %v3124 = vmul.f32 %v3097, 1.442695
        %v3125 = vpow.pop %v3124
        %v3126 = vmul.f32 %v3098, 1.442695
        %v3127 = vpow.pop %v3126
        %v3128 = vmul.f32 %v3099, 1.442695
        %v3129 = vpow.pop %v3128
        %v3130 = vmul.f32 %v3100, 1.442695
        %v3131 = vpow.pop %v3130
        %v3132 = vmul.f32 %v3101, 1.442695
        %v3133 = vpow.pop %v3132
        %v3134 = vadd.f32 %v3103, 1.0
        %v3135 = vadd.f32 %v3105, 1.0
        %v3136 = vadd.f32 %v3107, 1.0
        %v3137 = vadd.f32 %v3109, 1.0
        %v3138 = vadd.f32 %v3111, 1.0
        %v3139 = vadd.f32 %v3113, 1.0
        %v3140 = vadd.f32 %v3115, 1.0
        %v3141 = vadd.f32 %v3117, 1.0
        %v3142 = vadd.f32 %v3119, 1.0
        %v3143 = vadd.f32 %v3121, 1.0
        %v3144 = vadd.f32 %v3123, 1.0
        %v3145 = vadd.f32 %v3125, 1.0
        %v3146 = vadd.f32 %v3127, 1.0
        %v3147 = vadd.f32 %v3129, 1.0
        %v3148 = vadd.f32 %v3131, 1.0
        %v3149 = vadd.f32 %v3133, 1.0
        %v3150 = vrcp.pop %v3134
        %v3151 = vmul.f32 1.0, %v3150
        %v3152 = vrcp.pop %v3135
        %v3153 = vmul.f32 1.0, %v3152
        %v3154 = vrcp.pop %v3136
        %v3155 = vmul.f32 1.0, %v3154
        %v3156 = vrcp.pop %v3137
        %v3157 = vmul.f32 1.0, %v3156
        %v3158 = vrcp.pop %v3138
        %v3159 = vmul.f32 1.0, %v3158
        %v3160 = vrcp.pop %v3139
        %v3161 = vmul.f32 1.0, %v3160
        %v3162 = vrcp.pop %v3140
        %v3163 = vmul.f32 1.0, %v3162
        %v3164 = vrcp.pop %v3141
        %v3165 = vmul.f32 1.0, %v3164
        %v3166 = vrcp.pop %v3142
        %v3167 = vmul.f32 1.0, %v3166
        %v3168 = vrcp.pop %v3143
        %v3169 = vmul.f32 1.0, %v3168
        %v3170 = vrcp.pop %v3144
        %v3171 = vmul.f32 1.0, %v3170
        %v3172 = vrcp.pop %v3145
        %v3173 = vmul.f32 1.0, %v3172
        %v3174 = vrcp.pop %v3146
        %v3175 = vmul.f32 1.0, %v3174
        %v3176 = vrcp.pop %v3147
        %v3177 = vmul.f32 1.0, %v3176
        %v3178 = vrcp.pop %v3148
        %v3179 = vmul.f32 1.0, %v3178
        %v3180 = vrcp.pop %v3149
        %v3181 = vmul.f32 1.0, %v3180
        %v3182 = vmul.f32 %v3070, %v3151
        %v3183 = vmul.f32 %v3071, %v3153
        %v3184 = vmul.f32 %v3072, %v3155
        %v3185 = vmul.f32 %v3073, %v3157
        %v3186 = vmul.f32 %v3074, %v3159
        %v3187 = vmul.f32 %v3075, %v3161
        %v3188 = vmul.f32 %v3076, %v3163
        %v3189 = vmul.f32 %v3077, %v3165
        %v3190 = vmul.f32 %v3078, %v3167
        %v3191 = vmul.f32 %v3079, %v3169
        %v3192 = vmul.f32 %v3080, %v3171
        %v3193 = vmul.f32 %v3081, %v3173
        %v3194 = vmul.f32 %v3082, %v3175
        %v3195 = vmul.f32 %v3083, %v3177
        %v3196 = vmul.f32 %v3084, %v3179
        %v3197 = vmul.f32 %v3085, %v3181
        %v3198 = vld [vmem:[#allocation2 + $0x208] sm:$0xff]
        %v3199 = vld [vmem:[#allocation2 + $0x210] sm:$0xff]
        %v3200 = vld [vmem:[#allocation2 + $0x218] sm:$0xff]
        %v3201 = vld [vmem:[#allocation2 + $0x220] sm:$0xff]
        %v3202 = vld [vmem:[#allocation2 + $0x228] sm:$0xff]
        %v3203 = vld [vmem:[#allocation2 + $0x230] sm:$0xff]
        %v3204 = vld [vmem:[#allocation2 + $0x238] sm:$0xff]
        %v3205 = vld [vmem:[#allocation2 + $0x240] sm:$0xff]
        %v3206 = vld [vmem:[#allocation2 + $0x248] sm:$0xff]
        %v3207 = vld [vmem:[#allocation2 + $0x250] sm:$0xff]
        %v3208 = vld [vmem:[#allocation2 + $0x258] sm:$0xff]
        %v3209 = vld [vmem:[#allocation2 + $0x260] sm:$0xff]
        %v3210 = vld [vmem:[#allocation2 + $0x268] sm:$0xff]
        %v3211 = vld [vmem:[#allocation2 + $0x270] sm:$0xff]
        %v3212 = vld [vmem:[#allocation2 + $0x278] sm:$0xff]
        %v3213 = vld [vmem:[#allocation2 + $0x280] sm:$0xff]
        %v3214 = vld [vmem:[#allocation2 + $0x288] sm:$0xff]
        %3215 = vmatprep.subr.mxu0 0.0
        %3216 = vmatpush1.msra.mxu0 %v3199
        %3217 = vmatprep.subr.mxu0 0.0
        %3218 = vmatpush1.msra.mxu0 %v3200
        %3219 = vmatprep.subr.mxu0 0.0
        %3220 = vmatpush1.msra.mxu0 %v3201
        %3221 = vmatprep.subr.mxu0 0.0
        %3222 = vmatpush1.msra.mxu0 %v3202
        %3223 = vmatprep.subr.mxu0 0.0
        %3224 = vmatpush1.msra.mxu0 %v3203
        %3225 = vmatprep.subr.mxu0 0.0
        %3226 = vmatpush1.msra.mxu0 %v3204
        %3227 = vmatprep.subr.mxu0 0.0
        %3228 = vmatpush1.msra.mxu0 %v3205
        %3229 = vmatprep.subr.mxu0 0.0
        %3230 = vmatpush1.msra.mxu0 %v3206
        %3231 = vmatprep.subr.mxu0 0.0
        %3232 = vmatpush1.msra.mxu0 %v3207
        %3233 = vmatprep.subr.mxu0 0.0
        %3234 = vmatpush1.msra.mxu0 %v3208
        %3235 = vmatprep.subr.mxu0 0.0
        %3236 = vmatpush1.msra.mxu0 %v3209
        %3237 = vmatprep.subr.mxu0 0.0
        %3238 = vmatpush1.msra.mxu0 %v3210
        %3239 = vmatprep.subr.mxu0 0.0
        %3240 = vmatpush1.msra.mxu0 %v3211
        %3241 = vmatprep.subr.mxu0 0.0
        %3242 = vmatpush1.msra.mxu0 %v3212
        %3243 = vmatprep.subr.mxu0 0.0
        %3244 = vmatpush1.msra.mxu0 %v3213
        %3245 = vmatprep.subr.mxu0 0.0
        %3246 = vmatpush1.msra.mxu0 %v3214
        %3247 = vmatprep.subr.mxu0 0.0
        %3248 = vmatpush1.msra.mxu0 0.0
        %3249 = vmatprep.subr.mxu0 0.0
        %3250 = vmatpush1.msra.mxu0 0.0
        %3251 = vmatprep.subr.mxu0 0.0
        %3252 = vmatpush1.msra.mxu0 0.0
        %3253 = vmatprep.subr.mxu0 0.0
        %3254 = vmatpush1.msra.mxu0 0.0
        %3255 = vmatprep.subr.mxu0 0.0
        %3256 = vmatpush1.msra.mxu0 0.0
        %3257 = vmatprep.subr.mxu0 0.0
        %3258 = vmatpush1.msra.mxu0 0.0
        %3259 = vmatprep.subr.mxu0 0.0
        %3260 = vmatpush1.msra.mxu0 0.0
        %3261 = vmatprep.subr.mxu0 0.0
        %3262 = vmatpush1.msra.mxu0 0.0
        %3263 = vmatprep.subr.mxu0 0.0
        %3264 = vmatpush1.msra.mxu0 0.0
        %3265 = vmatprep.subr.mxu0 0.0
        %3266 = vmatpush1.msra.mxu0 0.0
        %3267 = vmatprep.subr.mxu0 0.0
        %3268 = vmatpush1.msra.mxu0 0.0
        %3269 = vmatprep.subr.mxu0 0.0
        %3270 = vmatpush1.msra.mxu0 0.0
        %3271 = vmatprep.subr.mxu0 0.0
        %3272 = vmatpush1.msra.mxu0 0.0
        %3273 = vmatprep.subr.mxu0 0.0
        %3274 = vmatpush1.msra.mxu0 0.0
        %3275 = vmatprep.subr.mxu0 0.0
        %3276 = vmatpush1.msra.mxu0 0.0
        %3277 = vmatprep.subr.mxu0 0.0
        %3278 = vmatpush1.msra.mxu0 0.0
        %3279 = vmatprep.mubr.f32.mxu0 0.0
        %3280 = vmatmul.mubr.f32.gmra.mrb[0].mxu0 %v434
        %v3281 = vpop.f32.mrb[0].mxu0
        %v3282 = vadd.f32 0.0, %v3281
        %v3283 = vpop.f32.mrb[0].mxu0
        %3284 = vmatprep.mubr.f32.mxu0 0.0
        %3285 = vmatmul.mubr.f32.gmra.mrb[0].mxu0 %v538
        %v3286 = vpop.f32.mrb[0].mxu0
        %v3287 = vadd.f32 0.0, %v3286
        %v3288 = vpop.f32.mrb[0].mxu0
        %3289 = vmatprep.mubr.f32.mxu0 0.0
        %3290 = vmatmul.mubr.f32.gmra.mrb[0].mxu0 %v642
        %v3291 = vpop.f32.mrb[0].mxu0
        %v3292 = vadd.f32 0.0, %v3291
        %v3293 = vpop.f32.mrb[0].mxu0
        %3294 = vmatprep.mubr.f32.mxu0 0.0
        %3295 = vmatmul.mubr.f32.gmra.mrb[0].mxu0 %v746
        %v3296 = vpop.f32.mrb[0].mxu0
        %v3297 = vadd.f32 0.0, %v3296
        %v3298 = vpop.f32.mrb[0].mxu0
        %3299 = vmatprep.mubr.f32.mxu0 0.0
        %3300 = vmatmul.mubr.f32.gmra.mrb[0].mxu0 %v850
        %v3301 = vpop.f32.mrb[0].mxu0
        %v3302 = vadd.f32 0.0, %v3301
        %v3303 = vpop.f32.mrb[0].mxu0
        %3304 = vmatprep.mubr.f32.mxu0 0.0
        %3305 = vmatmul.mubr.f32.gmra.mrb[0].mxu0 %v954
        %v3306 = vpop.f32.mrb[0].mxu0
        %v3307 = vadd.f32 0.0, %v3306
        %v3308 = vpop.f32.mrb[0].mxu0
        %3309 = vmatprep.mubr.f32.mxu0 0.0
        %3310 = vmatmul.mubr.f32.gmra.mrb[0].mxu0 %v1058
        %v3311 = vpop.f32.mrb[0].mxu0
        %v3312 = vadd.f32 0.0, %v3311
        %v3313 = vpop.f32.mrb[0].mxu0
        %3314 = vmatprep.mubr.f32.mxu0 0.0
        %3315 = vmatmul.mubr.f32.gmra.mrb[0].mxu0 %v1162
        %v3316 = vpop.f32.mrb[0].mxu0
        %v3317 = vadd.f32 0.0, %v3316
        %v3318 = vpop.f32.mrb[0].mxu0
        %3319 = vmatprep.mubr.f32.mxu0 0.0
        %3320 = vmatmul.mubr.f32.gmra.mrb[0].mxu0 %v1266
        %v3321 = vpop.f32.mrb[0].mxu0
        %v3322 = vadd.f32 0.0, %v3321
        %v3323 = vpop.f32.mrb[0].mxu0
        %3324 = vmatprep.mubr.f32.mxu0 0.0
        %3325 = vmatmul.mubr.f32.gmra.mrb[0].mxu0 %v1370
        %v3326 = vpop.f32.mrb[0].mxu0
        %v3327 = vadd.f32 0.0, %v3326
        %v3328 = vpop.f32.mrb[0].mxu0
        %3329 = vmatprep.mubr.f32.mxu0 0.0
        %3330 = vmatmul.mubr.f32.gmra.mrb[0].mxu0 %v1474
        %v3331 = vpop.f32.mrb[0].mxu0
        %v3332 = vadd.f32 0.0, %v3331
        %v3333 = vpop.f32.mrb[0].mxu0
        %3334 = vmatprep.mubr.f32.mxu0 0.0
        %3335 = vmatmul.mubr.f32.gmra.mrb[0].mxu0 %v1578
        %v3336 = vpop.f32.mrb[0].mxu0
        %v3337 = vadd.f32 0.0, %v3336
        %v3338 = vpop.f32.mrb[0].mxu0
        %3339 = vmatprep.mubr.f32.mxu0 0.0
        %3340 = vmatmul.mubr.f32.gmra.mrb[0].mxu0 %v1682
        %v3341 = vpop.f32.mrb[0].mxu0
        %v3342 = vadd.f32 0.0, %v3341
        %v3343 = vpop.f32.mrb[0].mxu0
        %3344 = vmatprep.mubr.f32.mxu0 0.0
        %3345 = vmatmul.mubr.f32.gmra.mrb[0].mxu0 %v1786
        %v3346 = vpop.f32.mrb[0].mxu0
        %v3347 = vadd.f32 0.0, %v3346
        %v3348 = vpop.f32.mrb[0].mxu0
        %3349 = vmatprep.mubr.f32.mxu0 0.0
        %3350 = vmatmul.mubr.f32.gmra.mrb[0].mxu0 %v1890
        %v3351 = vpop.f32.mrb[0].mxu0
        %v3352 = vadd.f32 0.0, %v3351
        %v3353 = vpop.f32.mrb[0].mxu0
        %3354 = vmatprep.mubr.f32.mxu0 0.0
        %3355 = vmatmul.mubr.f32.gmra.mrb[0].mxu0 %v1994
        %v3356 = vpop.f32.mrb[0].mxu0
        %v3357 = vadd.f32 0.0, %v3356
        %v3358 = vpop.f32.mrb[0].mxu0
        %3359 = vdwg.mxu0
        %3360 = vmatprep.subr.mxu0 0.0
        %3361 = vmatpush1.msra.mxu0 %v3198
        %3362 = vmatprep.subr.mxu0 0.0
        %3363 = vmatpush1.msra.mxu0 0.0
        %3364 = vmatprep.subr.mxu0 0.0
        %3365 = vmatpush1.msra.mxu0 0.0
        %3366 = vmatprep.subr.mxu0 0.0
        %3367 = vmatpush1.msra.mxu0 0.0
        %3368 = vmatprep.subr.mxu0 0.0
        %3369 = vmatpush1.msra.mxu0 0.0
        %3370 = vmatprep.subr.mxu0 0.0
        %3371 = vmatpush1.msra.mxu0 0.0
        %3372 = vmatprep.subr.mxu0 0.0
        %3373 = vmatpush1.msra.mxu0 0.0
        %3374 = vmatprep.subr.mxu0 0.0
        %3375 = vmatpush1.msra.mxu0 0.0
        %3376 = vmatprep.subr.mxu0 0.0
        %3377 = vmatpush1.msra.mxu0 0.0
        %3378 = vmatprep.subr.mxu0 0.0
        %3379 = vmatpush1.msra.mxu0 0.0
        %3380 = vmatprep.subr.mxu0 0.0
        %3381 = vmatpush1.msra.mxu0 0.0
        %3382 = vmatprep.subr.mxu0 0.0
        %3383 = vmatpush1.msra.mxu0 0.0
        %3384 = vmatprep.subr.mxu0 0.0
        %3385 = vmatpush1.msra.mxu0 0.0
        %3386 = vmatprep.subr.mxu0 0.0
        %3387 = vmatpush1.msra.mxu0 0.0
        %3388 = vmatprep.subr.mxu0 0.0
        %3389 = vmatpush1.msra.mxu0 0.0
        %3390 = vmatprep.subr.mxu0 0.0
        %3391 = vmatpush1.msra.mxu0 0.0
        %3392 = vmatprep.subr.mxu0 0.0
        %3393 = vmatpush1.msra.mxu0 0.0
        %3394 = vmatprep.subr.mxu0 0.0
        %3395 = vmatpush1.msra.mxu0 0.0
        %3396 = vmatprep.subr.mxu0 0.0
        %3397 = vmatpush1.msra.mxu0 0.0
        %3398 = vmatprep.subr.mxu0 0.0
        %3399 = vmatpush1.msra.mxu0 0.0
        %3400 = vmatprep.subr.mxu0 0.0
        %3401 = vmatpush1.msra.mxu0 0.0
        %3402 = vmatprep.subr.mxu0 0.0
        %3403 = vmatpush1.msra.mxu0 0.0
        %3404 = vmatprep.subr.mxu0 0.0
        %3405 = vmatpush1.msra.mxu0 0.0
        %3406 = vmatprep.subr.mxu0 0.0
        %3407 = vmatpush1.msra.mxu0 0.0
        %3408 = vmatprep.subr.mxu0 0.0
        %3409 = vmatpush1.msra.mxu0 0.0
        %3410 = vmatprep.subr.mxu0 0.0
        %3411 = vmatpush1.msra.mxu0 0.0
        %3412 = vmatprep.subr.mxu0 0.0
        %3413 = vmatpush1.msra.mxu0 0.0
        %3414 = vmatprep.subr.mxu0 0.0
        %3415 = vmatpush1.msra.mxu0 0.0
        %3416 = vmatprep.subr.mxu0 0.0
        %3417 = vmatpush1.msra.mxu0 0.0
        %3418 = vmatprep.subr.mxu0 0.0
        %3419 = vmatpush1.msra.mxu0 0.0
        %3420 = vmatprep.subr.mxu0 0.0
        %3421 = vmatpush1.msra.mxu0 0.0
        %3422 = vmatprep.subr.mxu0 0.0
        %3423 = vmatpush1.msra.mxu0 0.0
        %3424 = vmatprep.mubr.f32.mxu0 0.0
        %3425 = vmatmul.mubr.f32.gmra.mrb[0].mxu0 %v2158
        %v3426 = vpop.f32.mrb[0].mxu0
        %v3427 = vadd.f32 %v3282, %v3426
        %v3428 = vpop.f32.mrb[0].mxu0
        %3429 = vmatprep.mubr.f32.mxu0 0.0
        %3430 = vmatmul.mubr.f32.gmra.mrb[0].mxu0 %v2160
        %v3431 = vpop.f32.mrb[0].mxu0
        %v3432 = vadd.f32 %v3287, %v3431
        %v3433 = vpop.f32.mrb[0].mxu0
        %3434 = vmatprep.mubr.f32.mxu0 0.0
        %3435 = vmatmul.mubr.f32.gmra.mrb[0].mxu0 %v2162
        %v3436 = vpop.f32.mrb[0].mxu0
        %v3437 = vadd.f32 %v3292, %v3436
        %v3438 = vpop.f32.mrb[0].mxu0
        %3439 = vmatprep.mubr.f32.mxu0 0.0
        %3440 = vmatmul.mubr.f32.gmra.mrb[0].mxu0 %v2164
        %v3441 = vpop.f32.mrb[0].mxu0
        %v3442 = vadd.f32 %v3297, %v3441
        %v3443 = vpop.f32.mrb[0].mxu0
        %3444 = vmatprep.mubr.f32.mxu0 0.0
        %3445 = vmatmul.mubr.f32.gmra.mrb[0].mxu0 %v2166
        %v3446 = vpop.f32.mrb[0].mxu0
        %v3447 = vadd.f32 %v3302, %v3446
        %v3448 = vpop.f32.mrb[0].mxu0
        %3449 = vmatprep.mubr.f32.mxu0 0.0
        %3450 = vmatmul.mubr.f32.gmra.mrb[0].mxu0 %v2168
        %v3451 = vpop.f32.mrb[0].mxu0
        %v3452 = vadd.f32 %v3307, %v3451
        %v3453 = vpop.f32.mrb[0].mxu0
        %3454 = vmatprep.mubr.f32.mxu0 0.0
        %3455 = vmatmul.mubr.f32.gmra.mrb[0].mxu0 %v2170
        %v3456 = vpop.f32.mrb[0].mxu0
        %v3457 = vadd.f32 %v3312, %v3456
        %v3458 = vpop.f32.mrb[0].mxu0
        %3459 = vmatprep.mubr.f32.mxu0 0.0
        %3460 = vmatmul.mubr.f32.gmra.mrb[0].mxu0 %v2172
        %v3461 = vpop.f32.mrb[0].mxu0
        %v3462 = vadd.f32 %v3317, %v3461
        %v3463 = vpop.f32.mrb[0].mxu0
        %3464 = vmatprep.mubr.f32.mxu0 0.0
        %3465 = vmatmul.mubr.f32.gmra.mrb[0].mxu0 %v2174
        %v3466 = vpop.f32.mrb[0].mxu0
        %v3467 = vadd.f32 %v3322, %v3466
        %v3468 = vpop.f32.mrb[0].mxu0
        %3469 = vmatprep.mubr.f32.mxu0 0.0
        %3470 = vmatmul.mubr.f32.gmra.mrb[0].mxu0 %v2176
        %v3471 = vpop.f32.mrb[0].mxu0
        %v3472 = vadd.f32 %v3327, %v3471
        %v3473 = vpop.f32.mrb[0].mxu0
        %3474 = vmatprep.mubr.f32.mxu0 0.0
        %3475 = vmatmul.mubr.f32.gmra.mrb[0].mxu0 %v2178
        %v3476 = vpop.f32.mrb[0].mxu0
        %v3477 = vadd.f32 %v3332, %v3476
        %v3478 = vpop.f32.mrb[0].mxu0
        %3479 = vmatprep.mubr.f32.mxu0 0.0
        %3480 = vmatmul.mubr.f32.gmra.mrb[0].mxu0 %v2180
        %v3481 = vpop.f32.mrb[0].mxu0
        %v3482 = vadd.f32 %v3337, %v3481
        %v3483 = vpop.f32.mrb[0].mxu0
        %3484 = vmatprep.mubr.f32.mxu0 0.0
        %3485 = vmatmul.mubr.f32.gmra.mrb[0].mxu0 %v2182
        %v3486 = vpop.f32.mrb[0].mxu0
        %v3487 = vadd.f32 %v3342, %v3486
        %v3488 = vpop.f32.mrb[0].mxu0
        %3489 = vmatprep.mubr.f32.mxu0 0.0
        %3490 = vmatmul.mubr.f32.gmra.mrb[0].mxu0 %v2184
        %v3491 = vpop.f32.mrb[0].mxu0
        %v3492 = vadd.f32 %v3347, %v3491
        %v3493 = vpop.f32.mrb[0].mxu0
        %3494 = vmatprep.mubr.f32.mxu0 0.0
        %3495 = vmatmul.mubr.f32.gmra.mrb[0].mxu0 %v2186
        %v3496 = vpop.f32.mrb[0].mxu0
        %v3497 = vadd.f32 %v3352, %v3496
        %v3498 = vpop.f32.mrb[0].mxu0
        %3499 = vmatprep.mubr.f32.mxu0 0.0
        %3500 = vmatmul.mubr.f32.gmra.mrb[0].mxu0 %v2188
        %v3501 = vpop.f32.mrb[0].mxu0
        %v3502 = vadd.f32 %v3357, %v3501
        %v3503 = vpop.f32.mrb[0].mxu0
        %3504 = vdwg.mxu0
        %v3505 = vld [vmem:[#allocation2 + $0x290] sm:$0xff]
        %v3506 = vld [vmem:[#allocation2 + $0x298] sm:$0xff]
        %v3507 = vld [vmem:[#allocation2 + $0x2a0] sm:$0xff]
        %v3508 = vld [vmem:[#allocation2 + $0x2a8] sm:$0xff]
        %v3509 = vld [vmem:[#allocation2 + $0x2b0] sm:$0xff]
        %v3510 = vld [vmem:[#allocation2 + $0x2b8] sm:$0xff]
        %v3511 = vld [vmem:[#allocation2 + $0x2c0] sm:$0xff]
        %v3512 = vld [vmem:[#allocation2 + $0x2c8] sm:$0xff]
        %v3513 = vld [vmem:[#allocation2 + $0x2d0] sm:$0xff]
        %v3514 = vld [vmem:[#allocation2 + $0x2d8] sm:$0xff]
        %v3515 = vld [vmem:[#allocation2 + $0x2e0] sm:$0xff]
        %v3516 = vld [vmem:[#allocation2 + $0x2e8] sm:$0xff]
        %v3517 = vld [vmem:[#allocation2 + $0x2f0] sm:$0xff]
        %v3518 = vld [vmem:[#allocation2 + $0x2f8] sm:$0xff]
        %v3519 = vld [vmem:[#allocation2 + $0x300] sm:$0xff]
        %v3520 = vld [vmem:[#allocation2 + $0x308] sm:$0xff]
        %3521 = vmatprep.subr.mxu0 0.0
        %3522 = vmatpush1.msra.mxu0 %v3505
        %3523 = vmatprep.subr.mxu0 0.0
        %3524 = vmatpush1.msra.mxu0 %v3506
        %3525 = vmatprep.subr.mxu0 0.0
        %3526 = vmatpush1.msra.mxu0 %v3507
        %3527 = vmatprep.subr.mxu0 0.0
        %3528 = vmatpush1.msra.mxu0 %v3508
        %3529 = vmatprep.subr.mxu0 0.0
        %3530 = vmatpush1.msra.mxu0 %v3509
        %3531 = vmatprep.subr.mxu0 0.0
        %3532 = vmatpush1.msra.mxu0 %v3510
        %3533 = vmatprep.subr.mxu0 0.0
        %3534 = vmatpush1.msra.mxu0 %v3511
        %3535 = vmatprep.subr.mxu0 0.0
        %3536 = vmatpush1.msra.mxu0 %v3512
        %3537 = vmatprep.subr.mxu0 0.0
        %3538 = vmatpush1.msra.mxu0 %v3513
        %3539 = vmatprep.subr.mxu0 0.0
        %3540 = vmatpush1.msra.mxu0 %v3514
        %3541 = vmatprep.subr.mxu0 0.0
        %3542 = vmatpush1.msra.mxu0 %v3515
        %3543 = vmatprep.subr.mxu0 0.0
        %3544 = vmatpush1.msra.mxu0 %v3516
        %3545 = vmatprep.subr.mxu0 0.0
        %3546 = vmatpush1.msra.mxu0 %v3517
        %3547 = vmatprep.subr.mxu0 0.0
        %3548 = vmatpush1.msra.mxu0 %v3518
        %3549 = vmatprep.subr.mxu0 0.0
        %3550 = vmatpush1.msra.mxu0 %v3519
        %3551 = vmatprep.subr.mxu0 0.0
        %3552 = vmatpush1.msra.mxu0 %v3520
        %3553 = vmatprep.subr.mxu0 0.0
        %3554 = vmatpush1.msra.mxu0 0.0
        %3555 = vmatprep.subr.mxu0 0.0
        %3556 = vmatpush1.msra.mxu0 0.0
        %3557 = vmatprep.subr.mxu0 0.0
        %3558 = vmatpush1.msra.mxu0 0.0
        %3559 = vmatprep.subr.mxu0 0.0
        %3560 = vmatpush1.msra.mxu0 0.0
        %3561 = vmatprep.subr.mxu0 0.0
        %3562 = vmatpush1.msra.mxu0 0.0
        %3563 = vmatprep.subr.mxu0 0.0
        %3564 = vmatpush1.msra.mxu0 0.0
        %3565 = vmatprep.subr.mxu0 0.0
        %3566 = vmatpush1.msra.mxu0 0.0
        %3567 = vmatprep.subr.mxu0 0.0
        %3568 = vmatpush1.msra.mxu0 0.0
        %3569 = vmatprep.subr.mxu0 0.0
        %3570 = vmatpush1.msra.mxu0 0.0
        %3571 = vmatprep.subr.mxu0 0.0
        %3572 = vmatpush1.msra.mxu0 0.0
        %3573 = vmatprep.subr.mxu0 0.0
        %3574 = vmatpush1.msra.mxu0 0.0
        %3575 = vmatprep.subr.mxu0 0.0
        %3576 = vmatpush1.msra.mxu0 0.0
        %3577 = vmatprep.subr.mxu0 0.0
        %3578 = vmatpush1.msra.mxu0 0.0
        %3579 = vmatprep.subr.mxu0 0.0
        %3580 = vmatpush1.msra.mxu0 0.0
        %3581 = vmatprep.subr.mxu0 0.0
        %3582 = vmatpush1.msra.mxu0 0.0
        %3583 = vmatprep.subr.mxu0 0.0
        %3584 = vmatpush1.msra.mxu0 0.0
        %3585 = vmatprep.mubr.f32.mxu0 0.0
        %3586 = vmatmul.mubr.f32.gmra.mrb[0].mxu0 %v3182
        %v3587 = vpop.f32.mrb[0].mxu0
        %v3588 = vadd.f32 0.0, %v3587
        %v3589 = vpop.f32.mrb[0].mxu0
        %3590 = vmatprep.mubr.f32.mxu0 0.0
        %3591 = vmatmul.mubr.f32.gmra.mrb[0].mxu0 %v3183
        %v3592 = vpop.f32.mrb[0].mxu0
        %v3593 = vadd.f32 0.0, %v3592
        %v3594 = vpop.f32.mrb[0].mxu0
        %3595 = vmatprep.mubr.f32.mxu0 0.0
        %3596 = vmatmul.mubr.f32.gmra.mrb[0].mxu0 %v3184
        %v3597 = vpop.f32.mrb[0].mxu0
        %v3598 = vadd.f32 0.0, %v3597
        %v3599 = vpop.f32.mrb[0].mxu0
        %3600 = vmatprep.mubr.f32.mxu0 0.0
        %3601 = vmatmul.mubr.f32.gmra.mrb[0].mxu0 %v3185
        %v3602 = vpop.f32.mrb[0].mxu0
        %v3603 = vadd.f32 0.0, %v3602
        %v3604 = vpop.f32.mrb[0].mxu0
        %3605 = vmatprep.mubr.f32.mxu0 0.0
        %3606 = vmatmul.mubr.f32.gmra.mrb[0].mxu0 %v3186
        %v3607 = vpop.f32.mrb[0].mxu0
        %v3608 = vadd.f32 0.0, %v3607
        %v3609 = vpop.f32.mrb[0].mxu0
        %3610 = vmatprep.mubr.f32.mxu0 0.0
        %3611 = vmatmul.mubr.f32.gmra.mrb[0].mxu0 %v3187
        %v3612 = vpop.f32.mrb[0].mxu0
        %v3613 = vadd.f32 0.0, %v3612
        %v3614 = vpop.f32.mrb[0].mxu0
        %3615 = vmatprep.mubr.f32.mxu0 0.0
        %3616 = vmatmul.mubr.f32.gmra.mrb[0].mxu0 %v3188
        %v3617 = vpop.f32.mrb[0].mxu0
        %v3618 = vadd.f32 0.0, %v3617
        %v3619 = vpop.f32.mrb[0].mxu0
        %3620 = vmatprep.mubr.f32.mxu0 0.0
        %3621 = vmatmul.mubr.f32.gmra.mrb[0].mxu0 %v3189
        %v3622 = vpop.f32.mrb[0].mxu0
        %v3623 = vadd.f32 0.0, %v3622
        %v3624 = vpop.f32.mrb[0].mxu0
        %3625 = vmatprep.mubr.f32.mxu0 0.0
        %3626 = vmatmul.mubr.f32.gmra.mrb[0].mxu0 %v3190
        %v3627 = vpop.f32.mrb[0].mxu0
        %v3628 = vadd.f32 0.0, %v3627
        %v3629 = vpop.f32.mrb[0].mxu0
        %3630 = vmatprep.mubr.f32.mxu0 0.0
        %3631 = vmatmul.mubr.f32.gmra.mrb[0].mxu0 %v3191
        %v3632 = vpop.f32.mrb[0].mxu0
        %v3633 = vadd.f32 0.0, %v3632
        %v3634 = vpop.f32.mrb[0].mxu0
        %3635 = vmatprep.mubr.f32.mxu0 0.0
        %3636 = vmatmul.mubr.f32.gmra.mrb[0].mxu0 %v3192
        %v3637 = vpop.f32.mrb[0].mxu0
        %v3638 = vadd.f32 0.0, %v3637
        %v3639 = vpop.f32.mrb[0].mxu0
        %3640 = vmatprep.mubr.f32.mxu0 0.0
        %3641 = vmatmul.mubr.f32.gmra.mrb[0].mxu0 %v3193
        %v3642 = vpop.f32.mrb[0].mxu0
        %v3643 = vadd.f32 0.0, %v3642
        %v3644 = vpop.f32.mrb[0].mxu0
        %3645 = vmatprep.mubr.f32.mxu0 0.0
        %3646 = vmatmul.mubr.f32.gmra.mrb[0].mxu0 %v3194
        %v3647 = vpop.f32.mrb[0].mxu0
        %v3648 = vadd.f32 0.0, %v3647
        %v3649 = vpop.f32.mrb[0].mxu0
        %3650 = vmatprep.mubr.f32.mxu0 0.0
        %3651 = vmatmul.mubr.f32.gmra.mrb[0].mxu0 %v3195
        %v3652 = vpop.f32.mrb[0].mxu0
        %v3653 = vadd.f32 0.0, %v3652
        %v3654 = vpop.f32.mrb[0].mxu0
        %3655 = vmatprep.mubr.f32.mxu0 0.0
        %3656 = vmatmul.mubr.f32.gmra.mrb[0].mxu0 %v3196
        %v3657 = vpop.f32.mrb[0].mxu0
        %v3658 = vadd.f32 0.0, %v3657
        %v3659 = vpop.f32.mrb[0].mxu0
        %3660 = vmatprep.mubr.f32.mxu0 0.0
        %3661 = vmatmul.mubr.f32.gmra.mrb[0].mxu0 %v3197
        %v3662 = vpop.f32.mrb[0].mxu0
        %v3663 = vadd.f32 0.0, %v3662
        %v3664 = vpop.f32.mrb[0].mxu0
        %3665 = vdwg.mxu0
        %v3666 = vadd.f32 %v3427, %v3588
        %v3667 = vadd.f32 %v3432, %v3593
        %v3668 = vadd.f32 %v3437, %v3598
        %v3669 = vadd.f32 %v3442, %v3603
        %v3670 = vadd.f32 %v3447, %v3608
        %v3671 = vadd.f32 %v3452, %v3613
        %v3672 = vadd.f32 %v3457, %v3618
        %v3673 = vadd.f32 %v3462, %v3623
        %v3674 = vadd.f32 %v3467, %v3628
        %v3675 = vadd.f32 %v3472, %v3633
        %v3676 = vadd.f32 %v3477, %v3638
        %v3677 = vadd.f32 %v3482, %v3643
        %v3678 = vadd.f32 %v3487, %v3648
        %v3679 = vadd.f32 %v3492, %v3653
        %v3680 = vadd.f32 %v3497, %v3658
        %v3681 = vadd.f32 %v3502, %v3663
        %v3682 = vlaneseq
        %v3683 = vshrl.u32 %v3682, 7
        %v3684 = vsub.s32 0, %v3683
        %v3685 = vrot.slane %v194, %v3684
        %v3686 = vadd.f32 %v3666, %v3685
        %v3687 = vadd.f32 %v3667, %v3685
        %v3688 = vadd.f32 %v3668, %v3685
        %v3689 = vadd.f32 %v3669, %v3685
        %v3690 = vadd.f32 %v3670, %v3685
        %v3691 = vadd.f32 %v3671, %v3685
        %v3692 = vadd.f32 %v3672, %v3685
        %v3693 = vadd.f32 %v3673, %v3685
        %v3694 = vadd.f32 %v3674, %v3685
        %v3695 = vadd.f32 %v3675, %v3685
        %v3696 = vadd.f32 %v3676, %v3685
        %v3697 = vadd.f32 %v3677, %v3685
        %v3698 = vadd.f32 %v3678, %v3685
        %v3699 = vadd.f32 %v3679, %v3685
        %v3700 = vadd.f32 %v3680, %v3685
        %v3701 = vadd.f32 %v3681, %v3685
        %vm3702 = vcmask 31744
        %3703 = vst.msk [vmem:[%s187] sm:$0xff] %vm3702, %v3686
        %3704 = vst.msk [vmem:[%s187 + $0x8] sm:$0xff] %vm3702, %v3687
        %3705 = vst.msk [vmem:[%s187 + $0x10] sm:$0xff] %vm3702, %v3688
        %3706 = vst.msk [vmem:[%s187 + $0x18] sm:$0xff] %vm3702, %v3689
        %3707 = vst.msk [vmem:[%s187 + $0x20] sm:$0xff] %vm3702, %v3690
        %3708 = vst.msk [vmem:[%s187 + $0x28] sm:$0xff] %vm3702, %v3691
        %3709 = vst.msk [vmem:[%s187 + $0x30] sm:$0xff] %vm3702, %v3692
        %3710 = vst.msk [vmem:[%s187 + $0x38] sm:$0xff] %vm3702, %v3693
        %3711 = vst.msk [vmem:[%s187 + $0x40] sm:$0xff] %vm3702, %v3694
        %3712 = vst.msk [vmem:[%s187 + $0x48] sm:$0xff] %vm3702, %v3695
        %3713 = vst.msk [vmem:[%s187 + $0x50] sm:$0xff] %vm3702, %v3696
        %3714 = vst.msk [vmem:[%s187 + $0x58] sm:$0xff] %vm3702, %v3697
        %3715 = vst.msk [vmem:[%s187 + $0x60] sm:$0xff] %vm3702, %v3698
        %3716 = vst.msk [vmem:[%s187 + $0x68] sm:$0xff] %vm3702, %v3699
        %3717 = vst.msk [vmem:[%s187 + $0x70] sm:$0xff] %vm3702, %v3700
        %3718 = vst.msk [vmem:[%s187 + $0x78] sm:$0xff] %vm3702, %v3701
        %s3719 = smul.u32 16, %s15
        %p3720 = scmp.lt.s32.totalorder %s3719, 47
        %s3721 = scalar_select %p3720, %s3719, 47
        %s3722 = smul.addr %s3721, 8
        %s3723 = scalar_lea.vmem %s3, %s3722
        // Predicated region
        $region37: #{tpu_custom_call.1} parent=31 // pred_check
          %p3724 = pneg %p101
        $region38: #{tpu_custom_call.1} parent=31 // pred_check_branch
          %3726 = sbr.rel (%p3724) target = $region40
        $region39: #{tpu_custom_call.1} parent=31 // pred_region
          %s3727 = smul.u32 16, %s15
        $region40: #{tpu_custom_call.1} parent=31 // pred_fallthru
          _
      $region32: #{tpu_custom_call.1} parent=5 // pred_fallthru
        _
      %p3728 = scmp.le.s32.totalorder 2, %s10
      // Predicated region
      $region41: #{tpu_custom_call.1} parent=5 // pred_check
        %p3729 = pneg %p3728
      $region42: #{tpu_custom_call.1} parent=5 // pred_check_branch
        %3731 = sbr.rel (%p3729) target = $region44
      $region43: #{tpu_custom_call.1} parent=5 // pred_region
        %s3732 = ssub.s32 %s10, 2
        // Predicated region
        $region45: #{tpu_custom_call.1} parent=43 // pred_check
          %p3733 = pneg %p107
        $region46: #{tpu_custom_call.1} parent=43 // pred_check_branch
          %3735 = sbr.rel (%p3733) target = $region48
        $region47: #{tpu_custom_call.1} parent=43 // pred_region
          %s3736 = smul.u32 16, %s16
          %p3737 = scmp.lt.s32.totalorder %s3736, 47
          %s3738 = scalar_select %p3737, %s3736, 47
          %s3739 = smul.addr %s3738, 8
          %s3740 = scalar_lea.vmem %s3, %s3739
        $region48: #{tpu_custom_call.1} parent=43 // pred_fallthru
          _
      $region44: #{tpu_custom_call.1} parent=5 // pred_fallthru
        _
    $region6: #{tpu_custom_call.1} parent=1 // loop_footer
      %s14 = sadd.s32 1, %s10
    $region7: #{tpu_custom_call.1} parent=1 // loop_footer_branch
      %9 = sbr.rel target = $region3
    $region8: #{tpu_custom_call.1} parent=1 // loop_exit
      _
    %3741 = vsyncpa [#allocation3], 1
    %s3742 = scalar_lea.sflag [#allocation3], 1
    %3743 = vsyncpa %s3742, 1

</llo_original>
